<compile_context>
chip_gen: v7x
topology: tpu7x:2x2x1
jax: 0.10.0
libtpu: 0.0.40
codegen_flags: <defaults>
</compile_context>

<pallas_src>
import jax
import jax.numpy as jnp
from jax.experimental import pallas as pl
from jax.experimental.pallas import tpu as pltpu

_EPS = 1e-5
_LANES = 128


def _round_up(v, m):
    return (v + m - 1) // m * m


def _conv3x3_kw_folded(t, w_ref):
    """3x3 stride-1 SAME conv of t:(H, W, Cp) f32 with w_ref:(3, 3*Cp, Cp) bf16.

    The kw taps are folded into the contraction dim (K = 3*Cp) so the conv is
    three MXU matmuls. Spatial borders are handled with in-register zero
    row/column concats (no padded HBM copies). Returns (H*W, Cout) float32.
    """
    H, W, Cp = t.shape
    Cout = w_ref.shape[-1]
    zrow = jnp.zeros((1, W, Cp), t.dtype)
    zcol = jnp.zeros((H, 1, Cp), t.dtype)

    def shift_w(rows, kw):
        if kw == 1:
            return rows
        if kw == 0:   # output col w sees input col w-1; zero at the left border
            return jnp.concatenate([zcol, rows[:, :W - 1, :]], axis=1)
        # kw == 2: output col w sees input col w+1; zero at the right border
        return jnp.concatenate([rows[:, 1:, :], zcol], axis=1)

    acc = jnp.zeros((H * W, Cout), jnp.float32)
    for kh in range(3):                        # unrolled: 3 matmuls, K = 3*Cp
        if kh == 0:                            # row h-1 (zero at the top border)
            rows = jnp.concatenate([zrow, t[:H - 1]], axis=0)
        elif kh == 1:
            rows = t
        else:                                  # row h+1 (zero at the bottom border)
            rows = jnp.concatenate([t[1:], zrow], axis=0)
        patch = jnp.concatenate([shift_w(rows, kw) for kw in range(3)], axis=-1)
        patch = patch.reshape(H * W, 3 * Cp).astype(jnp.bfloat16)
        acc = acc + jnp.dot(patch, w_ref[kh],
                            preferred_element_type=jnp.float32)
    return acc


def _stats(acc):
    """Per-image [sum, sum_sq] over the H*W axis -> (2, Cp) f32."""
    return jnp.concatenate(
        [jnp.sum(acc, axis=0, keepdims=True),
         jnp.sum(acc * acc, axis=0, keepdims=True)], axis=0)


def _conv_stats_kernel(x_ref, w_ref, y_ref, stats_ref):
    """Pass A: y = conv1(x) (raw f32) + per-image BN statistics."""
    _, H, W, Cp = x_ref.shape
    acc = _conv3x3_kw_folded(x_ref[0], w_ref)
    y_ref[0] = acc.reshape(H, W, Cp)
    stats_ref[0] = _stats(acc)


def _bn_relu_conv_stats_kernel(y1_ref, scale_ref, off_ref, w_ref, y2_ref, stats_ref):
    """Pass B: h = relu(bn1(y1)); y2 = conv2(h) (raw f32) + per-image BN stats."""
    _, H, W, Cp = y1_ref.shape
    scale = scale_ref[...].reshape(1, 1, Cp)
    off = off_ref[...].reshape(1, 1, Cp)
    h = jnp.maximum(y1_ref[0] * scale + off, 0.0)          # f32 BN apply + ReLU
    acc = _conv3x3_kw_folded(h, w_ref)
    y2_ref[0] = acc.reshape(H, W, Cp)
    stats_ref[0] = _stats(acc)


def _bn_add_relu_kernel(y2_ref, scale_ref, off_ref, x_ref, out_ref):
    """Pass C: out = relu(bn2(y2) + x)."""
    _, H, W, Cp = y2_ref.shape
    scale = scale_ref[...].reshape(1, 1, Cp)
    off = off_ref[...].reshape(1, 1, Cp)
    out_ref[0] = jnp.maximum(y2_ref[0] * scale + off + x_ref[0], 0.0)


def _bn_scale_offset(stats, gamma, beta, count):
    """Training-mode BN (batch mean, biased var) -> per-channel scale/offset."""
    totals = jnp.sum(stats, axis=0)                        # (2, Cp)
    mean = totals[0] / count
    var = jnp.maximum(totals[1] / count - mean * mean, 0.0)
    scale = gamma * jax.lax.rsqrt(var + _EPS)
    offset = beta - mean * scale
    return scale.reshape(1, -1), offset.reshape(1, -1)


def basic_block(x, w1, g1, b1, w2, g2, b2):
    """BasicBlock forward (stride=1, downsample=None). x: (N, H, W, C) NHWC."""
    N, H, W, C = x.shape
    assert w1.shape[-1] == C and w2.shape[-1] == C, "downsample=None => Cin == Cout"

    Cp = max(_LANES, _round_up(C, _LANES))                 # lane-dense channel dim
    pad_c = Cp - C

    x_p = jnp.pad(x, ((0, 0), (0, 0), (0, 0), (0, pad_c))) if pad_c else x

    def pack_w(w):
        if pad_c:
            w = jnp.pad(w, ((0, 0), (0, 0), (0, pad_c), (0, pad_c)))
        # HWIO (3,3,Cp,Cp) -> (3, 3*Cp, Cp): kw folded into the contraction dim.
        return w.reshape(3, 3 * Cp, Cp).astype(jnp.bfloat16)

    def pack_v(v):
        v = jnp.pad(v, ((0, pad_c),)) if pad_c else v
        return v.astype(jnp.float32)

    w1f, w2f = pack_w(w1), pack_w(w2)
    g1p, b1p, g2p, b2p = pack_v(g1), pack_v(b1), pack_v(g2), pack_v(b2)

    img_spec = pl.BlockSpec((1, H, W, Cp), lambda n: (n, 0, 0, 0))
    w_spec = pl.BlockSpec((3, 3 * Cp, Cp), lambda n: (0, 0, 0))
    vec_spec = pl.BlockSpec((1, Cp), lambda n: (0, 0))
    stats_spec = pl.BlockSpec((1, 2, Cp), lambda n: (n, 0, 0))
    img_shape = jax.ShapeDtypeStruct((N, H, W, Cp), jnp.float32)
    stats_shape = jax.ShapeDtypeStruct((N, 2, Cp), jnp.float32)
    cparams = pltpu.CompilerParams(
        dimension_semantics=("parallel",),      # batch tiles -> megacore on v7x
        vmem_limit_bytes=48 * 1024 * 1024,      # safe on v5e/v6e/v7x for these tiles
    )

    # Pass A: raw conv1 + per-image BN statistics.
    y1, st1 = pl.pallas_call(
        _conv_stats_kernel,
        grid=(N,),
        in_specs=[img_spec, w_spec],
        out_specs=[img_spec, stats_spec],
        out_shape=[img_shape, stats_shape],
        compiler_params=cparams,
    )(x_p, w1f)
    s1, o1 = _bn_scale_offset(st1, g1p, b1p, N * H * W)

    # Pass B: apply bn1+relu in-register, run conv2 + its BN statistics; the
    # normalized hidden activation never round-trips HBM.
    y2, st2 = pl.pallas_call(
        _bn_relu_conv_stats_kernel,
        grid=(N,),
        in_specs=[img_spec, vec_spec, vec_spec, w_spec],
        out_specs=[img_spec, stats_spec],
        out_shape=[img_shape, stats_shape],
        compiler_params=cparams,
    )(y1, s1, o1, w2f)
    s2, o2 = _bn_scale_offset(st2, g2p, b2p, N * H * W)

    # Pass C: apply bn2 + residual add + relu.
    out_p = pl.pallas_call(
        _bn_add_relu_kernel,
        grid=(N,),
        in_specs=[img_spec, vec_spec, vec_spec, img_spec],
        out_specs=img_spec,
        out_shape=img_shape,
        compiler_params=cparams,
    )(y2, s2, o2, x_p)

    return out_p[..., :C] if pad_c else out_p


def _basic_block_ref(x, w1, g1, b1, w2, g2, b2, conv_dtype=jnp.float32):
    """Pure-JAX reference. conv_dtype=bf16 mirrors the kernel's MXU precision."""
    def conv(t, w):
        return jax.lax.conv_general_dilated(
            t.astype(conv_dtype), w.astype(conv_dtype),
            window_strides=(1, 1), padding="SAME",
            dimension_numbers=("NHWC", "HWIO", "NHWC"),
            preferred_element_type=jnp.float32)

    def bn(t, g, b):
        m = t.mean(axis=(0, 1, 2))
        v = ((t - m) ** 2).mean(axis=(0, 1, 2))
        return (t - m) * jax.lax.rsqrt(v + _EPS) * g + b

    h = jax.nn.relu(bn(conv(x, w1), g1, b1))
    return jax.nn.relu(bn(conv(h, w2), g2, b2) + x)


if __name__ == "__main__":
    # Small shapes: batch=2, inplanes=planes=4, spatial=16x16 (NHWC).
    N, H, W, C = 2, 16, 16, 4

    key = jax.random.PRNGKey(0)
    kx, kw1, kw2 = jax.random.split(key, 3)

    x = jax.random.normal(kx, (N, H, W, C), dtype=jnp.float32)
    fan_in = 3 * 3 * C
    w1 = jax.random.normal(kw1, (3, 3, C, C), jnp.float32) * (2.0 / fan_in) ** 0.5
    w2 = jax.random.normal(kw2, (3, 3, C, C), jnp.float32) * (2.0 / fan_in) ** 0.5
    # BatchNorm affine params: PyTorch default init (weight=1, bias=0).
    g1 = jnp.ones((C,), jnp.float32)
    b1 = jnp.zeros((C,), jnp.float32)
    g2 = jnp.ones((C,), jnp.float32)
    b2 = jnp.zeros((C,), jnp.float32)

    fwd = jax.jit(basic_block)
    out = jax.block_until_ready(fwd(x, w1, g1, b1, w2, g2, b2))
    assert out.shape == (N, H, W, C)

    # Tight check against a reference matching the kernel's MXU precision
    # (bf16 conv operands, f32 accumulation / BN math).
    ref_bf16 = _basic_block_ref(x, w1, g1, b1, w2, g2, b2, conv_dtype=jnp.bfloat16)
    err_matched = jnp.max(jnp.abs(out - ref_bf16))
    assert err_matched < 5e-3, f"mismatch vs bf16-matched reference: {err_matched}"

    # Loose sanity check against the full-f32 reference (bf16 MXU rounding only).
    ref_f32 = _basic_block_ref(x, w1, g1, b1, w2, g2, b2, conv_dtype=jnp.float32)
    err_f32 = jnp.max(jnp.abs(out - ref_f32))
    assert err_f32 < 5e-2, f"mismatch vs f32 reference: {err_f32}"

    print("KERNEL_OK")
</pallas_src>

<mosaic_0001>
module attributes {stable_mosaic.version = 11 : i64} {
  func.func @_conv_stats_kernel(%arg0: i32, %arg1: memref<1x16x16x128xf32, #tpu.memory_space<vmem>>, %arg2: memref<3x384x128xbf16, #tpu.memory_space<vmem>>, %arg3: memref<1x16x16x128xf32, #tpu.memory_space<vmem>>, %arg4: memref<1x2x128xf32, #tpu.memory_space<vmem>>) attributes {dimension_semantics = [#tpu.dimension_semantics<parallel>], iteration_bounds = array<i64: 2>, scalar_prefetch = 0 : i64, scratch_operands = 0 : i64, tpu.core_type = #tpu.core_type<tc>, window_params = [{transform_indices = @transform_0, window_bounds = array<i64: 1, 16, 16, 128>}, {pipeline_mode = #tpu.pipeline_mode<synchronous>, transform_indices = @transform_1, window_bounds = array<i64: 3, 384, 128>}, {transform_indices = @transform_2, window_bounds = array<i64: 1, 16, 16, 128>}, {transform_indices = @transform_3, window_bounds = array<i64: 1, 2, 128>}]} {
    %c0 = arith.constant 0 : index
    %c0_0 = arith.constant 0 : index
    %c0_1 = arith.constant 0 : index
    %c0_2 = arith.constant 0 : index
    %0 = vector.load %arg1[%c0, %c0_0, %c0_1, %c0_2] : memref<1x16x16x128xf32, #tpu.memory_space<vmem>>, vector<1x16x16x128xf32>
    %1 = vector.shape_cast %0 : vector<1x16x16x128xf32> to vector<16x16x128xf32>
    %cst = arith.constant 0.000000e+00 : f32
    %2 = vector.broadcast %cst : f32 to vector<1x16x128xf32>
    %cst_3 = arith.constant 0.000000e+00 : f32
    %3 = vector.broadcast %cst_3 : f32 to vector<16x1x128xf32>
    %cst_4 = arith.constant 0.000000e+00 : f32
    %4 = vector.broadcast %cst_4 : f32 to vector<256x128xf32>
    %5 = vector.extract_strided_slice %1 {offsets = [0, 0, 0], sizes = [15, 16, 128], strides = [1, 1, 1]} : vector<16x16x128xf32> to vector<15x16x128xf32>
    %6 = tpu.concatenate %2, %5 in 0 : vector<1x16x128xf32>, vector<15x16x128xf32> -> vector<16x16x128xf32>
    %7 = vector.extract_strided_slice %6 {offsets = [0, 0, 0], sizes = [16, 15, 128], strides = [1, 1, 1]} : vector<16x16x128xf32> to vector<16x15x128xf32>
    %8 = tpu.concatenate %3, %7 in 1 : vector<16x1x128xf32>, vector<16x15x128xf32> -> vector<16x16x128xf32>
    %9 = vector.extract_strided_slice %6 {offsets = [0, 1, 0], sizes = [16, 15, 128], strides = [1, 1, 1]} : vector<16x16x128xf32> to vector<16x15x128xf32>
    %10 = tpu.concatenate %9, %3 in 1 : vector<16x15x128xf32>, vector<16x1x128xf32> -> vector<16x16x128xf32>
    %11 = tpu.concatenate %8, %6, %10 in 2 : vector<16x16x128xf32>, vector<16x16x128xf32>, vector<16x16x128xf32> -> vector<16x16x384xf32>
    %12 = vector.shape_cast %11 : vector<16x16x384xf32> to vector<256x384xf32>
    %13 = arith.truncf %12 : vector<256x384xf32> to vector<256x384xbf16>
    %c0_5 = arith.constant 0 : index
    %c0_6 = arith.constant 0 : index
    %c0_7 = arith.constant 0 : index
    %14 = vector.load %arg2[%c0_5, %c0_6, %c0_7] : memref<3x384x128xbf16, #tpu.memory_space<vmem>>, vector<1x384x128xbf16>
    %15 = vector.shape_cast %14 : vector<1x384x128xbf16> to vector<384x128xbf16>
    %cst_8 = arith.constant dense<0.000000e+00> : vector<256x128xf32>
    %16 = tpu.matmul %13, %15, %cst_8 {dimension_numbers = #tpu.dot_dimension_numbers<[1], [0], [0], [1], [0, 0, 1, 1], [], []>} : vector<256x384xbf16>, vector<384x128xbf16>, vector<256x128xf32> -> vector<256x128xf32>
    %17 = arith.addf %4, %16 : vector<256x128xf32>
    %18 = vector.extract_strided_slice %1 {offsets = [0, 0, 0], sizes = [16, 15, 128], strides = [1, 1, 1]} : vector<16x16x128xf32> to vector<16x15x128xf32>
    %19 = tpu.concatenate %3, %18 in 1 : vector<16x1x128xf32>, vector<16x15x128xf32> -> vector<16x16x128xf32>
    %20 = vector.extract_strided_slice %1 {offsets = [0, 1, 0], sizes = [16, 15, 128], strides = [1, 1, 1]} : vector<16x16x128xf32> to vector<16x15x128xf32>
    %21 = tpu.concatenate %20, %3 in 1 : vector<16x15x128xf32>, vector<16x1x128xf32> -> vector<16x16x128xf32>
    %22 = tpu.concatenate %19, %1, %21 in 2 : vector<16x16x128xf32>, vector<16x16x128xf32>, vector<16x16x128xf32> -> vector<16x16x384xf32>
    %23 = vector.shape_cast %22 : vector<16x16x384xf32> to vector<256x384xf32>
    %24 = arith.truncf %23 : vector<256x384xf32> to vector<256x384xbf16>
    %c1 = arith.constant 1 : index
    %c0_9 = arith.constant 0 : index
    %c0_10 = arith.constant 0 : index
    %25 = vector.load %arg2[%c1, %c0_9, %c0_10] : memref<3x384x128xbf16, #tpu.memory_space<vmem>>, vector<1x384x128xbf16>
    %26 = vector.shape_cast %25 : vector<1x384x128xbf16> to vector<384x128xbf16>
    %cst_11 = arith.constant dense<0.000000e+00> : vector<256x128xf32>
    %27 = tpu.matmul %24, %26, %cst_11 {dimension_numbers = #tpu.dot_dimension_numbers<[1], [0], [0], [1], [0, 0, 1, 1], [], []>} : vector<256x384xbf16>, vector<384x128xbf16>, vector<256x128xf32> -> vector<256x128xf32>
    %28 = arith.addf %17, %27 : vector<256x128xf32>
    %29 = vector.extract_strided_slice %1 {offsets = [1, 0, 0], sizes = [15, 16, 128], strides = [1, 1, 1]} : vector<16x16x128xf32> to vector<15x16x128xf32>
    %30 = tpu.concatenate %29, %2 in 0 : vector<15x16x128xf32>, vector<1x16x128xf32> -> vector<16x16x128xf32>
    %31 = vector.extract_strided_slice %30 {offsets = [0, 0, 0], sizes = [16, 15, 128], strides = [1, 1, 1]} : vector<16x16x128xf32> to vector<16x15x128xf32>
    %32 = tpu.concatenate %3, %31 in 1 : vector<16x1x128xf32>, vector<16x15x128xf32> -> vector<16x16x128xf32>
    %33 = vector.extract_strided_slice %30 {offsets = [0, 1, 0], sizes = [16, 15, 128], strides = [1, 1, 1]} : vector<16x16x128xf32> to vector<16x15x128xf32>
    %34 = tpu.concatenate %33, %3 in 1 : vector<16x15x128xf32>, vector<16x1x128xf32> -> vector<16x16x128xf32>
    %35 = tpu.concatenate %32, %30, %34 in 2 : vector<16x16x128xf32>, vector<16x16x128xf32>, vector<16x16x128xf32> -> vector<16x16x384xf32>
    %36 = vector.shape_cast %35 : vector<16x16x384xf32> to vector<256x384xf32>
    %37 = arith.truncf %36 : vector<256x384xf32> to vector<256x384xbf16>
    %c2 = arith.constant 2 : index
    %c0_12 = arith.constant 0 : index
    %c0_13 = arith.constant 0 : index
    %38 = vector.load %arg2[%c2, %c0_12, %c0_13] : memref<3x384x128xbf16, #tpu.memory_space<vmem>>, vector<1x384x128xbf16>
    %39 = vector.shape_cast %38 : vector<1x384x128xbf16> to vector<384x128xbf16>
    %cst_14 = arith.constant dense<0.000000e+00> : vector<256x128xf32>
    %40 = tpu.matmul %37, %39, %cst_14 {dimension_numbers = #tpu.dot_dimension_numbers<[1], [0], [0], [1], [0, 0, 1, 1], [], []>} : vector<256x384xbf16>, vector<384x128xbf16>, vector<256x128xf32> -> vector<256x128xf32>
    %41 = arith.addf %28, %40 : vector<256x128xf32>
    %42 = vector.shape_cast %41 : vector<256x128xf32> to vector<16x16x128xf32>
    %c0_15 = arith.constant 0 : index
    %c0_16 = arith.constant 0 : index
    %c0_17 = arith.constant 0 : index
    %c0_18 = arith.constant 0 : index
    %43 = vector.load %arg3[%c0_15, %c0_16, %c0_17, %c0_18] : memref<1x16x16x128xf32, #tpu.memory_space<vmem>>, vector<1x16x16x128xf32>
    %44 = vector.shape_cast %43 : vector<1x16x16x128xf32> to vector<16x16x128xf32>
    %45 = vector.shape_cast %42 : vector<16x16x128xf32> to vector<1x16x16x128xf32>
    tpu.vector_store %arg3[%c0_15, %c0_16, %c0_17, %c0_18], %45 {strides = array<i32>} : memref<1x16x16x128xf32, #tpu.memory_space<vmem>>, vector<1x16x16x128xf32>,
    %cst_19 = arith.constant dense<0.000000e+00> : vector<128xf32>
    %46 = vector.multi_reduction <add>, %41, %cst_19 [0] : vector<256x128xf32> to vector<128xf32>
    %47 = vector.shape_cast %46 : vector<128xf32> to vector<1x128xf32>
    %48 = arith.mulf %41, %41 : vector<256x128xf32>
    %cst_20 = arith.constant dense<0.000000e+00> : vector<128xf32>
    %49 = vector.multi_reduction <add>, %48, %cst_20 [0] : vector<256x128xf32> to vector<128xf32>
    %50 = vector.shape_cast %49 : vector<128xf32> to vector<1x128xf32>
    %51 = tpu.concatenate %47, %50 in 0 : vector<1x128xf32>, vector<1x128xf32> -> vector<2x128xf32>
    %c0_21 = arith.constant 0 : index
    %c0_22 = arith.constant 0 : index
    %c0_23 = arith.constant 0 : index
    %52 = vector.load %arg4[%c0_21, %c0_22, %c0_23] : memref<1x2x128xf32, #tpu.memory_space<vmem>>, vector<1x2x128xf32>
    %53 = vector.shape_cast %52 : vector<1x2x128xf32> to vector<2x128xf32>
    %54 = vector.shape_cast %51 : vector<2x128xf32> to vector<1x2x128xf32>
    tpu.vector_store %arg4[%c0_21, %c0_22, %c0_23], %54 {strides = array<i32>} : memref<1x2x128xf32, #tpu.memory_space<vmem>>, vector<1x2x128xf32>,
    return
  }
  func.func @transform_0(%arg0: i32) -> (i32, i32, i32, i32) {
    %c0_i32 = arith.constant 0 : i32
    %c0_i32_0 = arith.constant 0 : i32
    %c0_i32_1 = arith.constant 0 : i32
    %c0_i32_2 = arith.constant 0 : i32
    return %arg0, %c0_i32, %c0_i32_0, %c0_i32_1 : i32, i32, i32, i32
  }
  func.func @transform_1(%arg0: i32) -> (i32, i32, i32) {
    %c0_i32 = arith.constant 0 : i32
    %c0_i32_0 = arith.constant 0 : i32
    %c0_i32_1 = arith.constant 0 : i32
    %c0_i32_2 = arith.constant 0 : i32
    return %c0_i32, %c0_i32_0, %c0_i32_1 : i32, i32, i32
  }
  func.func @transform_2(%arg0: i32) -> (i32, i32, i32, i32) {
    %c0_i32 = arith.constant 0 : i32
    %c0_i32_0 = arith.constant 0 : i32
    %c0_i32_1 = arith.constant 0 : i32
    %c0_i32_2 = arith.constant 0 : i32
    return %arg0, %c0_i32, %c0_i32_0, %c0_i32_1 : i32, i32, i32, i32
  }
  func.func @transform_3(%arg0: i32) -> (i32, i32, i32) {
    %c0_i32 = arith.constant 0 : i32
    %c0_i32_0 = arith.constant 0 : i32
    %c0_i32_1 = arith.constant 0 : i32
    return %arg0, %c0_i32, %c0_i32_0 : i32, i32, i32
  }
}

module attributes {stable_mosaic.version = 11 : i64} {
  func.func @_bn_relu_conv_stats_kernel(%arg0: i32, %arg1: memref<1x16x16x128xf32, #tpu.memory_space<vmem>>, %arg2: memref<1x128xf32, #tpu.memory_space<vmem>>, %arg3: memref<1x128xf32, #tpu.memory_space<vmem>>, %arg4: memref<3x384x128xbf16, #tpu.memory_space<vmem>>, %arg5: memref<1x16x16x128xf32, #tpu.memory_space<vmem>>, %arg6: memref<1x2x128xf32, #tpu.memory_space<vmem>>) attributes {dimension_semantics = [#tpu.dimension_semantics<parallel>], iteration_bounds = array<i64: 2>, scalar_prefetch = 0 : i64, scratch_operands = 0 : i64, tpu.core_type = #tpu.core_type<tc>, window_params = [{transform_indices = @transform_0, window_bounds = array<i64: 1, 16, 16, 128>}, {pipeline_mode = #tpu.pipeline_mode<synchronous>, transform_indices = @transform_1, window_bounds = array<i64: 1, 128>}, {pipeline_mode = #tpu.pipeline_mode<synchronous>, transform_indices = @transform_2, window_bounds = array<i64: 1, 128>}, {pipeline_mode = #tpu.pipeline_mode<synchronous>, transform_indices = @transform_3, window_bounds = array<i64: 3, 384, 128>}, {transform_indices = @transform_4, window_bounds = array<i64: 1, 16, 16, 128>}, {transform_indices = @transform_5, window_bounds = array<i64: 1, 2, 128>}]} {
    %c0 = arith.constant 0 : index
    %c0_0 = arith.constant 0 : index
    %0 = vector.load %arg2[%c0, %c0_0] : memref<1x128xf32, #tpu.memory_space<vmem>>, vector<1x128xf32>
    %1 = vector.shape_cast %0 : vector<1x128xf32> to vector<1x1x128xf32>
    %c0_1 = arith.constant 0 : index
    %c0_2 = arith.constant 0 : index
    %2 = vector.load %arg3[%c0_1, %c0_2] : memref<1x128xf32, #tpu.memory_space<vmem>>, vector<1x128xf32>
    %3 = vector.shape_cast %2 : vector<1x128xf32> to vector<1x1x128xf32>
    %c0_3 = arith.constant 0 : index
    %c0_4 = arith.constant 0 : index
    %c0_5 = arith.constant 0 : index
    %c0_6 = arith.constant 0 : index
    %4 = vector.load %arg1[%c0_3, %c0_4, %c0_5, %c0_6] : memref<1x16x16x128xf32, #tpu.memory_space<vmem>>, vector<1x16x16x128xf32>
    %5 = vector.shape_cast %4 : vector<1x16x16x128xf32> to vector<16x16x128xf32>
    %6 = vector.broadcast %1 : vector<1x1x128xf32> to vector<16x16x128xf32>
    %7 = arith.mulf %5, %6 : vector<16x16x128xf32>
    %8 = vector.broadcast %3 : vector<1x1x128xf32> to vector<16x16x128xf32>
    %9 = arith.addf %7, %8 : vector<16x16x128xf32>
    %cst = arith.constant 0.000000e+00 : f32
    %10 = vector.broadcast %cst : f32 to vector<16x16x128xf32>
    %11 = arith.maximumf %9, %10 : vector<16x16x128xf32>
    %cst_7 = arith.constant 0.000000e+00 : f32
    %12 = vector.broadcast %cst_7 : f32 to vector<1x16x128xf32>
    %cst_8 = arith.constant 0.000000e+00 : f32
    %13 = vector.broadcast %cst_8 : f32 to vector<16x1x128xf32>
    %cst_9 = arith.constant 0.000000e+00 : f32
    %14 = vector.broadcast %cst_9 : f32 to vector<256x128xf32>
    %15 = vector.extract_strided_slice %11 {offsets = [0, 0, 0], sizes = [15, 16, 128], strides = [1, 1, 1]} : vector<16x16x128xf32> to vector<15x16x128xf32>
    %16 = tpu.concatenate %12, %15 in 0 : vector<1x16x128xf32>, vector<15x16x128xf32> -> vector<16x16x128xf32>
    %17 = vector.extract_strided_slice %16 {offsets = [0, 0, 0], sizes = [16, 15, 128], strides = [1, 1, 1]} : vector<16x16x128xf32> to vector<16x15x128xf32>
    %18 = tpu.concatenate %13, %17 in 1 : vector<16x1x128xf32>, vector<16x15x128xf32> -> vector<16x16x128xf32>
    %19 = vector.extract_strided_slice %16 {offsets = [0, 1, 0], sizes = [16, 15, 128], strides = [1, 1, 1]} : vector<16x16x128xf32> to vector<16x15x128xf32>
    %20 = tpu.concatenate %19, %13 in 1 : vector<16x15x128xf32>, vector<16x1x128xf32> -> vector<16x16x128xf32>
    %21 = tpu.concatenate %18, %16, %20 in 2 : vector<16x16x128xf32>, vector<16x16x128xf32>, vector<16x16x128xf32> -> vector<16x16x384xf32>
    %22 = vector.shape_cast %21 : vector<16x16x384xf32> to vector<256x384xf32>
    %23 = arith.truncf %22 : vector<256x384xf32> to vector<256x384xbf16>
    %c0_10 = arith.constant 0 : index
    %c0_11 = arith.constant 0 : index
    %c0_12 = arith.constant 0 : index
    %24 = vector.load %arg4[%c0_10, %c0_11, %c0_12] : memref<3x384x128xbf16, #tpu.memory_space<vmem>>, vector<1x384x128xbf16>
    %25 = vector.shape_cast %24 : vector<1x384x128xbf16> to vector<384x128xbf16>
    %cst_13 = arith.constant dense<0.000000e+00> : vector<256x128xf32>
    %26 = tpu.matmul %23, %25, %cst_13 {dimension_numbers = #tpu.dot_dimension_numbers<[1], [0], [0], [1], [0, 0, 1, 1], [], []>} : vector<256x384xbf16>, vector<384x128xbf16>, vector<256x128xf32> -> vector<256x128xf32>
    %27 = arith.addf %14, %26 : vector<256x128xf32>
    %28 = vector.extract_strided_slice %11 {offsets = [0, 0, 0], sizes = [16, 15, 128], strides = [1, 1, 1]} : vector<16x16x128xf32> to vector<16x15x128xf32>
    %29 = tpu.concatenate %13, %28 in 1 : vector<16x1x128xf32>, vector<16x15x128xf32> -> vector<16x16x128xf32>
    %30 = vector.extract_strided_slice %11 {offsets = [0, 1, 0], sizes = [16, 15, 128], strides = [1, 1, 1]} : vector<16x16x128xf32> to vector<16x15x128xf32>
    %31 = tpu.concatenate %30, %13 in 1 : vector<16x15x128xf32>, vector<16x1x128xf32> -> vector<16x16x128xf32>
    %32 = tpu.concatenate %29, %11, %31 in 2 : vector<16x16x128xf32>, vector<16x16x128xf32>, vector<16x16x128xf32> -> vector<16x16x384xf32>
    %33 = vector.shape_cast %32 : vector<16x16x384xf32> to vector<256x384xf32>
    %34 = arith.truncf %33 : vector<256x384xf32> to vector<256x384xbf16>
    %c1 = arith.constant 1 : index
    %c0_14 = arith.constant 0 : index
    %c0_15 = arith.constant 0 : index
    %35 = vector.load %arg4[%c1, %c0_14, %c0_15] : memref<3x384x128xbf16, #tpu.memory_space<vmem>>, vector<1x384x128xbf16>
    %36 = vector.shape_cast %35 : vector<1x384x128xbf16> to vector<384x128xbf16>
    %cst_16 = arith.constant dense<0.000000e+00> : vector<256x128xf32>
    %37 = tpu.matmul %34, %36, %cst_16 {dimension_numbers = #tpu.dot_dimension_numbers<[1], [0], [0], [1], [0, 0, 1, 1], [], []>} : vector<256x384xbf16>, vector<384x128xbf16>, vector<256x128xf32> -> vector<256x128xf32>
    %38 = arith.addf %27, %37 : vector<256x128xf32>
    %39 = vector.extract_strided_slice %11 {offsets = [1, 0, 0], sizes = [15, 16, 128], strides = [1, 1, 1]} : vector<16x16x128xf32> to vector<15x16x128xf32>
    %40 = tpu.concatenate %39, %12 in 0 : vector<15x16x128xf32>, vector<1x16x128xf32> -> vector<16x16x128xf32>
    %41 = vector.extract_strided_slice %40 {offsets = [0, 0, 0], sizes = [16, 15, 128], strides = [1, 1, 1]} : vector<16x16x128xf32> to vector<16x15x128xf32>
    %42 = tpu.concatenate %13, %41 in 1 : vector<16x1x128xf32>, vector<16x15x128xf32> -> vector<16x16x128xf32>
    %43 = vector.extract_strided_slice %40 {offsets = [0, 1, 0], sizes = [16, 15, 128], strides = [1, 1, 1]} : vector<16x16x128xf32> to vector<16x15x128xf32>
    %44 = tpu.concatenate %43, %13 in 1 : vector<16x15x128xf32>, vector<16x1x128xf32> -> vector<16x16x128xf32>
    %45 = tpu.concatenate %42, %40, %44 in 2 : vector<16x16x128xf32>, vector<16x16x128xf32>, vector<16x16x128xf32> -> vector<16x16x384xf32>
    %46 = vector.shape_cast %45 : vector<16x16x384xf32> to vector<256x384xf32>
    %47 = arith.truncf %46 : vector<256x384xf32> to vector<256x384xbf16>
    %c2 = arith.constant 2 : index
    %c0_17 = arith.constant 0 : index
    %c0_18 = arith.constant 0 : index
    %48 = vector.load %arg4[%c2, %c0_17, %c0_18] : memref<3x384x128xbf16, #tpu.memory_space<vmem>>, vector<1x384x128xbf16>
    %49 = vector.shape_cast %48 : vector<1x384x128xbf16> to vector<384x128xbf16>
    %cst_19 = arith.constant dense<0.000000e+00> : vector<256x128xf32>
    %50 = tpu.matmul %47, %49, %cst_19 {dimension_numbers = #tpu.dot_dimension_numbers<[1], [0], [0], [1], [0, 0, 1, 1], [], []>} : vector<256x384xbf16>, vector<384x128xbf16>, vector<256x128xf32> -> vector<256x128xf32>
    %51 = arith.addf %38, %50 : vector<256x128xf32>
    %52 = vector.shape_cast %51 : vector<256x128xf32> to vector<16x16x128xf32>
    %c0_20 = arith.constant 0 : index
    %c0_21 = arith.constant 0 : index
    %c0_22 = arith.constant 0 : index
    %c0_23 = arith.constant 0 : index
    %53 = vector.load %arg5[%c0_20, %c0_21, %c0_22, %c0_23] : memref<1x16x16x128xf32, #tpu.memory_space<vmem>>, vector<1x16x16x128xf32>
    %54 = vector.shape_cast %53 : vector<1x16x16x128xf32> to vector<16x16x128xf32>
    %55 = vector.shape_cast %52 : vector<16x16x128xf32> to vector<1x16x16x128xf32>
    tpu.vector_store %arg5[%c0_20, %c0_21, %c0_22, %c0_23], %55 {strides = array<i32>} : memref<1x16x16x128xf32, #tpu.memory_space<vmem>>, vector<1x16x16x128xf32>,
    %cst_24 = arith.constant dense<0.000000e+00> : vector<128xf32>
    %56 = vector.multi_reduction <add>, %51, %cst_24 [0] : vector<256x128xf32> to vector<128xf32>
    %57 = vector.shape_cast %56 : vector<128xf32> to vector<1x128xf32>
    %58 = arith.mulf %51, %51 : vector<256x128xf32>
    %cst_25 = arith.constant dense<0.000000e+00> : vector<128xf32>
    %59 = vector.multi_reduction <add>, %58, %cst_25 [0] : vector<256x128xf32> to vector<128xf32>
    %60 = vector.shape_cast %59 : vector<128xf32> to vector<1x128xf32>
    %61 = tpu.concatenate %57, %60 in 0 : vector<1x128xf32>, vector<1x128xf32> -> vector<2x128xf32>
    %c0_26 = arith.constant 0 : index
    %c0_27 = arith.constant 0 : index
    %c0_28 = arith.constant 0 : index
    %62 = vector.load %arg6[%c0_26, %c0_27, %c0_28] : memref<1x2x128xf32, #tpu.memory_space<vmem>>, vector<1x2x128xf32>
    %63 = vector.shape_cast %62 : vector<1x2x128xf32> to vector<2x128xf32>
    %64 = vector.shape_cast %61 : vector<2x128xf32> to vector<1x2x128xf32>
    tpu.vector_store %arg6[%c0_26, %c0_27, %c0_28], %64 {strides = array<i32>} : memref<1x2x128xf32, #tpu.memory_space<vmem>>, vector<1x2x128xf32>,
    return
  }
  func.func @transform_0(%arg0: i32) -> (i32, i32, i32, i32) {
    %c0_i32 = arith.constant 0 : i32
    %c0_i32_0 = arith.constant 0 : i32
    %c0_i32_1 = arith.constant 0 : i32
    %c0_i32_2 = arith.constant 0 : i32
    return %arg0, %c0_i32, %c0_i32_0, %c0_i32_1 : i32, i32, i32, i32
  }
  func.func @transform_1(%arg0: i32) -> (i32, i32) {
    %c0_i32 = arith.constant 0 : i32
    %c0_i32_0 = arith.constant 0 : i32
    %c0_i32_1 = arith.constant 0 : i32
    return %c0_i32, %c0_i32_0 : i32, i32
  }
  func.func @transform_2(%arg0: i32) -> (i32, i32) {
    %c0_i32 = arith.constant 0 : i32
    %c0_i32_0 = arith.constant 0 : i32
    %c0_i32_1 = arith.constant 0 : i32
    return %c0_i32, %c0_i32_0 : i32, i32
  }
  func.func @transform_3(%arg0: i32) -> (i32, i32, i32) {
    %c0_i32 = arith.constant 0 : i32
    %c0_i32_0 = arith.constant 0 : i32
    %c0_i32_1 = arith.constant 0 : i32
    %c0_i32_2 = arith.constant 0 : i32
    return %c0_i32, %c0_i32_0, %c0_i32_1 : i32, i32, i32
  }
  func.func @transform_4(%arg0: i32) -> (i32, i32, i32, i32) {
    %c0_i32 = arith.constant 0 : i32
    %c0_i32_0 = arith.constant 0 : i32
    %c0_i32_1 = arith.constant 0 : i32
    %c0_i32_2 = arith.constant 0 : i32
    return %arg0, %c0_i32, %c0_i32_0, %c0_i32_1 : i32, i32, i32, i32
  }
  func.func @transform_5(%arg0: i32) -> (i32, i32, i32) {
    %c0_i32 = arith.constant 0 : i32
    %c0_i32_0 = arith.constant 0 : i32
    %c0_i32_1 = arith.constant 0 : i32
    return %arg0, %c0_i32, %c0_i32_0 : i32, i32, i32
  }
}

module attributes {stable_mosaic.version = 11 : i64} {
  func.func @_bn_add_relu_kernel(%arg0: i32, %arg1: memref<1x16x16x128xf32, #tpu.memory_space<vmem>>, %arg2: memref<1x128xf32, #tpu.memory_space<vmem>>, %arg3: memref<1x128xf32, #tpu.memory_space<vmem>>, %arg4: memref<1x16x16x128xf32, #tpu.memory_space<vmem>>, %arg5: memref<1x16x16x128xf32, #tpu.memory_space<vmem>>) attributes {dimension_semantics = [#tpu.dimension_semantics<parallel>], iteration_bounds = array<i64: 2>, scalar_prefetch = 0 : i64, scratch_operands = 0 : i64, tpu.core_type = #tpu.core_type<tc>, window_params = [{transform_indices = @transform_0, window_bounds = array<i64: 1, 16, 16, 128>}, {pipeline_mode = #tpu.pipeline_mode<synchronous>, transform_indices = @transform_1, window_bounds = array<i64: 1, 128>}, {pipeline_mode = #tpu.pipeline_mode<synchronous>, transform_indices = @transform_2, window_bounds = array<i64: 1, 128>}, {transform_indices = @transform_3, window_bounds = array<i64: 1, 16, 16, 128>}, {transform_indices = @transform_4, window_bounds = array<i64: 1, 16, 16, 128>}]} {
    %c0 = arith.constant 0 : index
    %c0_0 = arith.constant 0 : index
    %0 = vector.load %arg2[%c0, %c0_0] : memref<1x128xf32, #tpu.memory_space<vmem>>, vector<1x128xf32>
    %1 = vector.shape_cast %0 : vector<1x128xf32> to vector<1x1x128xf32>
    %c0_1 = arith.constant 0 : index
    %c0_2 = arith.constant 0 : index
    %2 = vector.load %arg3[%c0_1, %c0_2] : memref<1x128xf32, #tpu.memory_space<vmem>>, vector<1x128xf32>
    %3 = vector.shape_cast %2 : vector<1x128xf32> to vector<1x1x128xf32>
    %c0_3 = arith.constant 0 : index
    %c0_4 = arith.constant 0 : index
    %c0_5 = arith.constant 0 : index
    %c0_6 = arith.constant 0 : index
    %4 = vector.load %arg1[%c0_3, %c0_4, %c0_5, %c0_6] : memref<1x16x16x128xf32, #tpu.memory_space<vmem>>, vector<1x16x16x128xf32>
    %5 = vector.shape_cast %4 : vector<1x16x16x128xf32> to vector<16x16x128xf32>
    %6 = vector.broadcast %1 : vector<1x1x128xf32> to vector<16x16x128xf32>
    %7 = arith.mulf %5, %6 : vector<16x16x128xf32>
    %8 = vector.broadcast %3 : vector<1x1x128xf32> to vector<16x16x128xf32>
    %9 = arith.addf %7, %8 : vector<16x16x128xf32>
    %c0_7 = arith.constant 0 : index
    %c0_8 = arith.constant 0 : index
    %c0_9 = arith.constant 0 : index
    %c0_10 = arith.constant 0 : index
    %10 = vector.load %arg4[%c0_7, %c0_8, %c0_9, %c0_10] : memref<1x16x16x128xf32, #tpu.memory_space<vmem>>, vector<1x16x16x128xf32>
    %11 = vector.shape_cast %10 : vector<1x16x16x128xf32> to vector<16x16x128xf32>
    %12 = arith.addf %9, %11 : vector<16x16x128xf32>
    %cst = arith.constant 0.000000e+00 : f32
    %13 = vector.broadcast %cst : f32 to vector<16x16x128xf32>
    %14 = arith.maximumf %12, %13 : vector<16x16x128xf32>
    %c0_11 = arith.constant 0 : index
    %c0_12 = arith.constant 0 : index
    %c0_13 = arith.constant 0 : index
    %c0_14 = arith.constant 0 : index
    %15 = vector.load %arg5[%c0_11, %c0_12, %c0_13, %c0_14] : memref<1x16x16x128xf32, #tpu.memory_space<vmem>>, vector<1x16x16x128xf32>
    %16 = vector.shape_cast %15 : vector<1x16x16x128xf32> to vector<16x16x128xf32>
    %17 = vector.shape_cast %14 : vector<16x16x128xf32> to vector<1x16x16x128xf32>
    tpu.vector_store %arg5[%c0_11, %c0_12, %c0_13, %c0_14], %17 {strides = array<i32>} : memref<1x16x16x128xf32, #tpu.memory_space<vmem>>, vector<1x16x16x128xf32>,
    return
  }
  func.func @transform_0(%arg0: i32) -> (i32, i32, i32, i32) {
    %c0_i32 = arith.constant 0 : i32
    %c0_i32_0 = arith.constant 0 : i32
    %c0_i32_1 = arith.constant 0 : i32
    %c0_i32_2 = arith.constant 0 : i32
    return %arg0, %c0_i32, %c0_i32_0, %c0_i32_1 : i32, i32, i32, i32
  }
  func.func @transform_1(%arg0: i32) -> (i32, i32) {
    %c0_i32 = arith.constant 0 : i32
    %c0_i32_0 = arith.constant 0 : i32
    %c0_i32_1 = arith.constant 0 : i32
    return %c0_i32, %c0_i32_0 : i32, i32
  }
  func.func @transform_2(%arg0: i32) -> (i32, i32) {
    %c0_i32 = arith.constant 0 : i32
    %c0_i32_0 = arith.constant 0 : i32
    %c0_i32_1 = arith.constant 0 : i32
    return %c0_i32, %c0_i32_0 : i32, i32
  }
  func.func @transform_3(%arg0: i32) -> (i32, i32, i32, i32) {
    %c0_i32 = arith.constant 0 : i32
    %c0_i32_0 = arith.constant 0 : i32
    %c0_i32_1 = arith.constant 0 : i32
    %c0_i32_2 = arith.constant 0 : i32
    return %arg0, %c0_i32, %c0_i32_0, %c0_i32_1 : i32, i32, i32, i32
  }
  func.func @transform_4(%arg0: i32) -> (i32, i32, i32, i32) {
    %c0_i32 = arith.constant 0 : i32
    %c0_i32_0 = arith.constant 0 : i32
    %c0_i32_1 = arith.constant 0 : i32
    %c0_i32_2 = arith.constant 0 : i32
    return %arg0, %c0_i32, %c0_i32_0, %c0_i32_1 : i32, i32, i32, i32
  }
}

</mosaic_0001>

<llo_original>
// kernel: basic_block.5
$region0: #{basic_block.5}
  #allocation0 [shape = 'u32[]', space=smem, size = 0x4, offset = 0x4, fixed_abs, tag = 'smem constant byte address 0x4 - core index']
  #allocation1 [shape = 'u32[144,128]{1,0:T(1,128)}', space=vmem, size = 0x12000, scoped, tag = 'internal scratch']
  %s0 = inlined_call_operand.vmem [shape: f32[2,16,16,128], index: 0, kind: input, shape index: {}]
  %s1 = inlined_call_operand.vmem [shape: f32[1,128], index: 1, kind: input, shape index: {}]
  %s2 = inlined_call_operand.vmem [shape: f32[1,128], index: 2, kind: input, shape index: {}]
  %s3 = inlined_call_operand.vmem [shape: f32[2,16,16,128], index: 3, kind: input, shape index: {}]
  %s4 = inlined_call_operand.vmem [shape: f32[2,16,16,128], index: 4, kind: output, shape index: {}]
  %s5 = sld [smem:[#allocation0]]
  $region49: #{basic_block.5} parent=0
    _
  %s7 = ssub.s32 1, %s5
  %s8 = scalar_select 0, %s7, %s5
  loop: start=0, step=1, limit=4
  $region2: #{basic_block.5} parent=0 // loop_pre_header
    _
  $region3: #{basic_block.5} parent=0 // loop_header
    %s10 = sphi 0, %s14
    %p11 = scmp.ge.s32.totalorder %s10, 4
    %s20 = sphi 0, %s22
    %s23 = sphi 0, %s20
    %s24 = sphi 0, %s23
    %s40 = sphi 0, %s24
    %s44 = sphi 0, %s44
    %s46 = sphi 0, %s44
    %s47 = sphi 0, %s46
    %s61 = sphi 0, %s47
    %s65 = sphi 0, %s65
    %s67 = sphi 0, %s65
    %s68 = sphi 0, %s67
    %s82 = sphi 0, %s68
    %s88 = sphi 0, %s90
    %s91 = sphi 0, %s88
    %s92 = sphi 0, %s91
    %s108 = sphi 0, %s92
    %s114 = sphi 0, %s116
    %s117 = sphi 0, %s114
    %s118 = sphi 0, %s117
    %s134 = sphi 0, %s118
  $region4: #{basic_block.5} parent=0 // loop_header_branch
    %13 = sbr.rel (%p11) target = $region8
  $region5: #{basic_block.5} parent=0 // loop_body
    %s15 = ssub.s32 %s10, 1
    %s16 = ssub.s32 %s10, 2
    %s17 = sadd.s32 %s10, 1
    %s18 = ssub.s32 %s10, %s17
    %p19 = scmp.eq.s32.totalorder %s18, 0
    %s21 = sadd.s32 %s20, 1
    %s22 = scalar_select %p19, %s20, %s21
    %p25 = pneg %p19
    %p26 = scmp.eq.s32.totalorder %s10, 1
    %p27 = por %p25, %p26
    %p28 = scmp.ne.s32.totalorder %s20, %s23
    %p29 = scmp.eq.s32.totalorder %s10, 0
    %p30 = por %p28, %p29
    %p31 = scmp.ne.s32.totalorder %s20, %s23
    %p32 = scmp.eq.s32.totalorder %s15, 1
    %p33 = por %p31, %p32
    %p34 = scmp.ne.s32.totalorder %s23, %s24
    %p35 = scmp.eq.s32.totalorder %s15, 0
    %p36 = por %p34, %p35
    %p37 = scmp.ne.s32.totalorder %s23, %s24
    %p38 = scmp.eq.s32.totalorder %s16, 1
    %p39 = por %p37, %p38
    %p41 = scmp.ne.s32.totalorder %s24, %s40
    %p42 = scmp.eq.s32.totalorder %s16, 0
    %p43 = por %p41, %p42
    %s45 = sadd.s32 %s44, 1
    %p48 = scmp.eq.s32.totalorder %s10, 1
    %p49 = scmp.ne.s32.totalorder %s44, %s46
    %p50 = scmp.eq.s32.totalorder %s10, 0
    %p51 = por %p49, %p50
    %p52 = scmp.ne.s32.totalorder %s44, %s46
    %p53 = scmp.eq.s32.totalorder %s15, 1
    %p54 = por %p52, %p53
    %p55 = scmp.ne.s32.totalorder %s46, %s47
    %p56 = scmp.eq.s32.totalorder %s15, 0
    %p57 = por %p55, %p56
    %p58 = scmp.ne.s32.totalorder %s46, %s47
    %p59 = scmp.eq.s32.totalorder %s16, 1
    %p60 = por %p58, %p59
    %p62 = scmp.ne.s32.totalorder %s47, %s61
    %p63 = scmp.eq.s32.totalorder %s16, 0
    %p64 = por %p62, %p63
    %s66 = sadd.s32 %s65, 1
    %p69 = scmp.eq.s32.totalorder %s10, 1
    %p70 = scmp.ne.s32.totalorder %s65, %s67
    %p71 = scmp.eq.s32.totalorder %s10, 0
    %p72 = por %p70, %p71
    %p73 = scmp.ne.s32.totalorder %s65, %s67
    %p74 = scmp.eq.s32.totalorder %s15, 1
    %p75 = por %p73, %p74
    %p76 = scmp.ne.s32.totalorder %s67, %s68
    %p77 = scmp.eq.s32.totalorder %s15, 0
    %p78 = por %p76, %p77
    %p79 = scmp.ne.s32.totalorder %s67, %s68
    %p80 = scmp.eq.s32.totalorder %s16, 1
    %p81 = por %p79, %p80
    %p83 = scmp.ne.s32.totalorder %s68, %s82
    %p84 = scmp.eq.s32.totalorder %s16, 0
    %p85 = por %p83, %p84
    %s86 = ssub.s32 %s10, %s17
    %p87 = scmp.eq.s32.totalorder %s86, 0
    %s89 = sadd.s32 %s88, 1
    %s90 = scalar_select %p87, %s88, %s89
    %p93 = pneg %p87
    %p94 = scmp.eq.s32.totalorder %s10, 1
    %p95 = por %p93, %p94
    %p96 = scmp.ne.s32.totalorder %s88, %s91
    %p97 = scmp.eq.s32.totalorder %s10, 0
    %p98 = por %p96, %p97
    %p99 = scmp.ne.s32.totalorder %s88, %s91
    %p100 = scmp.eq.s32.totalorder %s15, 1
    %p101 = por %p99, %p100
    %p102 = scmp.ne.s32.totalorder %s91, %s92
    %p103 = scmp.eq.s32.totalorder %s15, 0
    %p104 = por %p102, %p103
    %p105 = scmp.ne.s32.totalorder %s91, %s92
    %p106 = scmp.eq.s32.totalorder %s16, 1
    %p107 = por %p105, %p106
    %p109 = scmp.ne.s32.totalorder %s92, %s108
    %p110 = scmp.eq.s32.totalorder %s16, 0
    %p111 = por %p109, %p110
    %s112 = ssub.s32 %s10, %s17
    %p113 = scmp.eq.s32.totalorder %s112, 0
    %s115 = sadd.s32 %s114, 1
    %s116 = scalar_select %p113, %s114, %s115
    %p119 = pneg %p113
    %p120 = scmp.eq.s32.totalorder %s10, 1
    %p121 = por %p119, %p120
    %p122 = scmp.ne.s32.totalorder %s114, %s117
    %p123 = scmp.eq.s32.totalorder %s10, 0
    %p124 = por %p122, %p123
    %p125 = scmp.ne.s32.totalorder %s114, %s117
    %p126 = scmp.eq.s32.totalorder %s15, 1
    %p127 = por %p125, %p126
    %p128 = scmp.ne.s32.totalorder %s117, %s118
    %p129 = scmp.eq.s32.totalorder %s15, 0
    %p130 = por %p128, %p129
    %p131 = scmp.ne.s32.totalorder %s117, %s118
    %p132 = scmp.eq.s32.totalorder %s16, 1
    %p133 = por %p131, %p132
    %p135 = scmp.ne.s32.totalorder %s118, %s134
    %p136 = scmp.eq.s32.totalorder %s16, 0
    %p137 = por %p135, %p136
    %p138 = scmp.le.s32.totalorder 1, %s10
    %p139 = scmp.lt.s32.totalorder %s10, 3
    %p140 = pnand %p138, %p139
    %p141 = pneg %p140
    // Predicated region
    $region9: #{basic_block.5} parent=5 // pred_check
      _
    $region10: #{basic_block.5} parent=5 // pred_check_branch
      %143 = sbr.rel (%p140) target = $region12
    $region11: #{basic_block.5} parent=5 // pred_region
      %s144 = ssub.s32 %s10, 1
      // Predicated region
      $region13: #{basic_block.5} parent=11 // pred_check
        %p145 = pneg %p57
      $region14: #{basic_block.5} parent=11 // pred_check_branch
        %147 = sbr.rel (%p145) target = $region16
      $region15: #{basic_block.5} parent=11 // pred_region
        _
      $region16: #{basic_block.5} parent=11 // pred_fallthru
        _
      // Predicated region
      $region17: #{basic_block.5} parent=11 // pred_check
        %p148 = pneg %p78
      $region18: #{basic_block.5} parent=11 // pred_check_branch
        %150 = sbr.rel (%p148) target = $region20
      $region19: #{basic_block.5} parent=11 // pred_region
        _
      $region20: #{basic_block.5} parent=11 // pred_fallthru
        _
    $region12: #{basic_block.5} parent=5 // pred_fallthru
      _
    %p151 = scmp.lt.s32.totalorder %s10, 2
    // Predicated region
    $region21: #{basic_block.5} parent=5 // pred_check
      %p152 = pneg %p151
    $region22: #{basic_block.5} parent=5 // pred_check_branch
      %154 = sbr.rel (%p152) target = $region24
    $region23: #{basic_block.5} parent=5 // pred_region
      // Predicated region
      $region25: #{basic_block.5} parent=23 // pred_check
        %p155 = pneg %p30
      $region26: #{basic_block.5} parent=23 // pred_check_branch
        %157 = sbr.rel (%p155) target = $region28
      $region27: #{basic_block.5} parent=23 // pred_region
        %p158 = scmp.lt.s32.totalorder %s10, 1
        %s159 = scalar_select %p158, %s10, 1
        %s160 = smul.addr %s159, 32
        %s161 = smul.addr %s160, 8
        %s162 = scalar_lea.vmem %s0, %s161
      $region28: #{basic_block.5} parent=23 // pred_fallthru
        _
      // Predicated region
      $region29: #{basic_block.5} parent=23 // pred_check
        %p163 = pneg %p98
      $region30: #{basic_block.5} parent=23 // pred_check_branch
        %165 = sbr.rel (%p163) target = $region32
      $region31: #{basic_block.5} parent=23 // pred_region
        %p166 = scmp.lt.s32.totalorder %s10, 1
        %s167 = scalar_select %p166, %s10, 1
        %s168 = smul.addr %s167, 32
        %s169 = smul.addr %s168, 8
        %s170 = scalar_lea.vmem %s3, %s169
      $region32: #{basic_block.5} parent=23 // pred_fallthru
        _
    $region24: #{basic_block.5} parent=5 // pred_fallthru
      _
    %p171 = scmp.le.s32.totalorder 1, %s10
    %p172 = scmp.lt.s32.totalorder %s10, 3
    %p173 = pnand %p171, %p172
    %p174 = pneg %p173
    // Predicated region
    $region33: #{basic_block.5} parent=5 // pred_check
      _
    $region34: #{basic_block.5} parent=5 // pred_check_branch
      %176 = sbr.rel (%p173) target = $region36
    $region35: #{basic_block.5} parent=5 // pred_region
      %s177 = ssub.s32 %s10, 1
      %p178 = scmp.lt.s32.totalorder %s15, 1
      %s179 = scalar_select %p178, %s15, 1
      %s180 = smul.addr %s179, 32
      %s181 = smul.addr %s180, 8
      %s182 = scalar_lea.vmem %s0, %s181
      %p183 = pneg %p36
      %p184 = pneg %p33
      %p185 = pneg %p57
      %p186 = pneg %p54
      %p187 = pneg %p78
      %p188 = pneg %p75
      %p189 = scmp.lt.s32.totalorder %s15, 1
      %s190 = scalar_select %p189, %s15, 1
      %s191 = smul.addr %s190, 32
      %s192 = smul.addr %s191, 8
      %s193 = scalar_lea.vmem %s3, %s192
      %p194 = pneg %p104
      %p195 = pneg %p101
      %p196 = pneg %p130
      %p197 = pneg %p127
      %p198 = scmp.lt.s32.totalorder %s15, 1
      %s199 = scalar_select %p198, %s15, 1
      %s200 = smul.addr %s199, 32
      %s201 = smul.addr %s200, 8
      %s202 = scalar_lea.vmem %s4, %s201
      %p203 = scmp.lt.s32.totalorder %s15, 1
      %s204 = scalar_select %p203, %s15, 1
      %s205 = smul.addr %s204, 32
      %s206 = smul.addr %s205, 8
      %s207 = scalar_lea.vmem %s0, %s206
      %p208 = scmp.lt.s32.totalorder %s15, 1
      %s209 = scalar_select %p208, %s15, 1
      %s210 = smul.addr %s209, 32
      %s211 = smul.addr %s210, 8
      %s212 = scalar_lea.vmem %s3, %s211
      %p213 = scmp.lt.s32.totalorder %s15, 1
      %s214 = scalar_select %p213, %s15, 1
      %s215 = smul.addr %s214, 32
      %s216 = smul.addr %s215, 8
      %s217 = scalar_lea.vmem %s4, %s216
      %v218 = vld [vmem:[%s1] sm:$0x1]
      %v219 = vld [vmem:[%s2] sm:$0x1]
      %v220 = vld [vmem:[%s207] sm:$0xff]
      %v221 = vld [vmem:[%s207 + $0x8] sm:$0xff]
      %v222 = vld [vmem:[%s207 + $0x10] sm:$0xff]
      %v223 = vld [vmem:[%s207 + $0x18] sm:$0xff]
      %v224 = vld [vmem:[%s207 + $0x20] sm:$0xff]
      %v225 = vld [vmem:[%s207 + $0x28] sm:$0xff]
      %v226 = vld [vmem:[%s207 + $0x30] sm:$0xff]
      %v227 = vld [vmem:[%s207 + $0x38] sm:$0xff]
      %v228 = vld [vmem:[%s207 + $0x40] sm:$0xff]
      %v229 = vld [vmem:[%s207 + $0x48] sm:$0xff]
      %v230 = vld [vmem:[%s207 + $0x50] sm:$0xff]
      %v231 = vld [vmem:[%s207 + $0x58] sm:$0xff]
      %v232 = vld [vmem:[%s207 + $0x60] sm:$0xff]
      %v233 = vld [vmem:[%s207 + $0x68] sm:$0xff]
      %v234 = vld [vmem:[%s207 + $0x70] sm:$0xff]
      %v235 = vld [vmem:[%s207 + $0x78] sm:$0xff]
      %v236 = vld [vmem:[%s207 + $0x80] sm:$0xff]
      %v237 = vld [vmem:[%s207 + $0x88] sm:$0xff]
      %v238 = vld [vmem:[%s207 + $0x90] sm:$0xff]
      %v239 = vld [vmem:[%s207 + $0x98] sm:$0xff]
      %v240 = vld [vmem:[%s207 + $0xa0] sm:$0xff]
      %v241 = vld [vmem:[%s207 + $0xa8] sm:$0xff]
      %v242 = vld [vmem:[%s207 + $0xb0] sm:$0xff]
      %v243 = vld [vmem:[%s207 + $0xb8] sm:$0xff]
      %v244 = vld [vmem:[%s207 + $0xc0] sm:$0xff]
      %v245 = vld [vmem:[%s207 + $0xc8] sm:$0xff]
      %v246 = vld [vmem:[%s207 + $0xd0] sm:$0xff]
      %v247 = vld [vmem:[%s207 + $0xd8] sm:$0xff]
      %v248 = vld [vmem:[%s207 + $0xe0] sm:$0xff]
      %v249 = vld [vmem:[%s207 + $0xe8] sm:$0xff]
      %v250 = vld [vmem:[%s207 + $0xf0] sm:$0xff]
      %v251 = vld [vmem:[%s207 + $0xf8] sm:$0xff]
      %v253 = vlaneseq
      %v254 = vshrl.u32 %v253, 7
      %v255 = vsub.s32 0, %v254
      %v256 = vrot.slane %v218, %v255
      %v258 = vmul.f32 %v220, %v256
      %v259 = vmul.f32 %v221, %v256
      %v260 = vmul.f32 %v222, %v256
      %v261 = vmul.f32 %v223, %v256
      %v262 = vmul.f32 %v224, %v256
      %v263 = vmul.f32 %v225, %v256
      %v264 = vmul.f32 %v226, %v256
      %v265 = vmul.f32 %v227, %v256
      %v266 = vmul.f32 %v228, %v256
      %v267 = vmul.f32 %v229, %v256
      %v268 = vmul.f32 %v230, %v256
      %v269 = vmul.f32 %v231, %v256
      %v270 = vmul.f32 %v232, %v256
      %v271 = vmul.f32 %v233, %v256
      %v272 = vmul.f32 %v234, %v256
      %v273 = vmul.f32 %v235, %v256
      %v274 = vmul.f32 %v236, %v256
      %v275 = vmul.f32 %v237, %v256
      %v276 = vmul.f32 %v238, %v256
      %v277 = vmul.f32 %v239, %v256
      %v278 = vmul.f32 %v240, %v256
      %v279 = vmul.f32 %v241, %v256
      %v280 = vmul.f32 %v242, %v256
      %v281 = vmul.f32 %v243, %v256
      %v282 = vmul.f32 %v244, %v256
      %v283 = vmul.f32 %v245, %v256
      %v284 = vmul.f32 %v246, %v256
      %v285 = vmul.f32 %v247, %v256
      %v286 = vmul.f32 %v248, %v256
      %v287 = vmul.f32 %v249, %v256
      %v288 = vmul.f32 %v250, %v256
      %v289 = vmul.f32 %v251, %v256
      %v291 = vlaneseq
      %v292 = vshrl.u32 %v291, 7
      %v293 = vsub.s32 0, %v292
      %v294 = vrot.slane %v219, %v293
      %v296 = vadd.f32 %v258, %v294
      %v297 = vadd.f32 %v259, %v294
      %v298 = vadd.f32 %v260, %v294
      %v299 = vadd.f32 %v261, %v294
      %v300 = vadd.f32 %v262, %v294
      %v301 = vadd.f32 %v263, %v294
      %v302 = vadd.f32 %v264, %v294
      %v303 = vadd.f32 %v265, %v294
      %v304 = vadd.f32 %v266, %v294
      %v305 = vadd.f32 %v267, %v294
      %v306 = vadd.f32 %v268, %v294
      %v307 = vadd.f32 %v269, %v294
      %v308 = vadd.f32 %v270, %v294
      %v309 = vadd.f32 %v271, %v294
      %v310 = vadd.f32 %v272, %v294
      %v311 = vadd.f32 %v273, %v294
      %v312 = vadd.f32 %v274, %v294
      %v313 = vadd.f32 %v275, %v294
      %v314 = vadd.f32 %v276, %v294
      %v315 = vadd.f32 %v277, %v294
      %v316 = vadd.f32 %v278, %v294
      %v317 = vadd.f32 %v279, %v294
      %v318 = vadd.f32 %v280, %v294
      %v319 = vadd.f32 %v281, %v294
      %v320 = vadd.f32 %v282, %v294
      %v321 = vadd.f32 %v283, %v294
      %v322 = vadd.f32 %v284, %v294
      %v323 = vadd.f32 %v285, %v294
      %v324 = vadd.f32 %v286, %v294
      %v325 = vadd.f32 %v287, %v294
      %v326 = vadd.f32 %v288, %v294
      %v327 = vadd.f32 %v289, %v294
      %v328 = vld [vmem:[%s212] sm:$0xff]
      %v329 = vld [vmem:[%s212 + $0x8] sm:$0xff]
      %v330 = vld [vmem:[%s212 + $0x10] sm:$0xff]
      %v331 = vld [vmem:[%s212 + $0x18] sm:$0xff]
      %v332 = vld [vmem:[%s212 + $0x20] sm:$0xff]
      %v333 = vld [vmem:[%s212 + $0x28] sm:$0xff]
      %v334 = vld [vmem:[%s212 + $0x30] sm:$0xff]
      %v335 = vld [vmem:[%s212 + $0x38] sm:$0xff]
      %v336 = vld [vmem:[%s212 + $0x40] sm:$0xff]
      %v337 = vld [vmem:[%s212 + $0x48] sm:$0xff]
      %v338 = vld [vmem:[%s212 + $0x50] sm:$0xff]
      %v339 = vld [vmem:[%s212 + $0x58] sm:$0xff]
      %v340 = vld [vmem:[%s212 + $0x60] sm:$0xff]
      %v341 = vld [vmem:[%s212 + $0x68] sm:$0xff]
      %v342 = vld [vmem:[%s212 + $0x70] sm:$0xff]
      %v343 = vld [vmem:[%s212 + $0x78] sm:$0xff]
      %v344 = vld [vmem:[%s212 + $0x80] sm:$0xff]
      %v345 = vld [vmem:[%s212 + $0x88] sm:$0xff]
      %v346 = vld [vmem:[%s212 + $0x90] sm:$0xff]
      %v347 = vld [vmem:[%s212 + $0x98] sm:$0xff]
      %v348 = vld [vmem:[%s212 + $0xa0] sm:$0xff]
      %v349 = vld [vmem:[%s212 + $0xa8] sm:$0xff]
      %v350 = vld [vmem:[%s212 + $0xb0] sm:$0xff]
      %v351 = vld [vmem:[%s212 + $0xb8] sm:$0xff]
      %v352 = vld [vmem:[%s212 + $0xc0] sm:$0xff]
      %v353 = vld [vmem:[%s212 + $0xc8] sm:$0xff]
      %v354 = vld [vmem:[%s212 + $0xd0] sm:$0xff]
      %v355 = vld [vmem:[%s212 + $0xd8] sm:$0xff]
      %v356 = vld [vmem:[%s212 + $0xe0] sm:$0xff]
      %v357 = vld [vmem:[%s212 + $0xe8] sm:$0xff]
      %v358 = vld [vmem:[%s212 + $0xf0] sm:$0xff]
      %v359 = vld [vmem:[%s212 + $0xf8] sm:$0xff]
      %v360 = vadd.f32 %v296, %v328
      %v361 = vadd.f32 %v297, %v329
      %v362 = vadd.f32 %v298, %v330
      %v363 = vadd.f32 %v299, %v331
      %v364 = vadd.f32 %v300, %v332
      %v365 = vadd.f32 %v301, %v333
      %v366 = vadd.f32 %v302, %v334
      %v367 = vadd.f32 %v303, %v335
      %v368 = vadd.f32 %v304, %v336
      %v369 = vadd.f32 %v305, %v337
      %v370 = vadd.f32 %v306, %v338
      %v371 = vadd.f32 %v307, %v339
      %v372 = vadd.f32 %v308, %v340
      %v373 = vadd.f32 %v309, %v341
      %v374 = vadd.f32 %v310, %v342
      %v375 = vadd.f32 %v311, %v343
      %v376 = vadd.f32 %v312, %v344
      %v377 = vadd.f32 %v313, %v345
      %v378 = vadd.f32 %v314, %v346
      %v379 = vadd.f32 %v315, %v347
      %v380 = vadd.f32 %v316, %v348
      %v381 = vadd.f32 %v317, %v349
      %v382 = vadd.f32 %v318, %v350
      %v383 = vadd.f32 %v319, %v351
      %v384 = vadd.f32 %v320, %v352
      %v385 = vadd.f32 %v321, %v353
      %v386 = vadd.f32 %v322, %v354
      %v387 = vadd.f32 %v323, %v355
      %v388 = vadd.f32 %v324, %v356
      %v389 = vadd.f32 %v325, %v357
      %v390 = vadd.f32 %v326, %v358
      %v391 = vadd.f32 %v327, %v359
      %v392 = vmax.f32 %v360, 0.0
      %v393 = vmax.f32 %v361, 0.0
      %v394 = vmax.f32 %v362, 0.0
      %v395 = vmax.f32 %v363, 0.0
      %v396 = vmax.f32 %v364, 0.0
      %v397 = vmax.f32 %v365, 0.0
      %v398 = vmax.f32 %v366, 0.0
      %v399 = vmax.f32 %v367, 0.0
      %v400 = vmax.f32 %v368, 0.0
      %v401 = vmax.f32 %v369, 0.0
      %v402 = vmax.f32 %v370, 0.0
      %v403 = vmax.f32 %v371, 0.0
      %v404 = vmax.f32 %v372, 0.0
      %v405 = vmax.f32 %v373, 0.0
      %v406 = vmax.f32 %v374, 0.0
      %v407 = vmax.f32 %v375, 0.0
      %v408 = vmax.f32 %v376, 0.0
      %v409 = vmax.f32 %v377, 0.0
      %v410 = vmax.f32 %v378, 0.0
      %v411 = vmax.f32 %v379, 0.0
      %v412 = vmax.f32 %v380, 0.0
      %v413 = vmax.f32 %v381, 0.0
      %v414 = vmax.f32 %v382, 0.0
      %v415 = vmax.f32 %v383, 0.0
      %v416 = vmax.f32 %v384, 0.0
      %v417 = vmax.f32 %v385, 0.0
      %v418 = vmax.f32 %v386, 0.0
      %v419 = vmax.f32 %v387, 0.0
      %v420 = vmax.f32 %v388, 0.0
      %v421 = vmax.f32 %v389, 0.0
      %v422 = vmax.f32 %v390, 0.0
      %v423 = vmax.f32 %v391, 0.0
      %424 = vst [vmem:[%s217] sm:$0xff] %v392
      %425 = vst [vmem:[%s217 + $0x8] sm:$0xff] %v393
      %426 = vst [vmem:[%s217 + $0x10] sm:$0xff] %v394
      %427 = vst [vmem:[%s217 + $0x18] sm:$0xff] %v395
      %428 = vst [vmem:[%s217 + $0x20] sm:$0xff] %v396
      %429 = vst [vmem:[%s217 + $0x28] sm:$0xff] %v397
      %430 = vst [vmem:[%s217 + $0x30] sm:$0xff] %v398
      %431 = vst [vmem:[%s217 + $0x38] sm:$0xff] %v399
      %432 = vst [vmem:[%s217 + $0x40] sm:$0xff] %v400
      %433 = vst [vmem:[%s217 + $0x48] sm:$0xff] %v401
      %434 = vst [vmem:[%s217 + $0x50] sm:$0xff] %v402
      %435 = vst [vmem:[%s217 + $0x58] sm:$0xff] %v403
      %436 = vst [vmem:[%s217 + $0x60] sm:$0xff] %v404
      %437 = vst [vmem:[%s217 + $0x68] sm:$0xff] %v405
      %438 = vst [vmem:[%s217 + $0x70] sm:$0xff] %v406
      %439 = vst [vmem:[%s217 + $0x78] sm:$0xff] %v407
      %440 = vst [vmem:[%s217 + $0x80] sm:$0xff] %v408
      %441 = vst [vmem:[%s217 + $0x88] sm:$0xff] %v409
      %442 = vst [vmem:[%s217 + $0x90] sm:$0xff] %v410
      %443 = vst [vmem:[%s217 + $0x98] sm:$0xff] %v411
      %444 = vst [vmem:[%s217 + $0xa0] sm:$0xff] %v412
      %445 = vst [vmem:[%s217 + $0xa8] sm:$0xff] %v413
      %446 = vst [vmem:[%s217 + $0xb0] sm:$0xff] %v414
      %447 = vst [vmem:[%s217 + $0xb8] sm:$0xff] %v415
      %448 = vst [vmem:[%s217 + $0xc0] sm:$0xff] %v416
      %449 = vst [vmem:[%s217 + $0xc8] sm:$0xff] %v417
      %450 = vst [vmem:[%s217 + $0xd0] sm:$0xff] %v418
      %451 = vst [vmem:[%s217 + $0xd8] sm:$0xff] %v419
      %452 = vst [vmem:[%s217 + $0xe0] sm:$0xff] %v420
      %453 = vst [vmem:[%s217 + $0xe8] sm:$0xff] %v421
      %454 = vst [vmem:[%s217 + $0xf0] sm:$0xff] %v422
      %455 = vst [vmem:[%s217 + $0xf8] sm:$0xff] %v423
      %p456 = scmp.lt.s32.totalorder %s15, 1
      %s457 = scalar_select %p456, %s15, 1
      %s458 = smul.addr %s457, 32
      %s459 = smul.addr %s458, 8
      %s460 = scalar_lea.vmem %s4, %s459
      // Predicated region
      $region37: #{basic_block.5} parent=35 // pred_check
        %p461 = pneg %p127
      $region38: #{basic_block.5} parent=35 // pred_check_branch
        %463 = sbr.rel (%p461) target = $region40
      $region39: #{basic_block.5} parent=35 // pred_region
        _
      $region40: #{basic_block.5} parent=35 // pred_fallthru
        _
    $region36: #{basic_block.5} parent=5 // pred_fallthru
      _
    %p464 = scmp.le.s32.totalorder 2, %s10
    // Predicated region
    $region41: #{basic_block.5} parent=5 // pred_check
      %p465 = pneg %p464
    $region42: #{basic_block.5} parent=5 // pred_check_branch
      %467 = sbr.rel (%p465) target = $region44
    $region43: #{basic_block.5} parent=5 // pred_region
      %s468 = ssub.s32 %s10, 2
      // Predicated region
      $region45: #{basic_block.5} parent=43 // pred_check
        %p469 = pneg %p133
      $region46: #{basic_block.5} parent=43 // pred_check_branch
        %471 = sbr.rel (%p469) target = $region48
      $region47: #{basic_block.5} parent=43 // pred_region
        %p472 = scmp.lt.s32.totalorder %s16, 1
        %s473 = scalar_select %p472, %s16, 1
        %s474 = smul.addr %s473, 32
        %s475 = smul.addr %s474, 8
        %s476 = scalar_lea.vmem %s4, %s475
      $region48: #{basic_block.5} parent=43 // pred_fallthru
        _
    $region44: #{basic_block.5} parent=5 // pred_fallthru
      _
  $region6: #{basic_block.5} parent=0 // loop_footer
    %s14 = sadd.s32 1, %s10
  $region7: #{basic_block.5} parent=0 // loop_footer_branch
    %9 = sbr.rel target = $region3
  $region8: #{basic_block.5} parent=0 // loop_exit
    _

// kernel: basic_block.3
$region0: #{basic_block.3}
  #allocation0 [shape = 'u32[]', space=smem, size = 0x4, offset = 0x4, fixed_abs, tag = 'smem constant byte address 0x4 - core index']
  #allocation1 [shape = 'u32[144,128]{1,0:T(1,128)}', space=vmem, size = 0x12000, scoped, tag = 'internal scratch']
  %s0 = inlined_call_operand.vmem [shape: f32[2,16,16,128], index: 0, kind: input, shape index: {}]
  %s1 = inlined_call_operand.vmem [shape: bf16[3,384,128], index: 1, kind: input, shape index: {}]
  %s2 = inlined_call_operand.vmem [shape: f32[2,16,16,128], index: 2, kind: output, shape index: {0}]
  %s3 = inlined_call_operand.vmem [shape: f32[2,2,128], index: 3, kind: output, shape index: {1}]
  %4 = xla_tuple %s2, %s3
  %s5 = sld [smem:[#allocation0]]
  $region49: #{basic_block.3} parent=0
    _
  %s7 = ssub.s32 1, %s5
  %s8 = scalar_select 0, %s7, %s5
  loop: start=0, step=1, limit=4
  $region2: #{basic_block.3} parent=0 // loop_pre_header
    _
  $region3: #{basic_block.3} parent=0 // loop_header
    %s10 = sphi 0, %s14
    %p11 = scmp.ge.s32.totalorder %s10, 4
    %s20 = sphi 0, %s22
    %s23 = sphi 0, %s20
    %s24 = sphi 0, %s23
    %s40 = sphi 0, %s24
    %s44 = sphi 0, %s44
    %s46 = sphi 0, %s44
    %s47 = sphi 0, %s46
    %s61 = sphi 0, %s47
    %s67 = sphi 0, %s69
    %s70 = sphi 0, %s67
    %s71 = sphi 0, %s70
    %s87 = sphi 0, %s71
    %s93 = sphi 0, %s95
    %s96 = sphi 0, %s93
    %s97 = sphi 0, %s96
    %s113 = sphi 0, %s97
  $region4: #{basic_block.3} parent=0 // loop_header_branch
    %13 = sbr.rel (%p11) target = $region8
  $region5: #{basic_block.3} parent=0 // loop_body
    %s15 = ssub.s32 %s10, 1
    %s16 = ssub.s32 %s10, 2
    %s17 = sadd.s32 %s10, 1
    %s18 = ssub.s32 %s10, %s17
    %p19 = scmp.eq.s32.totalorder %s18, 0
    %s21 = sadd.s32 %s20, 1
    %s22 = scalar_select %p19, %s20, %s21
    %p25 = pneg %p19
    %p26 = scmp.eq.s32.totalorder %s10, 1
    %p27 = por %p25, %p26
    %p28 = scmp.ne.s32.totalorder %s20, %s23
    %p29 = scmp.eq.s32.totalorder %s10, 0
    %p30 = por %p28, %p29
    %p31 = scmp.ne.s32.totalorder %s20, %s23
    %p32 = scmp.eq.s32.totalorder %s15, 1
    %p33 = por %p31, %p32
    %p34 = scmp.ne.s32.totalorder %s23, %s24
    %p35 = scmp.eq.s32.totalorder %s15, 0
    %p36 = por %p34, %p35
    %p37 = scmp.ne.s32.totalorder %s23, %s24
    %p38 = scmp.eq.s32.totalorder %s16, 1
    %p39 = por %p37, %p38
    %p41 = scmp.ne.s32.totalorder %s24, %s40
    %p42 = scmp.eq.s32.totalorder %s16, 0
    %p43 = por %p41, %p42
    %s45 = sadd.s32 %s44, 1
    %p48 = scmp.eq.s32.totalorder %s10, 1
    %p49 = scmp.ne.s32.totalorder %s44, %s46
    %p50 = scmp.eq.s32.totalorder %s10, 0
    %p51 = por %p49, %p50
    %p52 = scmp.ne.s32.totalorder %s44, %s46
    %p53 = scmp.eq.s32.totalorder %s15, 1
    %p54 = por %p52, %p53
    %p55 = scmp.ne.s32.totalorder %s46, %s47
    %p56 = scmp.eq.s32.totalorder %s15, 0
    %p57 = por %p55, %p56
    %p58 = scmp.ne.s32.totalorder %s46, %s47
    %p59 = scmp.eq.s32.totalorder %s16, 1
    %p60 = por %p58, %p59
    %p62 = scmp.ne.s32.totalorder %s47, %s61
    %p63 = scmp.eq.s32.totalorder %s16, 0
    %p64 = por %p62, %p63
    %s65 = ssub.s32 %s10, %s17
    %p66 = scmp.eq.s32.totalorder %s65, 0
    %s68 = sadd.s32 %s67, 1
    %s69 = scalar_select %p66, %s67, %s68
    %p72 = pneg %p66
    %p73 = scmp.eq.s32.totalorder %s10, 1
    %p74 = por %p72, %p73
    %p75 = scmp.ne.s32.totalorder %s67, %s70
    %p76 = scmp.eq.s32.totalorder %s10, 0
    %p77 = por %p75, %p76
    %p78 = scmp.ne.s32.totalorder %s67, %s70
    %p79 = scmp.eq.s32.totalorder %s15, 1
    %p80 = por %p78, %p79
    %p81 = scmp.ne.s32.totalorder %s70, %s71
    %p82 = scmp.eq.s32.totalorder %s15, 0
    %p83 = por %p81, %p82
    %p84 = scmp.ne.s32.totalorder %s70, %s71
    %p85 = scmp.eq.s32.totalorder %s16, 1
    %p86 = por %p84, %p85
    %p88 = scmp.ne.s32.totalorder %s71, %s87
    %p89 = scmp.eq.s32.totalorder %s16, 0
    %p90 = por %p88, %p89
    %s91 = ssub.s32 %s10, %s17
    %p92 = scmp.eq.s32.totalorder %s91, 0
    %s94 = sadd.s32 %s93, 1
    %s95 = scalar_select %p92, %s93, %s94
    %p98 = pneg %p92
    %p99 = scmp.eq.s32.totalorder %s10, 1
    %p100 = por %p98, %p99
    %p101 = scmp.ne.s32.totalorder %s93, %s96
    %p102 = scmp.eq.s32.totalorder %s10, 0
    %p103 = por %p101, %p102
    %p104 = scmp.ne.s32.totalorder %s93, %s96
    %p105 = scmp.eq.s32.totalorder %s15, 1
    %p106 = por %p104, %p105
    %p107 = scmp.ne.s32.totalorder %s96, %s97
    %p108 = scmp.eq.s32.totalorder %s15, 0
    %p109 = por %p107, %p108
    %p110 = scmp.ne.s32.totalorder %s96, %s97
    %p111 = scmp.eq.s32.totalorder %s16, 1
    %p112 = por %p110, %p111
    %p114 = scmp.ne.s32.totalorder %s97, %s113
    %p115 = scmp.eq.s32.totalorder %s16, 0
    %p116 = por %p114, %p115
    %p117 = scmp.le.s32.totalorder 1, %s10
    %p118 = scmp.lt.s32.totalorder %s10, 3
    %p119 = pnand %p117, %p118
    %p120 = pneg %p119
    // Predicated region
    $region9: #{basic_block.3} parent=5 // pred_check
      _
    $region10: #{basic_block.3} parent=5 // pred_check_branch
      %122 = sbr.rel (%p119) target = $region12
    $region11: #{basic_block.3} parent=5 // pred_region
      %s123 = ssub.s32 %s10, 1
      // Predicated region
      $region13: #{basic_block.3} parent=11 // pred_check
        %p124 = pneg %p57
      $region14: #{basic_block.3} parent=11 // pred_check_branch
        %126 = sbr.rel (%p124) target = $region16
      $region15: #{basic_block.3} parent=11 // pred_region
        _
      $region16: #{basic_block.3} parent=11 // pred_fallthru
        _
    $region12: #{basic_block.3} parent=5 // pred_fallthru
      _
    %p127 = scmp.lt.s32.totalorder %s10, 2
    // Predicated region
    $region17: #{basic_block.3} parent=5 // pred_check
      %p128 = pneg %p127
    $region18: #{basic_block.3} parent=5 // pred_check_branch
      %130 = sbr.rel (%p128) target = $region20
    $region19: #{basic_block.3} parent=5 // pred_region
      // Predicated region
      $region21: #{basic_block.3} parent=19 // pred_check
        %p131 = pneg %p30
      $region22: #{basic_block.3} parent=19 // pred_check_branch
        %133 = sbr.rel (%p131) target = $region24
      $region23: #{basic_block.3} parent=19 // pred_region
        %p134 = scmp.lt.s32.totalorder %s10, 1
        %s135 = scalar_select %p134, %s10, 1
        %s136 = smul.addr %s135, 32
        %s137 = smul.addr %s136, 8
        %s138 = scalar_lea.vmem %s0, %s137
      $region24: #{basic_block.3} parent=19 // pred_fallthru
        _
    $region20: #{basic_block.3} parent=5 // pred_fallthru
      _
    %p139 = scmp.le.s32.totalorder 1, %s10
    %p140 = scmp.lt.s32.totalorder %s10, 3
    %p141 = pnand %p139, %p140
    %p142 = pneg %p141
    // Predicated region
    $region25: #{basic_block.3} parent=5 // pred_check
      _
    $region26: #{basic_block.3} parent=5 // pred_check_branch
      %144 = sbr.rel (%p141) target = $region28
    $region27: #{basic_block.3} parent=5 // pred_region
      %s145 = ssub.s32 %s10, 1
      %p146 = scmp.lt.s32.totalorder %s15, 1
      %s147 = scalar_select %p146, %s15, 1
      %s148 = smul.addr %s147, 32
      %s149 = smul.addr %s148, 8
      %s150 = scalar_lea.vmem %s0, %s149
      %p151 = pneg %p36
      %p152 = pneg %p33
      %p153 = pneg %p57
      %p154 = pneg %p54
      %p155 = pneg %p83
      %p156 = pneg %p80
      %p157 = scmp.lt.s32.totalorder %s15, 1
      %s158 = scalar_select %p157, %s15, 1
      %s159 = smul.addr %s158, 32
      %s160 = smul.addr %s159, 8
      %s161 = scalar_lea.vmem %s2, %s160
      %p162 = pneg %p109
      %p163 = pneg %p106
      %p164 = scmp.lt.s32.totalorder %s15, 1
      %s165 = scalar_select %p164, %s15, 1
      %s166 = smul.addr %s165, 2
      %s167 = scalar_lea.vmem %s3, %s166
      %p168 = scmp.lt.s32.totalorder %s15, 1
      %s169 = scalar_select %p168, %s15, 1
      %s170 = smul.addr %s169, 32
      %s171 = smul.addr %s170, 8
      %s172 = scalar_lea.vmem %s0, %s171
      %p173 = scmp.lt.s32.totalorder %s15, 1
      %s174 = scalar_select %p173, %s15, 1
      %s175 = smul.addr %s174, 32
      %s176 = smul.addr %s175, 8
      %s177 = scalar_lea.vmem %s2, %s176
      %p178 = scmp.lt.s32.totalorder %s15, 1
      %s179 = scalar_select %p178, %s15, 1
      %s180 = smul.addr %s179, 2
      %s181 = scalar_lea.vmem %s3, %s180
      %v183 = vld [vmem:[%s172] sm:$0xff]
      %v184 = vld [vmem:[%s172 + $0x8] sm:$0xff]
      %v185 = vld [vmem:[%s172 + $0x10] sm:$0xff]
      %v186 = vld [vmem:[%s172 + $0x18] sm:$0xff]
      %v187 = vld [vmem:[%s172 + $0x20] sm:$0xff]
      %v188 = vld [vmem:[%s172 + $0x28] sm:$0xff]
      %v189 = vld [vmem:[%s172 + $0x30] sm:$0xff]
      %v190 = vld [vmem:[%s172 + $0x38] sm:$0xff]
      %v191 = vld [vmem:[%s172 + $0x40] sm:$0xff]
      %v192 = vld [vmem:[%s172 + $0x48] sm:$0xff]
      %v193 = vld [vmem:[%s172 + $0x50] sm:$0xff]
      %v194 = vld [vmem:[%s172 + $0x58] sm:$0xff]
      %v195 = vld [vmem:[%s172 + $0x60] sm:$0xff]
      %v196 = vld [vmem:[%s172 + $0x68] sm:$0xff]
      %v197 = vld [vmem:[%s172 + $0x70] sm:$0xff]
      %v198 = vld [vmem:[%s172 + $0x78] sm:$0xff]
      %v199 = vld [vmem:[%s172 + $0x80] sm:$0xff]
      %v200 = vld [vmem:[%s172 + $0x88] sm:$0xff]
      %v201 = vld [vmem:[%s172 + $0x90] sm:$0xff]
      %v202 = vld [vmem:[%s172 + $0x98] sm:$0xff]
      %v203 = vld [vmem:[%s172 + $0xa0] sm:$0xff]
      %v204 = vld [vmem:[%s172 + $0xa8] sm:$0xff]
      %v205 = vld [vmem:[%s172 + $0xb0] sm:$0xff]
      %v206 = vld [vmem:[%s172 + $0xb8] sm:$0xff]
      %v207 = vld [vmem:[%s172 + $0xc0] sm:$0xff]
      %v208 = vld [vmem:[%s172 + $0xc8] sm:$0xff]
      %v209 = vld [vmem:[%s172 + $0xd0] sm:$0xff]
      %v210 = vld [vmem:[%s172 + $0xd8] sm:$0xff]
      %v211 = vld [vmem:[%s172 + $0xe0] sm:$0xff]
      %v212 = vld [vmem:[%s172 + $0xe8] sm:$0xff]
      %v213 = vld [vmem:[%s172 + $0xf0] sm:$0xff]
      %v214 = vld [vmem:[%s172 + $0xf8] sm:$0xff]
      %vm246 = vcmask 1040384
      %v247 = vrot.slane 0.0, 7
      %v248 = vsel %vm246, %v247, %v247
      %v249 = vrot.slane %v183, 7
      %v250 = vrot.slane %v184, 7
      %v251 = vsel %vm246, %v249, %v250
      %v252 = vrot.slane %v185, 7
      %v253 = vrot.slane %v186, 7
      %v254 = vsel %vm246, %v252, %v253
      %v255 = vrot.slane %v187, 7
      %v256 = vrot.slane %v188, 7
      %v257 = vsel %vm246, %v255, %v256
      %v258 = vrot.slane %v189, 7
      %v259 = vrot.slane %v190, 7
      %v260 = vsel %vm246, %v258, %v259
      %v261 = vrot.slane %v191, 7
      %v262 = vrot.slane %v192, 7
      %v263 = vsel %vm246, %v261, %v262
      %v264 = vrot.slane %v193, 7
      %v265 = vrot.slane %v194, 7
      %v266 = vsel %vm246, %v264, %v265
      %v267 = vrot.slane %v195, 7
      %v268 = vrot.slane %v196, 7
      %v269 = vsel %vm246, %v267, %v268
      %v270 = vrot.slane %v197, 7
      %v271 = vrot.slane %v198, 7
      %v272 = vsel %vm246, %v270, %v271
      %v273 = vrot.slane %v199, 7
      %v274 = vrot.slane %v200, 7
      %v275 = vsel %vm246, %v273, %v274
      %v276 = vrot.slane %v201, 7
      %v277 = vrot.slane %v202, 7
      %v278 = vsel %vm246, %v276, %v277
      %v279 = vrot.slane %v203, 7
      %v280 = vrot.slane %v204, 7
      %v281 = vsel %vm246, %v279, %v280
      %v282 = vrot.slane %v205, 7
      %v283 = vrot.slane %v206, 7
      %v284 = vsel %vm246, %v282, %v283
      %v285 = vrot.slane %v207, 7
      %v286 = vrot.slane %v208, 7
      %v287 = vsel %vm246, %v285, %v286
      %v288 = vrot.slane %v209, 7
      %v289 = vrot.slane %v210, 7
      %v290 = vsel %vm246, %v288, %v289
      %v291 = vrot.slane %v211, 7
      %v292 = vrot.slane %v212, 7
      %v293 = vsel %vm246, %v291, %v292
      %v326 = vsel %vm246, 0.0, %v247
      %v327 = vsel %vm246, 0.0, %v249
      %v328 = vsel %vm246, 0.0, %v252
      %v329 = vsel %vm246, 0.0, %v255
      %v330 = vsel %vm246, 0.0, %v258
      %v331 = vsel %vm246, 0.0, %v261
      %v332 = vsel %vm246, 0.0, %v264
      %v333 = vsel %vm246, 0.0, %v267
      %v334 = vsel %vm246, 0.0, %v270
      %v335 = vsel %vm246, 0.0, %v273
      %v336 = vsel %vm246, 0.0, %v276
      %v337 = vsel %vm246, 0.0, %v279
      %v338 = vsel %vm246, 0.0, %v282
      %v339 = vsel %vm246, 0.0, %v285
      %v340 = vsel %vm246, 0.0, %v288
      %v341 = vsel %vm246, 0.0, %v291
      %vm342 = vcmask 1046528
      %v343 = vrot.slane 0.0, 1
      %v344 = vsel %vm342, %v343, %v343
      %v345 = vrot.slane %v183, 1
      %v346 = vrot.slane %v184, 1
      %v347 = vsel %vm342, %v345, %v346
      %v348 = vrot.slane %v185, 1
      %v349 = vrot.slane %v186, 1
      %v350 = vsel %vm342, %v348, %v349
      %v351 = vrot.slane %v187, 1
      %v352 = vrot.slane %v188, 1
      %v353 = vsel %vm342, %v351, %v352
      %v354 = vrot.slane %v189, 1
      %v355 = vrot.slane %v190, 1
      %v356 = vsel %vm342, %v354, %v355
      %v357 = vrot.slane %v191, 1
      %v358 = vrot.slane %v192, 1
      %v359 = vsel %vm342, %v357, %v358
      %v360 = vrot.slane %v193, 1
      %v361 = vrot.slane %v194, 1
      %v362 = vsel %vm342, %v360, %v361
      %v363 = vrot.slane %v195, 1
      %v364 = vrot.slane %v196, 1
      %v365 = vsel %vm342, %v363, %v364
      %v366 = vrot.slane %v197, 1
      %v367 = vrot.slane %v198, 1
      %v368 = vsel %vm342, %v366, %v367
      %v369 = vrot.slane %v199, 1
      %v370 = vrot.slane %v200, 1
      %v371 = vsel %vm342, %v369, %v370
      %v372 = vrot.slane %v201, 1
      %v373 = vrot.slane %v202, 1
      %v374 = vsel %vm342, %v372, %v373
      %v375 = vrot.slane %v203, 1
      %v376 = vrot.slane %v204, 1
      %v377 = vsel %vm342, %v375, %v376
      %v378 = vrot.slane %v205, 1
      %v379 = vrot.slane %v206, 1
      %v380 = vsel %vm342, %v378, %v379
      %v381 = vrot.slane %v207, 1
      %v382 = vrot.slane %v208, 1
      %v383 = vsel %vm342, %v381, %v382
      %v384 = vrot.slane %v209, 1
      %v385 = vrot.slane %v210, 1
      %v386 = vsel %vm342, %v384, %v385
      %v387 = vrot.slane %v211, 1
      %v388 = vrot.slane %v212, 1
      %v389 = vsel %vm342, %v387, %v388
      %v422 = vsel %vm342, %v343, 0.0
      %v423 = vsel %vm342, %v346, 0.0
      %v424 = vsel %vm342, %v349, 0.0
      %v425 = vsel %vm342, %v352, 0.0
      %v426 = vsel %vm342, %v355, 0.0
      %v427 = vsel %vm342, %v358, 0.0
      %v428 = vsel %vm342, %v361, 0.0
      %v429 = vsel %vm342, %v364, 0.0
      %v430 = vsel %vm342, %v367, 0.0
      %v431 = vsel %vm342, %v370, 0.0
      %v432 = vsel %vm342, %v373, 0.0
      %v433 = vsel %vm342, %v376, 0.0
      %v434 = vsel %vm342, %v379, 0.0
      %v435 = vsel %vm342, %v382, 0.0
      %v436 = vsel %vm342, %v385, 0.0
      %v437 = vsel %vm342, %v388, 0.0
      %v438 = vpack.c.bf16 %v248, %v326
      %v439 = vpack.c.bf16 0.0, 0.0
      %v440 = vpack.c.bf16 %v422, %v344
      %v441 = vpack.c.bf16 %v251, %v327
      %v442 = vpack.c.bf16 %v184, %v183
      %v443 = vpack.c.bf16 %v423, %v347
      %v444 = vpack.c.bf16 %v254, %v328
      %v445 = vpack.c.bf16 %v186, %v185
      %v446 = vpack.c.bf16 %v424, %v350
      %v447 = vpack.c.bf16 %v257, %v329
      %v448 = vpack.c.bf16 %v188, %v187
      %v449 = vpack.c.bf16 %v425, %v353
      %v450 = vpack.c.bf16 %v260, %v330
      %v451 = vpack.c.bf16 %v190, %v189
      %v452 = vpack.c.bf16 %v426, %v356
      %v453 = vpack.c.bf16 %v263, %v331
      %v454 = vpack.c.bf16 %v192, %v191
      %v455 = vpack.c.bf16 %v427, %v359
      %v456 = vpack.c.bf16 %v266, %v332
      %v457 = vpack.c.bf16 %v194, %v193
      %v458 = vpack.c.bf16 %v428, %v362
      %v459 = vpack.c.bf16 %v269, %v333
      %v460 = vpack.c.bf16 %v196, %v195
      %v461 = vpack.c.bf16 %v429, %v365
      %v462 = vpack.c.bf16 %v272, %v334
      %v463 = vpack.c.bf16 %v198, %v197
      %v464 = vpack.c.bf16 %v430, %v368
      %v465 = vpack.c.bf16 %v275, %v335
      %v466 = vpack.c.bf16 %v200, %v199
      %v467 = vpack.c.bf16 %v431, %v371
      %v468 = vpack.c.bf16 %v278, %v336
      %v469 = vpack.c.bf16 %v202, %v201
      %v470 = vpack.c.bf16 %v432, %v374
      %v471 = vpack.c.bf16 %v281, %v337
      %v472 = vpack.c.bf16 %v204, %v203
      %v473 = vpack.c.bf16 %v433, %v377
      %v474 = vpack.c.bf16 %v284, %v338
      %v475 = vpack.c.bf16 %v206, %v205
      %v476 = vpack.c.bf16 %v434, %v380
      %v477 = vpack.c.bf16 %v287, %v339
      %v478 = vpack.c.bf16 %v208, %v207
      %v479 = vpack.c.bf16 %v435, %v383
      %v480 = vpack.c.bf16 %v290, %v340
      %v481 = vpack.c.bf16 %v210, %v209
      %v482 = vpack.c.bf16 %v436, %v386
      %v483 = vpack.c.bf16 %v293, %v341
      %v484 = vpack.c.bf16 %v212, %v211
      %v485 = vpack.c.bf16 %v437, %v389
      %v486 = vld [vmem:[%s1] sm:$0xf]
      %v487 = vld [vmem:[%s1 + $0x4] sm:$0xf]
      %v488 = vld [vmem:[%s1 + $0x8] sm:$0xf]
      %v489 = vld [vmem:[%s1 + $0xc] sm:$0xf]
      %v490 = vld [vmem:[%s1 + $0x10] sm:$0xf]
      %v491 = vld [vmem:[%s1 + $0x14] sm:$0xf]
      %v492 = vld [vmem:[%s1 + $0x18] sm:$0xf]
      %v493 = vld [vmem:[%s1 + $0x1c] sm:$0xf]
      %v494 = vld [vmem:[%s1 + $0x20] sm:$0xf]
      %v495 = vld [vmem:[%s1 + $0x24] sm:$0xf]
      %v496 = vld [vmem:[%s1 + $0x28] sm:$0xf]
      %v497 = vld [vmem:[%s1 + $0x2c] sm:$0xf]
      %v498 = vld [vmem:[%s1 + $0x30] sm:$0xf]
      %v499 = vld [vmem:[%s1 + $0x34] sm:$0xf]
      %v500 = vld [vmem:[%s1 + $0x38] sm:$0xf]
      %v501 = vld [vmem:[%s1 + $0x3c] sm:$0xf]
      %v502 = vld [vmem:[%s1 + $0x40] sm:$0xf]
      %v503 = vld [vmem:[%s1 + $0x44] sm:$0xf]
      %v504 = vld [vmem:[%s1 + $0x48] sm:$0xf]
      %v505 = vld [vmem:[%s1 + $0x4c] sm:$0xf]
      %v506 = vld [vmem:[%s1 + $0x50] sm:$0xf]
      %v507 = vld [vmem:[%s1 + $0x54] sm:$0xf]
      %v508 = vld [vmem:[%s1 + $0x58] sm:$0xf]
      %v509 = vld [vmem:[%s1 + $0x5c] sm:$0xf]
      %v510 = vld [vmem:[%s1 + $0x60] sm:$0xf]
      %v511 = vld [vmem:[%s1 + $0x64] sm:$0xf]
      %v512 = vld [vmem:[%s1 + $0x68] sm:$0xf]
      %v513 = vld [vmem:[%s1 + $0x6c] sm:$0xf]
      %v514 = vld [vmem:[%s1 + $0x70] sm:$0xf]
      %v515 = vld [vmem:[%s1 + $0x74] sm:$0xf]
      %v516 = vld [vmem:[%s1 + $0x78] sm:$0xf]
      %v517 = vld [vmem:[%s1 + $0x7c] sm:$0xf]
      %v518 = vld [vmem:[%s1 + $0x80] sm:$0xf]
      %v519 = vld [vmem:[%s1 + $0x84] sm:$0xf]
      %v520 = vld [vmem:[%s1 + $0x88] sm:$0xf]
      %v521 = vld [vmem:[%s1 + $0x8c] sm:$0xf]
      %v522 = vld [vmem:[%s1 + $0x90] sm:$0xf]
      %v523 = vld [vmem:[%s1 + $0x94] sm:$0xf]
      %v524 = vld [vmem:[%s1 + $0x98] sm:$0xf]
      %v525 = vld [vmem:[%s1 + $0x9c] sm:$0xf]
      %v526 = vld [vmem:[%s1 + $0xa0] sm:$0xf]
      %v527 = vld [vmem:[%s1 + $0xa4] sm:$0xf]
      %v528 = vld [vmem:[%s1 + $0xa8] sm:$0xf]
      %v529 = vld [vmem:[%s1 + $0xac] sm:$0xf]
      %v530 = vld [vmem:[%s1 + $0xb0] sm:$0xf]
      %v531 = vld [vmem:[%s1 + $0xb4] sm:$0xf]
      %v532 = vld [vmem:[%s1 + $0xb8] sm:$0xf]
      %v533 = vld [vmem:[%s1 + $0xbc] sm:$0xf]
      %v536 = vrot.slane %v213, 7
      %v537 = vrot.slane %v214, 7
      %v538 = vsel %vm246, %v536, %v537
      %v541 = vsel %vm246, 0.0, %v536
      %v542 = vrot.slane %v213, 1
      %v543 = vrot.slane %v214, 1
      %v544 = vsel %vm342, %v542, %v543
      %v547 = vsel %vm342, %v543, 0.0
      %v548 = vpack.c.bf16 %v538, %v541
      %v549 = vpack.c.bf16 %v214, %v213
      %v550 = vpack.c.bf16 %v547, %v544
      %s551 = scalar_lea.vmem %s1, 192
      %v552 = vld [vmem:[%s551] sm:$0xf]
      %v553 = vld [vmem:[%s551 + $0x4] sm:$0xf]
      %v554 = vld [vmem:[%s551 + $0x8] sm:$0xf]
      %v555 = vld [vmem:[%s551 + $0xc] sm:$0xf]
      %v556 = vld [vmem:[%s551 + $0x10] sm:$0xf]
      %v557 = vld [vmem:[%s551 + $0x14] sm:$0xf]
      %v558 = vld [vmem:[%s551 + $0x18] sm:$0xf]
      %v559 = vld [vmem:[%s551 + $0x1c] sm:$0xf]
      %v560 = vld [vmem:[%s551 + $0x20] sm:$0xf]
      %v561 = vld [vmem:[%s551 + $0x24] sm:$0xf]
      %v562 = vld [vmem:[%s551 + $0x28] sm:$0xf]
      %v563 = vld [vmem:[%s551 + $0x2c] sm:$0xf]
      %v564 = vld [vmem:[%s551 + $0x30] sm:$0xf]
      %v565 = vld [vmem:[%s551 + $0x34] sm:$0xf]
      %v566 = vld [vmem:[%s551 + $0x38] sm:$0xf]
      %v567 = vld [vmem:[%s551 + $0x3c] sm:$0xf]
      %v568 = vld [vmem:[%s551 + $0x40] sm:$0xf]
      %v569 = vld [vmem:[%s551 + $0x44] sm:$0xf]
      %v570 = vld [vmem:[%s551 + $0x48] sm:$0xf]
      %v571 = vld [vmem:[%s551 + $0x4c] sm:$0xf]
      %v572 = vld [vmem:[%s551 + $0x50] sm:$0xf]
      %v573 = vld [vmem:[%s551 + $0x54] sm:$0xf]
      %v574 = vld [vmem:[%s551 + $0x58] sm:$0xf]
      %v575 = vld [vmem:[%s551 + $0x5c] sm:$0xf]
      %v576 = vld [vmem:[%s551 + $0x60] sm:$0xf]
      %v577 = vld [vmem:[%s551 + $0x64] sm:$0xf]
      %v578 = vld [vmem:[%s551 + $0x68] sm:$0xf]
      %v579 = vld [vmem:[%s551 + $0x6c] sm:$0xf]
      %v580 = vld [vmem:[%s551 + $0x70] sm:$0xf]
      %v581 = vld [vmem:[%s551 + $0x74] sm:$0xf]
      %v582 = vld [vmem:[%s551 + $0x78] sm:$0xf]
      %v583 = vld [vmem:[%s551 + $0x7c] sm:$0xf]
      %v584 = vld [vmem:[%s551 + $0x80] sm:$0xf]
      %v585 = vld [vmem:[%s551 + $0x84] sm:$0xf]
      %v586 = vld [vmem:[%s551 + $0x88] sm:$0xf]
      %v587 = vld [vmem:[%s551 + $0x8c] sm:$0xf]
      %v588 = vld [vmem:[%s551 + $0x90] sm:$0xf]
      %v589 = vld [vmem:[%s551 + $0x94] sm:$0xf]
      %v590 = vld [vmem:[%s551 + $0x98] sm:$0xf]
      %v591 = vld [vmem:[%s551 + $0x9c] sm:$0xf]
      %v592 = vld [vmem:[%s551 + $0xa0] sm:$0xf]
      %v593 = vld [vmem:[%s551 + $0xa4] sm:$0xf]
      %v594 = vld [vmem:[%s551 + $0xa8] sm:$0xf]
      %v595 = vld [vmem:[%s551 + $0xac] sm:$0xf]
      %v596 = vld [vmem:[%s551 + $0xb0] sm:$0xf]
      %v597 = vld [vmem:[%s551 + $0xb4] sm:$0xf]
      %v598 = vld [vmem:[%s551 + $0xb8] sm:$0xf]
      %v599 = vld [vmem:[%s551 + $0xbc] sm:$0xf]
      %v648 = vunpack.c.l.b16 %v552
      %v649 = vunpack.c.l.b16 %v553
      %v650 = vunpack.c.l.b16 %v554
      %v651 = vunpack.c.l.b16 %v555
      %v652 = vunpack.c.l.b16 %v556
      %v653 = vunpack.c.l.b16 %v557
      %v654 = vunpack.c.l.b16 %v558
      %v655 = vunpack.c.l.b16 %v559
      %v656 = vunpack.c.l.b16 %v560
      %v657 = vunpack.c.l.b16 %v561
      %v658 = vunpack.c.l.b16 %v562
      %v659 = vunpack.c.l.b16 %v563
      %v660 = vunpack.c.l.b16 %v564
      %v661 = vunpack.c.l.b16 %v565
      %v662 = vunpack.c.l.b16 %v566
      %v663 = vunpack.c.l.b16 %v567
      %v664 = vunpack.c.l.b16 %v568
      %v665 = vunpack.c.l.b16 %v569
      %v666 = vunpack.c.l.b16 %v570
      %v667 = vunpack.c.l.b16 %v571
      %v668 = vunpack.c.l.b16 %v572
      %v669 = vunpack.c.l.b16 %v573
      %v670 = vunpack.c.l.b16 %v574
      %v671 = vunpack.c.l.b16 %v575
      %v672 = vunpack.c.l.b16 %v576
      %v673 = vunpack.c.l.b16 %v577
      %v674 = vunpack.c.l.b16 %v578
      %v675 = vunpack.c.l.b16 %v579
      %v676 = vunpack.c.l.b16 %v580
      %v677 = vunpack.c.l.b16 %v581
      %v678 = vunpack.c.l.b16 %v582
      %v679 = vunpack.c.l.b16 %v583
      %v680 = vunpack.c.l.b16 %v584
      %v681 = vunpack.c.l.b16 %v585
      %v682 = vunpack.c.l.b16 %v586
      %v683 = vunpack.c.l.b16 %v587
      %v684 = vunpack.c.l.b16 %v588
      %v685 = vunpack.c.l.b16 %v589
      %v686 = vunpack.c.l.b16 %v590
      %v687 = vunpack.c.l.b16 %v591
      %v688 = vunpack.c.l.b16 %v592
      %v689 = vunpack.c.l.b16 %v593
      %v690 = vunpack.c.l.b16 %v594
      %v691 = vunpack.c.l.b16 %v595
      %v692 = vunpack.c.l.b16 %v596
      %v693 = vunpack.c.l.b16 %v597
      %v694 = vunpack.c.l.b16 %v598
      %v695 = vunpack.c.l.b16 %v599
      %v696 = vpack.c.b16 %v649, %v648
      %v697 = vpack.c.b16 %v651, %v650
      %v698 = vpack.c.b16 %v653, %v652
      %v699 = vpack.c.b16 %v655, %v654
      %v700 = vpack.c.b16 %v657, %v656
      %v701 = vpack.c.b16 %v659, %v658
      %v702 = vpack.c.b16 %v661, %v660
      %v703 = vpack.c.b16 %v663, %v662
      %v704 = vpack.c.b16 %v665, %v664
      %v705 = vpack.c.b16 %v667, %v666
      %v706 = vpack.c.b16 %v669, %v668
      %v707 = vpack.c.b16 %v671, %v670
      %v708 = vpack.c.b16 %v673, %v672
      %v709 = vpack.c.b16 %v675, %v674
      %v710 = vpack.c.b16 %v677, %v676
      %v711 = vpack.c.b16 %v679, %v678
      %v712 = vpack.c.b16 %v681, %v680
      %v713 = vpack.c.b16 %v683, %v682
      %v714 = vpack.c.b16 %v685, %v684
      %v715 = vpack.c.b16 %v687, %v686
      %v716 = vpack.c.b16 %v689, %v688
      %v717 = vpack.c.b16 %v691, %v690
      %v718 = vpack.c.b16 %v693, %v692
      %v719 = vpack.c.b16 %v695, %v694
      %744 = vmatprep.subr.bf16.mxu0 0
      %745 = vmatpush1.bf16.msra.mxu0 %v696
      %746 = vmatprep.subr.bf16.mxu0 0
      %747 = vmatpush1.bf16.msra.mxu0 %v697
      %748 = vmatprep.subr.bf16.mxu0 0
      %749 = vmatpush1.bf16.msra.mxu0 %v698
      %750 = vmatprep.subr.bf16.mxu0 0
      %751 = vmatpush1.bf16.msra.mxu0 %v699
      %752 = vmatprep.subr.bf16.mxu0 0
      %753 = vmatpush1.bf16.msra.mxu0 %v700
      %754 = vmatprep.subr.bf16.mxu0 0
      %755 = vmatpush1.bf16.msra.mxu0 %v701
      %756 = vmatprep.subr.bf16.mxu0 0
      %757 = vmatpush1.bf16.msra.mxu0 %v702
      %758 = vmatprep.subr.bf16.mxu0 0
      %759 = vmatpush1.bf16.msra.mxu0 %v703
      %760 = vmatprep.subr.bf16.mxu0 0
      %761 = vmatpush1.bf16.msra.mxu0 %v704
      %762 = vmatprep.subr.bf16.mxu0 0
      %763 = vmatpush1.bf16.msra.mxu0 %v705
      %764 = vmatprep.subr.bf16.mxu0 0
      %765 = vmatpush1.bf16.msra.mxu0 %v706
      %766 = vmatprep.subr.bf16.mxu0 0
      %767 = vmatpush1.bf16.msra.mxu0 %v707
      %768 = vmatprep.subr.bf16.mxu0 0
      %769 = vmatpush1.bf16.msra.mxu0 %v708
      %770 = vmatprep.subr.bf16.mxu0 0
      %771 = vmatpush1.bf16.msra.mxu0 %v709
      %772 = vmatprep.subr.bf16.mxu0 0
      %773 = vmatpush1.bf16.msra.mxu0 %v710
      %774 = vmatprep.subr.bf16.mxu0 0
      %775 = vmatpush1.bf16.msra.mxu0 %v711
      %776 = vmatprep.mubr.bf16.mxu0 %v442
      %777 = vmatmul.mubr.bf16.gmra.mrb[0].mxu0 %v441
      %v778 = vpop.f32.mrb[0].mxu0
      %v779 = vadd.f32 0.0, %v778
      %v780 = vpop.f32.mrb[0].mxu0
      %v781 = vpop.f32.mrb[0].mxu0
      %v782 = vadd.f32 0.0, %v781
      %v783 = vpop.f32.mrb[0].mxu0
      %784 = vmatprep.mubr.bf16.mxu0 %v445
      %785 = vmatmul.mubr.bf16.gmra.mrb[0].mxu0 %v444
      %v786 = vpop.f32.mrb[0].mxu0
      %v787 = vadd.f32 0.0, %v786
      %v788 = vpop.f32.mrb[0].mxu0
      %v789 = vpop.f32.mrb[0].mxu0
      %v790 = vadd.f32 0.0, %v789
      %v791 = vpop.f32.mrb[0].mxu0
      %792 = vmatprep.mubr.bf16.mxu0 %v448
      %793 = vmatmul.mubr.bf16.gmra.mrb[0].mxu0 %v447
      %v794 = vpop.f32.mrb[0].mxu0
      %v795 = vadd.f32 0.0, %v794
      %v796 = vpop.f32.mrb[0].mxu0
      %v797 = vpop.f32.mrb[0].mxu0
      %v798 = vadd.f32 0.0, %v797
      %v799 = vpop.f32.mrb[0].mxu0
      %800 = vmatprep.mubr.bf16.mxu0 %v451
      %801 = vmatmul.mubr.bf16.gmra.mrb[0].mxu0 %v450
      %v802 = vpop.f32.mrb[0].mxu0
      %v803 = vadd.f32 0.0, %v802
      %v804 = vpop.f32.mrb[0].mxu0
      %v805 = vpop.f32.mrb[0].mxu0
      %v806 = vadd.f32 0.0, %v805
      %v807 = vpop.f32.mrb[0].mxu0
      %808 = vmatprep.mubr.bf16.mxu0 %v454
      %809 = vmatmul.mubr.bf16.gmra.mrb[0].mxu0 %v453
      %v810 = vpop.f32.mrb[0].mxu0
      %v811 = vadd.f32 0.0, %v810
      %v812 = vpop.f32.mrb[0].mxu0
      %v813 = vpop.f32.mrb[0].mxu0
      %v814 = vadd.f32 0.0, %v813
      %v815 = vpop.f32.mrb[0].mxu0
      %816 = vmatprep.mubr.bf16.mxu0 %v457
      %817 = vmatmul.mubr.bf16.gmra.mrb[0].mxu0 %v456
      %v818 = vpop.f32.mrb[0].mxu0
      %v819 = vadd.f32 0.0, %v818
      %v820 = vpop.f32.mrb[0].mxu0
      %v821 = vpop.f32.mrb[0].mxu0
      %v822 = vadd.f32 0.0, %v821
      %v823 = vpop.f32.mrb[0].mxu0
      %824 = vmatprep.mubr.bf16.mxu0 %v460
      %825 = vmatmul.mubr.bf16.gmra.mrb[0].mxu0 %v459
      %v826 = vpop.f32.mrb[0].mxu0
      %v827 = vadd.f32 0.0, %v826
      %v828 = vpop.f32.mrb[0].mxu0
      %v829 = vpop.f32.mrb[0].mxu0
      %v830 = vadd.f32 0.0, %v829
      %v831 = vpop.f32.mrb[0].mxu0
      %832 = vmatprep.mubr.bf16.mxu0 %v463
      %833 = vmatmul.mubr.bf16.gmra.mrb[0].mxu0 %v462
      %v834 = vpop.f32.mrb[0].mxu0
      %v835 = vadd.f32 0.0, %v834
      %v836 = vpop.f32.mrb[0].mxu0
      %v837 = vpop.f32.mrb[0].mxu0
      %v838 = vadd.f32 0.0, %v837
      %v839 = vpop.f32.mrb[0].mxu0
      %840 = vmatprep.mubr.bf16.mxu0 %v466
      %841 = vmatmul.mubr.bf16.gmra.mrb[0].mxu0 %v465
      %v842 = vpop.f32.mrb[0].mxu0
      %v843 = vadd.f32 0.0, %v842
      %v844 = vpop.f32.mrb[0].mxu0
      %v845 = vpop.f32.mrb[0].mxu0
      %v846 = vadd.f32 0.0, %v845
      %v847 = vpop.f32.mrb[0].mxu0
      %848 = vmatprep.mubr.bf16.mxu0 %v469
      %849 = vmatmul.mubr.bf16.gmra.mrb[0].mxu0 %v468
      %v850 = vpop.f32.mrb[0].mxu0
      %v851 = vadd.f32 0.0, %v850
      %v852 = vpop.f32.mrb[0].mxu0
      %v853 = vpop.f32.mrb[0].mxu0
      %v854 = vadd.f32 0.0, %v853
      %v855 = vpop.f32.mrb[0].mxu0
      %856 = vmatprep.mubr.bf16.mxu0 %v472
      %857 = vmatmul.mubr.bf16.gmra.mrb[0].mxu0 %v471
      %v858 = vpop.f32.mrb[0].mxu0
      %v859 = vadd.f32 0.0, %v858
      %v860 = vpop.f32.mrb[0].mxu0
      %v861 = vpop.f32.mrb[0].mxu0
      %v862 = vadd.f32 0.0, %v861
      %v863 = vpop.f32.mrb[0].mxu0
      %864 = vmatprep.mubr.bf16.mxu0 %v475
      %865 = vmatmul.mubr.bf16.gmra.mrb[0].mxu0 %v474
      %v866 = vpop.f32.mrb[0].mxu0
      %v867 = vadd.f32 0.0, %v866
      %v868 = vpop.f32.mrb[0].mxu0
      %v869 = vpop.f32.mrb[0].mxu0
      %v870 = vadd.f32 0.0, %v869
      %v871 = vpop.f32.mrb[0].mxu0
      %872 = vmatprep.mubr.bf16.mxu0 %v478
      %873 = vmatmul.mubr.bf16.gmra.mrb[0].mxu0 %v477
      %v874 = vpop.f32.mrb[0].mxu0
      %v875 = vadd.f32 0.0, %v874
      %v876 = vpop.f32.mrb[0].mxu0
      %v877 = vpop.f32.mrb[0].mxu0
      %v878 = vadd.f32 0.0, %v877
      %v879 = vpop.f32.mrb[0].mxu0
      %880 = vmatprep.mubr.bf16.mxu0 %v481
      %881 = vmatmul.mubr.bf16.gmra.mrb[0].mxu0 %v480
      %v882 = vpop.f32.mrb[0].mxu0
      %v883 = vadd.f32 0.0, %v882
      %v884 = vpop.f32.mrb[0].mxu0
      %v885 = vpop.f32.mrb[0].mxu0
      %v886 = vadd.f32 0.0, %v885
      %v887 = vpop.f32.mrb[0].mxu0
      %888 = vmatprep.mubr.bf16.mxu0 %v484
      %889 = vmatmul.mubr.bf16.gmra.mrb[0].mxu0 %v483
      %v890 = vpop.f32.mrb[0].mxu0
      %v891 = vadd.f32 0.0, %v890
      %v892 = vpop.f32.mrb[0].mxu0
      %v893 = vpop.f32.mrb[0].mxu0
      %v894 = vadd.f32 0.0, %v893
      %v895 = vpop.f32.mrb[0].mxu0
      %896 = vmatprep.mubr.bf16.mxu0 %v549
      %897 = vmatmul.mubr.bf16.gmra.mrb[0].mxu0 %v548
      %v898 = vpop.f32.mrb[0].mxu0
      %v899 = vadd.f32 0.0, %v898
      %v900 = vpop.f32.mrb[0].mxu0
      %v901 = vpop.f32.mrb[0].mxu0
      %v902 = vadd.f32 0.0, %v901
      %v903 = vpop.f32.mrb[0].mxu0
      %904 = vdwg.mxu0
      %905 = vmatprep.subr.bf16.mxu0 0
      %906 = vmatpush1.bf16.msra.mxu0 %v712
      %907 = vmatprep.subr.bf16.mxu0 0
      %908 = vmatpush1.bf16.msra.mxu0 %v713
      %909 = vmatprep.subr.bf16.mxu0 0
      %910 = vmatpush1.bf16.msra.mxu0 %v714
      %911 = vmatprep.subr.bf16.mxu0 0
      %912 = vmatpush1.bf16.msra.mxu0 %v715
      %913 = vmatprep.subr.bf16.mxu0 0
      %914 = vmatpush1.bf16.msra.mxu0 %v716
      %915 = vmatprep.subr.bf16.mxu0 0
      %916 = vmatpush1.bf16.msra.mxu0 %v717
      %917 = vmatprep.subr.bf16.mxu0 0
      %918 = vmatpush1.bf16.msra.mxu0 %v718
      %919 = vmatprep.subr.bf16.mxu0 0
      %920 = vmatpush1.bf16.msra.mxu0 %v719
      %921 = vmatprep.subr.bf16.mxu0 0
      %922 = vmatpush1.bf16.msra.mxu0 0
      %923 = vmatprep.subr.bf16.mxu0 0
      %924 = vmatpush1.bf16.msra.mxu0 0
      %925 = vmatprep.subr.bf16.mxu0 0
      %926 = vmatpush1.bf16.msra.mxu0 0
      %927 = vmatprep.subr.bf16.mxu0 0
      %928 = vmatpush1.bf16.msra.mxu0 0
      %929 = vmatprep.subr.bf16.mxu0 0
      %930 = vmatpush1.bf16.msra.mxu0 0
      %931 = vmatprep.subr.bf16.mxu0 0
      %932 = vmatpush1.bf16.msra.mxu0 0
      %933 = vmatprep.subr.bf16.mxu0 0
      %934 = vmatpush1.bf16.msra.mxu0 0
      %935 = vmatprep.subr.bf16.mxu0 0
      %936 = vmatpush1.bf16.msra.mxu0 0
      %937 = vmatprep.mubr.bf16.mxu0 0
      %938 = vmatmul.mubr.bf16.gmra.mrb[0].mxu0 %v443
      %v939 = vpop.f32.mrb[0].mxu0
      %v940 = vadd.f32 %v779, %v939
      %v941 = vpop.f32.mrb[0].mxu0
      %v942 = vpop.f32.mrb[0].mxu0
      %v943 = vadd.f32 %v782, %v942
      %v944 = vpop.f32.mrb[0].mxu0
      %945 = vmatprep.mubr.bf16.mxu0 0
      %946 = vmatmul.mubr.bf16.gmra.mrb[0].mxu0 %v446
      %v947 = vpop.f32.mrb[0].mxu0
      %v948 = vadd.f32 %v787, %v947
      %v949 = vpop.f32.mrb[0].mxu0
      %v950 = vpop.f32.mrb[0].mxu0
      %v951 = vadd.f32 %v790, %v950
      %v952 = vpop.f32.mrb[0].mxu0
      %953 = vmatprep.mubr.bf16.mxu0 0
      %954 = vmatmul.mubr.bf16.gmra.mrb[0].mxu0 %v449
      %v955 = vpop.f32.mrb[0].mxu0
      %v956 = vadd.f32 %v795, %v955
      %v957 = vpop.f32.mrb[0].mxu0
      %v958 = vpop.f32.mrb[0].mxu0
      %v959 = vadd.f32 %v798, %v958
      %v960 = vpop.f32.mrb[0].mxu0
      %961 = vmatprep.mubr.bf16.mxu0 0
      %962 = vmatmul.mubr.bf16.gmra.mrb[0].mxu0 %v452
      %v963 = vpop.f32.mrb[0].mxu0
      %v964 = vadd.f32 %v803, %v963
      %v965 = vpop.f32.mrb[0].mxu0
      %v966 = vpop.f32.mrb[0].mxu0
      %v967 = vadd.f32 %v806, %v966
      %v968 = vpop.f32.mrb[0].mxu0
      %969 = vmatprep.mubr.bf16.mxu0 0
      %970 = vmatmul.mubr.bf16.gmra.mrb[0].mxu0 %v455
      %v971 = vpop.f32.mrb[0].mxu0
      %v972 = vadd.f32 %v811, %v971
      %v973 = vpop.f32.mrb[0].mxu0
      %v974 = vpop.f32.mrb[0].mxu0
      %v975 = vadd.f32 %v814, %v974
      %v976 = vpop.f32.mrb[0].mxu0
      %977 = vmatprep.mubr.bf16.mxu0 0
      %978 = vmatmul.mubr.bf16.gmra.mrb[0].mxu0 %v458
      %v979 = vpop.f32.mrb[0].mxu0
      %v980 = vadd.f32 %v819, %v979
      %v981 = vpop.f32.mrb[0].mxu0
      %v982 = vpop.f32.mrb[0].mxu0
      %v983 = vadd.f32 %v822, %v982
      %v984 = vpop.f32.mrb[0].mxu0
      %985 = vmatprep.mubr.bf16.mxu0 0
      %986 = vmatmul.mubr.bf16.gmra.mrb[0].mxu0 %v461
      %v987 = vpop.f32.mrb[0].mxu0
      %v988 = vadd.f32 %v827, %v987
      %v989 = vpop.f32.mrb[0].mxu0
      %v990 = vpop.f32.mrb[0].mxu0
      %v991 = vadd.f32 %v830, %v990
      %v992 = vpop.f32.mrb[0].mxu0
      %993 = vmatprep.mubr.bf16.mxu0 0
      %994 = vmatmul.mubr.bf16.gmra.mrb[0].mxu0 %v464
      %v995 = vpop.f32.mrb[0].mxu0
      %v996 = vadd.f32 %v835, %v995
      %v997 = vpop.f32.mrb[0].mxu0
      %v998 = vpop.f32.mrb[0].mxu0
      %v999 = vadd.f32 %v838, %v998
      %v1000 = vpop.f32.mrb[0].mxu0
      %1001 = vmatprep.mubr.bf16.mxu0 0
      %1002 = vmatmul.mubr.bf16.gmra.mrb[0].mxu0 %v467
      %v1003 = vpop.f32.mrb[0].mxu0
      %v1004 = vadd.f32 %v843, %v1003
      %v1005 = vpop.f32.mrb[0].mxu0
      %v1006 = vpop.f32.mrb[0].mxu0
      %v1007 = vadd.f32 %v846, %v1006
      %v1008 = vpop.f32.mrb[0].mxu0
      %1009 = vmatprep.mubr.bf16.mxu0 0
      %1010 = vmatmul.mubr.bf16.gmra.mrb[0].mxu0 %v470
      %v1011 = vpop.f32.mrb[0].mxu0
      %v1012 = vadd.f32 %v851, %v1011
      %v1013 = vpop.f32.mrb[0].mxu0
      %v1014 = vpop.f32.mrb[0].mxu0
      %v1015 = vadd.f32 %v854, %v1014
      %v1016 = vpop.f32.mrb[0].mxu0
      %1017 = vmatprep.mubr.bf16.mxu0 0
      %1018 = vmatmul.mubr.bf16.gmra.mrb[0].mxu0 %v473
      %v1019 = vpop.f32.mrb[0].mxu0
      %v1020 = vadd.f32 %v859, %v1019
      %v1021 = vpop.f32.mrb[0].mxu0
      %v1022 = vpop.f32.mrb[0].mxu0
      %v1023 = vadd.f32 %v862, %v1022
      %v1024 = vpop.f32.mrb[0].mxu0
      %1025 = vmatprep.mubr.bf16.mxu0 0
      %1026 = vmatmul.mubr.bf16.gmra.mrb[0].mxu0 %v476
      %v1027 = vpop.f32.mrb[0].mxu0
      %v1028 = vadd.f32 %v867, %v1027
      %v1029 = vpop.f32.mrb[0].mxu0
      %v1030 = vpop.f32.mrb[0].mxu0
      %v1031 = vadd.f32 %v870, %v1030
      %v1032 = vpop.f32.mrb[0].mxu0
      %1033 = vmatprep.mubr.bf16.mxu0 0
      %1034 = vmatmul.mubr.bf16.gmra.mrb[0].mxu0 %v479
      %v1035 = vpop.f32.mrb[0].mxu0
      %v1036 = vadd.f32 %v875, %v1035
      %v1037 = vpop.f32.mrb[0].mxu0
      %v1038 = vpop.f32.mrb[0].mxu0
      %v1039 = vadd.f32 %v878, %v1038
      %v1040 = vpop.f32.mrb[0].mxu0
      %1041 = vmatprep.mubr.bf16.mxu0 0
      %1042 = vmatmul.mubr.bf16.gmra.mrb[0].mxu0 %v482
      %v1043 = vpop.f32.mrb[0].mxu0
      %v1044 = vadd.f32 %v883, %v1043
      %v1045 = vpop.f32.mrb[0].mxu0
      %v1046 = vpop.f32.mrb[0].mxu0
      %v1047 = vadd.f32 %v886, %v1046
      %v1048 = vpop.f32.mrb[0].mxu0
      %1049 = vmatprep.mubr.bf16.mxu0 0
      %1050 = vmatmul.mubr.bf16.gmra.mrb[0].mxu0 %v485
      %v1051 = vpop.f32.mrb[0].mxu0
      %v1052 = vadd.f32 %v891, %v1051
      %v1053 = vpop.f32.mrb[0].mxu0
      %v1054 = vpop.f32.mrb[0].mxu0
      %v1055 = vadd.f32 %v894, %v1054
      %v1056 = vpop.f32.mrb[0].mxu0
      %1057 = vmatprep.mubr.bf16.mxu0 0
      %1058 = vmatmul.mubr.bf16.gmra.mrb[0].mxu0 %v550
      %v1059 = vpop.f32.mrb[0].mxu0
      %v1060 = vadd.f32 %v899, %v1059
      %v1061 = vpop.f32.mrb[0].mxu0
      %v1062 = vpop.f32.mrb[0].mxu0
      %v1063 = vadd.f32 %v902, %v1062
      %v1064 = vpop.f32.mrb[0].mxu0
      %1065 = vdwg.mxu0
      %v1114 = vunpack.c.l.b16 %v486
      %v1115 = vunpack.c.l.b16 %v487
      %v1116 = vunpack.c.l.b16 %v488
      %v1117 = vunpack.c.l.b16 %v489
      %v1118 = vunpack.c.l.b16 %v490
      %v1119 = vunpack.c.l.b16 %v491
      %v1120 = vunpack.c.l.b16 %v492
      %v1121 = vunpack.c.l.b16 %v493
      %v1122 = vunpack.c.l.b16 %v494
      %v1123 = vunpack.c.l.b16 %v495
      %v1124 = vunpack.c.l.b16 %v496
      %v1125 = vunpack.c.l.b16 %v497
      %v1126 = vunpack.c.l.b16 %v498
      %v1127 = vunpack.c.l.b16 %v499
      %v1128 = vunpack.c.l.b16 %v500
      %v1129 = vunpack.c.l.b16 %v501
      %v1130 = vunpack.c.l.b16 %v502
      %v1131 = vunpack.c.l.b16 %v503
      %v1132 = vunpack.c.l.b16 %v504
      %v1133 = vunpack.c.l.b16 %v505
      %v1134 = vunpack.c.l.b16 %v506
      %v1135 = vunpack.c.l.b16 %v507
      %v1136 = vunpack.c.l.b16 %v508
      %v1137 = vunpack.c.l.b16 %v509
      %v1138 = vunpack.c.l.b16 %v510
      %v1139 = vunpack.c.l.b16 %v511
      %v1140 = vunpack.c.l.b16 %v512
      %v1141 = vunpack.c.l.b16 %v513
      %v1142 = vunpack.c.l.b16 %v514
      %v1143 = vunpack.c.l.b16 %v515
      %v1144 = vunpack.c.l.b16 %v516
      %v1145 = vunpack.c.l.b16 %v517
      %v1146 = vunpack.c.l.b16 %v518
      %v1147 = vunpack.c.l.b16 %v519
      %v1148 = vunpack.c.l.b16 %v520
      %v1149 = vunpack.c.l.b16 %v521
      %v1150 = vunpack.c.l.b16 %v522
      %v1151 = vunpack.c.l.b16 %v523
      %v1152 = vunpack.c.l.b16 %v524
      %v1153 = vunpack.c.l.b16 %v525
      %v1154 = vunpack.c.l.b16 %v526
      %v1155 = vunpack.c.l.b16 %v527
      %v1156 = vunpack.c.l.b16 %v528
      %v1157 = vunpack.c.l.b16 %v529
      %v1158 = vunpack.c.l.b16 %v530
      %v1159 = vunpack.c.l.b16 %v531
      %v1160 = vunpack.c.l.b16 %v532
      %v1161 = vunpack.c.l.b16 %v533
      %v1162 = vpack.c.b16 %v1115, %v1114
      %v1163 = vpack.c.b16 %v1117, %v1116
      %v1164 = vpack.c.b16 %v1119, %v1118
      %v1165 = vpack.c.b16 %v1121, %v1120
      %v1166 = vpack.c.b16 %v1123, %v1122
      %v1167 = vpack.c.b16 %v1125, %v1124
      %v1168 = vpack.c.b16 %v1127, %v1126
      %v1169 = vpack.c.b16 %v1129, %v1128
      %v1170 = vpack.c.b16 %v1131, %v1130
      %v1171 = vpack.c.b16 %v1133, %v1132
      %v1172 = vpack.c.b16 %v1135, %v1134
      %v1173 = vpack.c.b16 %v1137, %v1136
      %v1174 = vpack.c.b16 %v1139, %v1138
      %v1175 = vpack.c.b16 %v1141, %v1140
      %v1176 = vpack.c.b16 %v1143, %v1142
      %v1177 = vpack.c.b16 %v1145, %v1144
      %v1178 = vpack.c.b16 %v1147, %v1146
      %v1179 = vpack.c.b16 %v1149, %v1148
      %v1180 = vpack.c.b16 %v1151, %v1150
      %v1181 = vpack.c.b16 %v1153, %v1152
      %v1182 = vpack.c.b16 %v1155, %v1154
      %v1183 = vpack.c.b16 %v1157, %v1156
      %v1184 = vpack.c.b16 %v1159, %v1158
      %v1185 = vpack.c.b16 %v1161, %v1160
      %1210 = vmatprep.subr.bf16.mxu0 0
      %1211 = vmatpush1.bf16.msra.mxu0 %v1162
      %1212 = vmatprep.subr.bf16.mxu0 0
      %1213 = vmatpush1.bf16.msra.mxu0 %v1163
      %1214 = vmatprep.subr.bf16.mxu0 0
      %1215 = vmatpush1.bf16.msra.mxu0 %v1164
      %1216 = vmatprep.subr.bf16.mxu0 0
      %1217 = vmatpush1.bf16.msra.mxu0 %v1165
      %1218 = vmatprep.subr.bf16.mxu0 0
      %1219 = vmatpush1.bf16.msra.mxu0 %v1166
      %1220 = vmatprep.subr.bf16.mxu0 0
      %1221 = vmatpush1.bf16.msra.mxu0 %v1167
      %1222 = vmatprep.subr.bf16.mxu0 0
      %1223 = vmatpush1.bf16.msra.mxu0 %v1168
      %1224 = vmatprep.subr.bf16.mxu0 0
      %1225 = vmatpush1.bf16.msra.mxu0 %v1169
      %1226 = vmatprep.subr.bf16.mxu0 0
      %1227 = vmatpush1.bf16.msra.mxu0 %v1170
      %1228 = vmatprep.subr.bf16.mxu0 0
      %1229 = vmatpush1.bf16.msra.mxu0 %v1171
      %1230 = vmatprep.subr.bf16.mxu0 0
      %1231 = vmatpush1.bf16.msra.mxu0 %v1172
      %1232 = vmatprep.subr.bf16.mxu0 0
      %1233 = vmatpush1.bf16.msra.mxu0 %v1173
      %1234 = vmatprep.subr.bf16.mxu0 0
      %1235 = vmatpush1.bf16.msra.mxu0 %v1174
      %1236 = vmatprep.subr.bf16.mxu0 0
      %1237 = vmatpush1.bf16.msra.mxu0 %v1175
      %1238 = vmatprep.subr.bf16.mxu0 0
      %1239 = vmatpush1.bf16.msra.mxu0 %v1176
      %1240 = vmatprep.subr.bf16.mxu0 0
      %1241 = vmatpush1.bf16.msra.mxu0 %v1177
      %1242 = vmatprep.mubr.bf16.mxu0 %v439
      %1243 = vmatmul.mubr.bf16.gmra.mrb[0].mxu0 %v438
      %v1244 = vpop.f32.mrb[0].mxu0
      %v1245 = vadd.f32 %v940, %v1244
      %v1246 = vpop.f32.mrb[0].mxu0
      %v1247 = vpop.f32.mrb[0].mxu0
      %v1248 = vadd.f32 %v943, %v1247
      %v1249 = vpop.f32.mrb[0].mxu0
      %1250 = vmatprep.mubr.bf16.mxu0 %v442
      %1251 = vmatmul.mubr.bf16.gmra.mrb[0].mxu0 %v441
      %v1252 = vpop.f32.mrb[0].mxu0
      %v1253 = vadd.f32 %v948, %v1252
      %v1254 = vpop.f32.mrb[0].mxu0
      %v1255 = vpop.f32.mrb[0].mxu0
      %v1256 = vadd.f32 %v951, %v1255
      %v1257 = vpop.f32.mrb[0].mxu0
      %1258 = vmatprep.mubr.bf16.mxu0 %v445
      %1259 = vmatmul.mubr.bf16.gmra.mrb[0].mxu0 %v444
      %v1260 = vpop.f32.mrb[0].mxu0
      %v1261 = vadd.f32 %v956, %v1260
      %v1262 = vpop.f32.mrb[0].mxu0
      %v1263 = vpop.f32.mrb[0].mxu0
      %v1264 = vadd.f32 %v959, %v1263
      %v1265 = vpop.f32.mrb[0].mxu0
      %1266 = vmatprep.mubr.bf16.mxu0 %v448
      %1267 = vmatmul.mubr.bf16.gmra.mrb[0].mxu0 %v447
      %v1268 = vpop.f32.mrb[0].mxu0
      %v1269 = vadd.f32 %v964, %v1268
      %v1270 = vpop.f32.mrb[0].mxu0
      %v1271 = vpop.f32.mrb[0].mxu0
      %v1272 = vadd.f32 %v967, %v1271
      %v1273 = vpop.f32.mrb[0].mxu0
      %1274 = vmatprep.mubr.bf16.mxu0 %v451
      %1275 = vmatmul.mubr.bf16.gmra.mrb[0].mxu0 %v450
      %v1276 = vpop.f32.mrb[0].mxu0
      %v1277 = vadd.f32 %v972, %v1276
      %v1278 = vpop.f32.mrb[0].mxu0
      %v1279 = vpop.f32.mrb[0].mxu0
      %v1280 = vadd.f32 %v975, %v1279
      %v1281 = vpop.f32.mrb[0].mxu0
      %1282 = vmatprep.mubr.bf16.mxu0 %v454
      %1283 = vmatmul.mubr.bf16.gmra.mrb[0].mxu0 %v453
      %v1284 = vpop.f32.mrb[0].mxu0
      %v1285 = vadd.f32 %v980, %v1284
      %v1286 = vpop.f32.mrb[0].mxu0
      %v1287 = vpop.f32.mrb[0].mxu0
      %v1288 = vadd.f32 %v983, %v1287
      %v1289 = vpop.f32.mrb[0].mxu0
      %1290 = vmatprep.mubr.bf16.mxu0 %v457
      %1291 = vmatmul.mubr.bf16.gmra.mrb[0].mxu0 %v456
      %v1292 = vpop.f32.mrb[0].mxu0
      %v1293 = vadd.f32 %v988, %v1292
      %v1294 = vpop.f32.mrb[0].mxu0
      %v1295 = vpop.f32.mrb[0].mxu0
      %v1296 = vadd.f32 %v991, %v1295
      %v1297 = vpop.f32.mrb[0].mxu0
      %1298 = vmatprep.mubr.bf16.mxu0 %v460
      %1299 = vmatmul.mubr.bf16.gmra.mrb[0].mxu0 %v459
      %v1300 = vpop.f32.mrb[0].mxu0
      %v1301 = vadd.f32 %v996, %v1300
      %v1302 = vpop.f32.mrb[0].mxu0
      %v1303 = vpop.f32.mrb[0].mxu0
      %v1304 = vadd.f32 %v999, %v1303
      %v1305 = vpop.f32.mrb[0].mxu0
      %1306 = vmatprep.mubr.bf16.mxu0 %v463
      %1307 = vmatmul.mubr.bf16.gmra.mrb[0].mxu0 %v462
      %v1308 = vpop.f32.mrb[0].mxu0
      %v1309 = vadd.f32 %v1004, %v1308
      %v1310 = vpop.f32.mrb[0].mxu0
      %v1311 = vpop.f32.mrb[0].mxu0
      %v1312 = vadd.f32 %v1007, %v1311
      %v1313 = vpop.f32.mrb[0].mxu0
      %1314 = vmatprep.mubr.bf16.mxu0 %v466
      %1315 = vmatmul.mubr.bf16.gmra.mrb[0].mxu0 %v465
      %v1316 = vpop.f32.mrb[0].mxu0
      %v1317 = vadd.f32 %v1012, %v1316
      %v1318 = vpop.f32.mrb[0].mxu0
      %v1319 = vpop.f32.mrb[0].mxu0
      %v1320 = vadd.f32 %v1015, %v1319
      %v1321 = vpop.f32.mrb[0].mxu0
      %1322 = vmatprep.mubr.bf16.mxu0 %v469
      %1323 = vmatmul.mubr.bf16.gmra.mrb[0].mxu0 %v468
      %v1324 = vpop.f32.mrb[0].mxu0
      %v1325 = vadd.f32 %v1020, %v1324
      %v1326 = vpop.f32.mrb[0].mxu0
      %v1327 = vpop.f32.mrb[0].mxu0
      %v1328 = vadd.f32 %v1023, %v1327
      %v1329 = vpop.f32.mrb[0].mxu0
      %1330 = vmatprep.mubr.bf16.mxu0 %v472
      %1331 = vmatmul.mubr.bf16.gmra.mrb[0].mxu0 %v471
      %v1332 = vpop.f32.mrb[0].mxu0
      %v1333 = vadd.f32 %v1028, %v1332
      %v1334 = vpop.f32.mrb[0].mxu0
      %v1335 = vpop.f32.mrb[0].mxu0
      %v1336 = vadd.f32 %v1031, %v1335
      %v1337 = vpop.f32.mrb[0].mxu0
      %1338 = vmatprep.mubr.bf16.mxu0 %v475
      %1339 = vmatmul.mubr.bf16.gmra.mrb[0].mxu0 %v474
      %v1340 = vpop.f32.mrb[0].mxu0
      %v1341 = vadd.f32 %v1036, %v1340
      %v1342 = vpop.f32.mrb[0].mxu0
      %v1343 = vpop.f32.mrb[0].mxu0
      %v1344 = vadd.f32 %v1039, %v1343
      %v1345 = vpop.f32.mrb[0].mxu0
      %1346 = vmatprep.mubr.bf16.mxu0 %v478
      %1347 = vmatmul.mubr.bf16.gmra.mrb[0].mxu0 %v477
      %v1348 = vpop.f32.mrb[0].mxu0
      %v1349 = vadd.f32 %v1044, %v1348
      %v1350 = vpop.f32.mrb[0].mxu0
      %v1351 = vpop.f32.mrb[0].mxu0
      %v1352 = vadd.f32 %v1047, %v1351
      %v1353 = vpop.f32.mrb[0].mxu0
      %1354 = vmatprep.mubr.bf16.mxu0 %v481
      %1355 = vmatmul.mubr.bf16.gmra.mrb[0].mxu0 %v480
      %v1356 = vpop.f32.mrb[0].mxu0
      %v1357 = vadd.f32 %v1052, %v1356
      %v1358 = vpop.f32.mrb[0].mxu0
      %v1359 = vpop.f32.mrb[0].mxu0
      %v1360 = vadd.f32 %v1055, %v1359
      %v1361 = vpop.f32.mrb[0].mxu0
      %1362 = vmatprep.mubr.bf16.mxu0 %v484
      %1363 = vmatmul.mubr.bf16.gmra.mrb[0].mxu0 %v483
      %v1364 = vpop.f32.mrb[0].mxu0
      %v1365 = vadd.f32 %v1060, %v1364
      %v1366 = vpop.f32.mrb[0].mxu0
      %v1367 = vpop.f32.mrb[0].mxu0
      %v1368 = vadd.f32 %v1063, %v1367
      %v1369 = vpop.f32.mrb[0].mxu0
      %1370 = vdwg.mxu0
      %1371 = vmatprep.subr.bf16.mxu0 0
      %1372 = vmatpush1.bf16.msra.mxu0 %v1178
      %1373 = vmatprep.subr.bf16.mxu0 0
      %1374 = vmatpush1.bf16.msra.mxu0 %v1179
      %1375 = vmatprep.subr.bf16.mxu0 0
      %1376 = vmatpush1.bf16.msra.mxu0 %v1180
      %1377 = vmatprep.subr.bf16.mxu0 0
      %1378 = vmatpush1.bf16.msra.mxu0 %v1181
      %1379 = vmatprep.subr.bf16.mxu0 0
      %1380 = vmatpush1.bf16.msra.mxu0 %v1182
      %1381 = vmatprep.subr.bf16.mxu0 0
      %1382 = vmatpush1.bf16.msra.mxu0 %v1183
      %1383 = vmatprep.subr.bf16.mxu0 0
      %1384 = vmatpush1.bf16.msra.mxu0 %v1184
      %1385 = vmatprep.subr.bf16.mxu0 0
      %1386 = vmatpush1.bf16.msra.mxu0 %v1185
      %1387 = vmatprep.subr.bf16.mxu0 0
      %1388 = vmatpush1.bf16.msra.mxu0 0
      %1389 = vmatprep.subr.bf16.mxu0 0
      %1390 = vmatpush1.bf16.msra.mxu0 0
      %1391 = vmatprep.subr.bf16.mxu0 0
      %1392 = vmatpush1.bf16.msra.mxu0 0
      %1393 = vmatprep.subr.bf16.mxu0 0
      %1394 = vmatpush1.bf16.msra.mxu0 0
      %1395 = vmatprep.subr.bf16.mxu0 0
      %1396 = vmatpush1.bf16.msra.mxu0 0
      %1397 = vmatprep.subr.bf16.mxu0 0
      %1398 = vmatpush1.bf16.msra.mxu0 0
      %1399 = vmatprep.subr.bf16.mxu0 0
      %1400 = vmatpush1.bf16.msra.mxu0 0
      %1401 = vmatprep.subr.bf16.mxu0 0
      %1402 = vmatpush1.bf16.msra.mxu0 0
      %1403 = vmatprep.mubr.bf16.mxu0 0
      %1404 = vmatmul.mubr.bf16.gmra.mrb[0].mxu0 %v440
      %v1405 = vpop.f32.mrb[0].mxu0
      %v1406 = vadd.f32 %v1245, %v1405
      %v1407 = vpop.f32.mrb[0].mxu0
      %v1408 = vpop.f32.mrb[0].mxu0
      %v1409 = vadd.f32 %v1248, %v1408
      %v1410 = vpop.f32.mrb[0].mxu0
      %1411 = vmatprep.mubr.bf16.mxu0 0
      %1412 = vmatmul.mubr.bf16.gmra.mrb[0].mxu0 %v443
      %v1413 = vpop.f32.mrb[0].mxu0
      %v1414 = vadd.f32 %v1253, %v1413
      %v1415 = vpop.f32.mrb[0].mxu0
      %v1416 = vpop.f32.mrb[0].mxu0
      %v1417 = vadd.f32 %v1256, %v1416
      %v1418 = vpop.f32.mrb[0].mxu0
      %1419 = vmatprep.mubr.bf16.mxu0 0
      %1420 = vmatmul.mubr.bf16.gmra.mrb[0].mxu0 %v446
      %v1421 = vpop.f32.mrb[0].mxu0
      %v1422 = vadd.f32 %v1261, %v1421
      %v1423 = vpop.f32.mrb[0].mxu0
      %v1424 = vpop.f32.mrb[0].mxu0
      %v1425 = vadd.f32 %v1264, %v1424
      %v1426 = vpop.f32.mrb[0].mxu0
      %1427 = vmatprep.mubr.bf16.mxu0 0
      %1428 = vmatmul.mubr.bf16.gmra.mrb[0].mxu0 %v449
      %v1429 = vpop.f32.mrb[0].mxu0
      %v1430 = vadd.f32 %v1269, %v1429
      %v1431 = vpop.f32.mrb[0].mxu0
      %v1432 = vpop.f32.mrb[0].mxu0
      %v1433 = vadd.f32 %v1272, %v1432
      %v1434 = vpop.f32.mrb[0].mxu0
      %1435 = vmatprep.mubr.bf16.mxu0 0
      %1436 = vmatmul.mubr.bf16.gmra.mrb[0].mxu0 %v452
      %v1437 = vpop.f32.mrb[0].mxu0
      %v1438 = vadd.f32 %v1277, %v1437
      %v1439 = vpop.f32.mrb[0].mxu0
      %v1440 = vpop.f32.mrb[0].mxu0
      %v1441 = vadd.f32 %v1280, %v1440
      %v1442 = vpop.f32.mrb[0].mxu0
      %1443 = vmatprep.mubr.bf16.mxu0 0
      %1444 = vmatmul.mubr.bf16.gmra.mrb[0].mxu0 %v455
      %v1445 = vpop.f32.mrb[0].mxu0
      %v1446 = vadd.f32 %v1285, %v1445
      %v1447 = vpop.f32.mrb[0].mxu0
      %v1448 = vpop.f32.mrb[0].mxu0
      %v1449 = vadd.f32 %v1288, %v1448
      %v1450 = vpop.f32.mrb[0].mxu0
      %1451 = vmatprep.mubr.bf16.mxu0 0
      %1452 = vmatmul.mubr.bf16.gmra.mrb[0].mxu0 %v458
      %v1453 = vpop.f32.mrb[0].mxu0
      %v1454 = vadd.f32 %v1293, %v1453
      %v1455 = vpop.f32.mrb[0].mxu0
      %v1456 = vpop.f32.mrb[0].mxu0
      %v1457 = vadd.f32 %v1296, %v1456
      %v1458 = vpop.f32.mrb[0].mxu0
      %1459 = vmatprep.mubr.bf16.mxu0 0
      %1460 = vmatmul.mubr.bf16.gmra.mrb[0].mxu0 %v461
      %v1461 = vpop.f32.mrb[0].mxu0
      %v1462 = vadd.f32 %v1301, %v1461
      %v1463 = vpop.f32.mrb[0].mxu0
      %v1464 = vpop.f32.mrb[0].mxu0
      %v1465 = vadd.f32 %v1304, %v1464
      %v1466 = vpop.f32.mrb[0].mxu0
      %1467 = vmatprep.mubr.bf16.mxu0 0
      %1468 = vmatmul.mubr.bf16.gmra.mrb[0].mxu0 %v464
      %v1469 = vpop.f32.mrb[0].mxu0
      %v1470 = vadd.f32 %v1309, %v1469
      %v1471 = vpop.f32.mrb[0].mxu0
      %v1472 = vpop.f32.mrb[0].mxu0
      %v1473 = vadd.f32 %v1312, %v1472
      %v1474 = vpop.f32.mrb[0].mxu0
      %1475 = vmatprep.mubr.bf16.mxu0 0
      %1476 = vmatmul.mubr.bf16.gmra.mrb[0].mxu0 %v467
      %v1477 = vpop.f32.mrb[0].mxu0
      %v1478 = vadd.f32 %v1317, %v1477
      %v1479 = vpop.f32.mrb[0].mxu0
      %v1480 = vpop.f32.mrb[0].mxu0
      %v1481 = vadd.f32 %v1320, %v1480
      %v1482 = vpop.f32.mrb[0].mxu0
      %1483 = vmatprep.mubr.bf16.mxu0 0
      %1484 = vmatmul.mubr.bf16.gmra.mrb[0].mxu0 %v470
      %v1485 = vpop.f32.mrb[0].mxu0
      %v1486 = vadd.f32 %v1325, %v1485
      %v1487 = vpop.f32.mrb[0].mxu0
      %v1488 = vpop.f32.mrb[0].mxu0
      %v1489 = vadd.f32 %v1328, %v1488
      %v1490 = vpop.f32.mrb[0].mxu0
      %1491 = vmatprep.mubr.bf16.mxu0 0
      %1492 = vmatmul.mubr.bf16.gmra.mrb[0].mxu0 %v473
      %v1493 = vpop.f32.mrb[0].mxu0
      %v1494 = vadd.f32 %v1333, %v1493
      %v1495 = vpop.f32.mrb[0].mxu0
      %v1496 = vpop.f32.mrb[0].mxu0
      %v1497 = vadd.f32 %v1336, %v1496
      %v1498 = vpop.f32.mrb[0].mxu0
      %1499 = vmatprep.mubr.bf16.mxu0 0
      %1500 = vmatmul.mubr.bf16.gmra.mrb[0].mxu0 %v476
      %v1501 = vpop.f32.mrb[0].mxu0
      %v1502 = vadd.f32 %v1341, %v1501
      %v1503 = vpop.f32.mrb[0].mxu0
      %v1504 = vpop.f32.mrb[0].mxu0
      %v1505 = vadd.f32 %v1344, %v1504
      %v1506 = vpop.f32.mrb[0].mxu0
      %1507 = vmatprep.mubr.bf16.mxu0 0
      %1508 = vmatmul.mubr.bf16.gmra.mrb[0].mxu0 %v479
      %v1509 = vpop.f32.mrb[0].mxu0
      %v1510 = vadd.f32 %v1349, %v1509
      %v1511 = vpop.f32.mrb[0].mxu0
      %v1512 = vpop.f32.mrb[0].mxu0
      %v1513 = vadd.f32 %v1352, %v1512
      %v1514 = vpop.f32.mrb[0].mxu0
      %1515 = vmatprep.mubr.bf16.mxu0 0
      %1516 = vmatmul.mubr.bf16.gmra.mrb[0].mxu0 %v482
      %v1517 = vpop.f32.mrb[0].mxu0
      %v1518 = vadd.f32 %v1357, %v1517
      %v1519 = vpop.f32.mrb[0].mxu0
      %v1520 = vpop.f32.mrb[0].mxu0
      %v1521 = vadd.f32 %v1360, %v1520
      %v1522 = vpop.f32.mrb[0].mxu0
      %1523 = vmatprep.mubr.bf16.mxu0 0
      %1524 = vmatmul.mubr.bf16.gmra.mrb[0].mxu0 %v485
      %v1525 = vpop.f32.mrb[0].mxu0
      %v1526 = vadd.f32 %v1365, %v1525
      %v1527 = vpop.f32.mrb[0].mxu0
      %v1528 = vpop.f32.mrb[0].mxu0
      %v1529 = vadd.f32 %v1368, %v1528
      %v1530 = vpop.f32.mrb[0].mxu0
      %1531 = vdwg.mxu0
      %s1532 = scalar_lea.vmem %s1, 384
      %v1533 = vld [vmem:[%s1532] sm:$0xf]
      %v1534 = vld [vmem:[%s1532 + $0x4] sm:$0xf]
      %v1535 = vld [vmem:[%s1532 + $0x8] sm:$0xf]
      %v1536 = vld [vmem:[%s1532 + $0xc] sm:$0xf]
      %v1537 = vld [vmem:[%s1532 + $0x10] sm:$0xf]
      %v1538 = vld [vmem:[%s1532 + $0x14] sm:$0xf]
      %v1539 = vld [vmem:[%s1532 + $0x18] sm:$0xf]
      %v1540 = vld [vmem:[%s1532 + $0x1c] sm:$0xf]
      %v1541 = vld [vmem:[%s1532 + $0x20] sm:$0xf]
      %v1542 = vld [vmem:[%s1532 + $0x24] sm:$0xf]
      %v1543 = vld [vmem:[%s1532 + $0x28] sm:$0xf]
      %v1544 = vld [vmem:[%s1532 + $0x2c] sm:$0xf]
      %v1545 = vld [vmem:[%s1532 + $0x30] sm:$0xf]
      %v1546 = vld [vmem:[%s1532 + $0x34] sm:$0xf]
      %v1547 = vld [vmem:[%s1532 + $0x38] sm:$0xf]
      %v1548 = vld [vmem:[%s1532 + $0x3c] sm:$0xf]
      %v1549 = vld [vmem:[%s1532 + $0x40] sm:$0xf]
      %v1550 = vld [vmem:[%s1532 + $0x44] sm:$0xf]
      %v1551 = vld [vmem:[%s1532 + $0x48] sm:$0xf]
      %v1552 = vld [vmem:[%s1532 + $0x4c] sm:$0xf]
      %v1553 = vld [vmem:[%s1532 + $0x50] sm:$0xf]
      %v1554 = vld [vmem:[%s1532 + $0x54] sm:$0xf]
      %v1555 = vld [vmem:[%s1532 + $0x58] sm:$0xf]
      %v1556 = vld [vmem:[%s1532 + $0x5c] sm:$0xf]
      %v1557 = vld [vmem:[%s1532 + $0x60] sm:$0xf]
      %v1558 = vld [vmem:[%s1532 + $0x64] sm:$0xf]
      %v1559 = vld [vmem:[%s1532 + $0x68] sm:$0xf]
      %v1560 = vld [vmem:[%s1532 + $0x6c] sm:$0xf]
      %v1561 = vld [vmem:[%s1532 + $0x70] sm:$0xf]
      %v1562 = vld [vmem:[%s1532 + $0x74] sm:$0xf]
      %v1563 = vld [vmem:[%s1532 + $0x78] sm:$0xf]
      %v1564 = vld [vmem:[%s1532 + $0x7c] sm:$0xf]
      %v1565 = vld [vmem:[%s1532 + $0x80] sm:$0xf]
      %v1566 = vld [vmem:[%s1532 + $0x84] sm:$0xf]
      %v1567 = vld [vmem:[%s1532 + $0x88] sm:$0xf]
      %v1568 = vld [vmem:[%s1532 + $0x8c] sm:$0xf]
      %v1569 = vld [vmem:[%s1532 + $0x90] sm:$0xf]
      %v1570 = vld [vmem:[%s1532 + $0x94] sm:$0xf]
      %v1571 = vld [vmem:[%s1532 + $0x98] sm:$0xf]
      %v1572 = vld [vmem:[%s1532 + $0x9c] sm:$0xf]
      %v1573 = vld [vmem:[%s1532 + $0xa0] sm:$0xf]
      %v1574 = vld [vmem:[%s1532 + $0xa4] sm:$0xf]
      %v1575 = vld [vmem:[%s1532 + $0xa8] sm:$0xf]
      %v1576 = vld [vmem:[%s1532 + $0xac] sm:$0xf]
      %v1577 = vld [vmem:[%s1532 + $0xb0] sm:$0xf]
      %v1578 = vld [vmem:[%s1532 + $0xb4] sm:$0xf]
      %v1579 = vld [vmem:[%s1532 + $0xb8] sm:$0xf]
      %v1580 = vld [vmem:[%s1532 + $0xbc] sm:$0xf]
      %v1629 = vunpack.c.l.b16 %v1533
      %v1630 = vunpack.c.l.b16 %v1534
      %v1631 = vunpack.c.l.b16 %v1535
      %v1632 = vunpack.c.l.b16 %v1536
      %v1633 = vunpack.c.l.b16 %v1537
      %v1634 = vunpack.c.l.b16 %v1538
      %v1635 = vunpack.c.l.b16 %v1539
      %v1636 = vunpack.c.l.b16 %v1540
      %v1637 = vunpack.c.l.b16 %v1541
      %v1638 = vunpack.c.l.b16 %v1542
      %v1639 = vunpack.c.l.b16 %v1543
      %v1640 = vunpack.c.l.b16 %v1544
      %v1641 = vunpack.c.l.b16 %v1545
      %v1642 = vunpack.c.l.b16 %v1546
      %v1643 = vunpack.c.l.b16 %v1547
      %v1644 = vunpack.c.l.b16 %v1548
      %v1645 = vunpack.c.l.b16 %v1549
      %v1646 = vunpack.c.l.b16 %v1550
      %v1647 = vunpack.c.l.b16 %v1551
      %v1648 = vunpack.c.l.b16 %v1552
      %v1649 = vunpack.c.l.b16 %v1553
      %v1650 = vunpack.c.l.b16 %v1554
      %v1651 = vunpack.c.l.b16 %v1555
      %v1652 = vunpack.c.l.b16 %v1556
      %v1653 = vunpack.c.l.b16 %v1557
      %v1654 = vunpack.c.l.b16 %v1558
      %v1655 = vunpack.c.l.b16 %v1559
      %v1656 = vunpack.c.l.b16 %v1560
      %v1657 = vunpack.c.l.b16 %v1561
      %v1658 = vunpack.c.l.b16 %v1562
      %v1659 = vunpack.c.l.b16 %v1563
      %v1660 = vunpack.c.l.b16 %v1564
      %v1661 = vunpack.c.l.b16 %v1565
      %v1662 = vunpack.c.l.b16 %v1566
      %v1663 = vunpack.c.l.b16 %v1567
      %v1664 = vunpack.c.l.b16 %v1568
      %v1665 = vunpack.c.l.b16 %v1569
      %v1666 = vunpack.c.l.b16 %v1570
      %v1667 = vunpack.c.l.b16 %v1571
      %v1668 = vunpack.c.l.b16 %v1572
      %v1669 = vunpack.c.l.b16 %v1573
      %v1670 = vunpack.c.l.b16 %v1574
      %v1671 = vunpack.c.l.b16 %v1575
      %v1672 = vunpack.c.l.b16 %v1576
      %v1673 = vunpack.c.l.b16 %v1577
      %v1674 = vunpack.c.l.b16 %v1578
      %v1675 = vunpack.c.l.b16 %v1579
      %v1676 = vunpack.c.l.b16 %v1580
      %v1677 = vpack.c.b16 %v1630, %v1629
      %v1678 = vpack.c.b16 %v1632, %v1631
      %v1679 = vpack.c.b16 %v1634, %v1633
      %v1680 = vpack.c.b16 %v1636, %v1635
      %v1681 = vpack.c.b16 %v1638, %v1637
      %v1682 = vpack.c.b16 %v1640, %v1639
      %v1683 = vpack.c.b16 %v1642, %v1641
      %v1684 = vpack.c.b16 %v1644, %v1643
      %v1685 = vpack.c.b16 %v1646, %v1645
      %v1686 = vpack.c.b16 %v1648, %v1647
      %v1687 = vpack.c.b16 %v1650, %v1649
      %v1688 = vpack.c.b16 %v1652, %v1651
      %v1689 = vpack.c.b16 %v1654, %v1653
      %v1690 = vpack.c.b16 %v1656, %v1655
      %v1691 = vpack.c.b16 %v1658, %v1657
      %v1692 = vpack.c.b16 %v1660, %v1659
      %v1693 = vpack.c.b16 %v1662, %v1661
      %v1694 = vpack.c.b16 %v1664, %v1663
      %v1695 = vpack.c.b16 %v1666, %v1665
      %v1696 = vpack.c.b16 %v1668, %v1667
      %v1697 = vpack.c.b16 %v1670, %v1669
      %v1698 = vpack.c.b16 %v1672, %v1671
      %v1699 = vpack.c.b16 %v1674, %v1673
      %v1700 = vpack.c.b16 %v1676, %v1675
      %1725 = vmatprep.subr.bf16.mxu0 0
      %1726 = vmatpush1.bf16.msra.mxu0 %v1677
      %1727 = vmatprep.subr.bf16.mxu0 0
      %1728 = vmatpush1.bf16.msra.mxu0 %v1678
      %1729 = vmatprep.subr.bf16.mxu0 0
      %1730 = vmatpush1.bf16.msra.mxu0 %v1679
      %1731 = vmatprep.subr.bf16.mxu0 0
      %1732 = vmatpush1.bf16.msra.mxu0 %v1680
      %1733 = vmatprep.subr.bf16.mxu0 0
      %1734 = vmatpush1.bf16.msra.mxu0 %v1681
      %1735 = vmatprep.subr.bf16.mxu0 0
      %1736 = vmatpush1.bf16.msra.mxu0 %v1682
      %1737 = vmatprep.subr.bf16.mxu0 0
      %1738 = vmatpush1.bf16.msra.mxu0 %v1683
      %1739 = vmatprep.subr.bf16.mxu0 0
      %1740 = vmatpush1.bf16.msra.mxu0 %v1684
      %1741 = vmatprep.subr.bf16.mxu0 0
      %1742 = vmatpush1.bf16.msra.mxu0 %v1685
      %1743 = vmatprep.subr.bf16.mxu0 0
      %1744 = vmatpush1.bf16.msra.mxu0 %v1686
      %1745 = vmatprep.subr.bf16.mxu0 0
      %1746 = vmatpush1.bf16.msra.mxu0 %v1687
      %1747 = vmatprep.subr.bf16.mxu0 0
      %1748 = vmatpush1.bf16.msra.mxu0 %v1688
      %1749 = vmatprep.subr.bf16.mxu0 0
      %1750 = vmatpush1.bf16.msra.mxu0 %v1689
      %1751 = vmatprep.subr.bf16.mxu0 0
      %1752 = vmatpush1.bf16.msra.mxu0 %v1690
      %1753 = vmatprep.subr.bf16.mxu0 0
      %1754 = vmatpush1.bf16.msra.mxu0 %v1691
      %1755 = vmatprep.subr.bf16.mxu0 0
      %1756 = vmatpush1.bf16.msra.mxu0 %v1692
      %1757 = vmatprep.mubr.bf16.mxu0 %v445
      %1758 = vmatmul.mubr.bf16.gmra.mrb[0].mxu0 %v444
      %v1759 = vpop.f32.mrb[0].mxu0
      %v1760 = vadd.f32 0.0, %v1759
      %v1761 = vpop.f32.mrb[0].mxu0
      %v1762 = vpop.f32.mrb[0].mxu0
      %v1763 = vadd.f32 0.0, %v1762
      %v1764 = vpop.f32.mrb[0].mxu0
      %1765 = vmatprep.mubr.bf16.mxu0 %v448
      %1766 = vmatmul.mubr.bf16.gmra.mrb[0].mxu0 %v447
      %v1767 = vpop.f32.mrb[0].mxu0
      %v1768 = vadd.f32 0.0, %v1767
      %v1769 = vpop.f32.mrb[0].mxu0
      %v1770 = vpop.f32.mrb[0].mxu0
      %v1771 = vadd.f32 0.0, %v1770
      %v1772 = vpop.f32.mrb[0].mxu0
      %1773 = vmatprep.mubr.bf16.mxu0 %v451
      %1774 = vmatmul.mubr.bf16.gmra.mrb[0].mxu0 %v450
      %v1775 = vpop.f32.mrb[0].mxu0
      %v1776 = vadd.f32 0.0, %v1775
      %v1777 = vpop.f32.mrb[0].mxu0
      %v1778 = vpop.f32.mrb[0].mxu0
      %v1779 = vadd.f32 0.0, %v1778
      %v1780 = vpop.f32.mrb[0].mxu0
      %1781 = vmatprep.mubr.bf16.mxu0 %v454
      %1782 = vmatmul.mubr.bf16.gmra.mrb[0].mxu0 %v453
      %v1783 = vpop.f32.mrb[0].mxu0
      %v1784 = vadd.f32 0.0, %v1783
      %v1785 = vpop.f32.mrb[0].mxu0
      %v1786 = vpop.f32.mrb[0].mxu0
      %v1787 = vadd.f32 0.0, %v1786
      %v1788 = vpop.f32.mrb[0].mxu0
      %1789 = vmatprep.mubr.bf16.mxu0 %v457
      %1790 = vmatmul.mubr.bf16.gmra.mrb[0].mxu0 %v456
      %v1791 = vpop.f32.mrb[0].mxu0
      %v1792 = vadd.f32 0.0, %v1791
      %v1793 = vpop.f32.mrb[0].mxu0
      %v1794 = vpop.f32.mrb[0].mxu0
      %v1795 = vadd.f32 0.0, %v1794
      %v1796 = vpop.f32.mrb[0].mxu0
      %1797 = vmatprep.mubr.bf16.mxu0 %v460
      %1798 = vmatmul.mubr.bf16.gmra.mrb[0].mxu0 %v459
      %v1799 = vpop.f32.mrb[0].mxu0
      %v1800 = vadd.f32 0.0, %v1799
      %v1801 = vpop.f32.mrb[0].mxu0
      %v1802 = vpop.f32.mrb[0].mxu0
      %v1803 = vadd.f32 0.0, %v1802
      %v1804 = vpop.f32.mrb[0].mxu0
      %1805 = vmatprep.mubr.bf16.mxu0 %v463
      %1806 = vmatmul.mubr.bf16.gmra.mrb[0].mxu0 %v462
      %v1807 = vpop.f32.mrb[0].mxu0
      %v1808 = vadd.f32 0.0, %v1807
      %v1809 = vpop.f32.mrb[0].mxu0
      %v1810 = vpop.f32.mrb[0].mxu0
      %v1811 = vadd.f32 0.0, %v1810
      %v1812 = vpop.f32.mrb[0].mxu0
      %1813 = vmatprep.mubr.bf16.mxu0 %v466
      %1814 = vmatmul.mubr.bf16.gmra.mrb[0].mxu0 %v465
      %v1815 = vpop.f32.mrb[0].mxu0
      %v1816 = vadd.f32 0.0, %v1815
      %v1817 = vpop.f32.mrb[0].mxu0
      %v1818 = vpop.f32.mrb[0].mxu0
      %v1819 = vadd.f32 0.0, %v1818
      %v1820 = vpop.f32.mrb[0].mxu0
      %1821 = vmatprep.mubr.bf16.mxu0 %v469
      %1822 = vmatmul.mubr.bf16.gmra.mrb[0].mxu0 %v468
      %v1823 = vpop.f32.mrb[0].mxu0
      %v1824 = vadd.f32 0.0, %v1823
      %v1825 = vpop.f32.mrb[0].mxu0
      %v1826 = vpop.f32.mrb[0].mxu0
      %v1827 = vadd.f32 0.0, %v1826
      %v1828 = vpop.f32.mrb[0].mxu0
      %1829 = vmatprep.mubr.bf16.mxu0 %v472
      %1830 = vmatmul.mubr.bf16.gmra.mrb[0].mxu0 %v471
      %v1831 = vpop.f32.mrb[0].mxu0
      %v1832 = vadd.f32 0.0, %v1831
      %v1833 = vpop.f32.mrb[0].mxu0
      %v1834 = vpop.f32.mrb[0].mxu0
      %v1835 = vadd.f32 0.0, %v1834
      %v1836 = vpop.f32.mrb[0].mxu0
      %1837 = vmatprep.mubr.bf16.mxu0 %v475
      %1838 = vmatmul.mubr.bf16.gmra.mrb[0].mxu0 %v474
      %v1839 = vpop.f32.mrb[0].mxu0
      %v1840 = vadd.f32 0.0, %v1839
      %v1841 = vpop.f32.mrb[0].mxu0
      %v1842 = vpop.f32.mrb[0].mxu0
      %v1843 = vadd.f32 0.0, %v1842
      %v1844 = vpop.f32.mrb[0].mxu0
      %1845 = vmatprep.mubr.bf16.mxu0 %v478
      %1846 = vmatmul.mubr.bf16.gmra.mrb[0].mxu0 %v477
      %v1847 = vpop.f32.mrb[0].mxu0
      %v1848 = vadd.f32 0.0, %v1847
      %v1849 = vpop.f32.mrb[0].mxu0
      %v1850 = vpop.f32.mrb[0].mxu0
      %v1851 = vadd.f32 0.0, %v1850
      %v1852 = vpop.f32.mrb[0].mxu0
      %1853 = vmatprep.mubr.bf16.mxu0 %v481
      %1854 = vmatmul.mubr.bf16.gmra.mrb[0].mxu0 %v480
      %v1855 = vpop.f32.mrb[0].mxu0
      %v1856 = vadd.f32 0.0, %v1855
      %v1857 = vpop.f32.mrb[0].mxu0
      %v1858 = vpop.f32.mrb[0].mxu0
      %v1859 = vadd.f32 0.0, %v1858
      %v1860 = vpop.f32.mrb[0].mxu0
      %1861 = vmatprep.mubr.bf16.mxu0 %v484
      %1862 = vmatmul.mubr.bf16.gmra.mrb[0].mxu0 %v483
      %v1863 = vpop.f32.mrb[0].mxu0
      %v1864 = vadd.f32 0.0, %v1863
      %v1865 = vpop.f32.mrb[0].mxu0
      %v1866 = vpop.f32.mrb[0].mxu0
      %v1867 = vadd.f32 0.0, %v1866
      %v1868 = vpop.f32.mrb[0].mxu0
      %1869 = vmatprep.mubr.bf16.mxu0 %v549
      %1870 = vmatmul.mubr.bf16.gmra.mrb[0].mxu0 %v548
      %v1871 = vpop.f32.mrb[0].mxu0
      %v1872 = vadd.f32 0.0, %v1871
      %v1873 = vpop.f32.mrb[0].mxu0
      %v1874 = vpop.f32.mrb[0].mxu0
      %v1875 = vadd.f32 0.0, %v1874
      %v1876 = vpop.f32.mrb[0].mxu0
      %1877 = vmatprep.mubr.bf16.mxu0 %v439
      %1878 = vmatmul.mubr.bf16.gmra.mrb[0].mxu0 %v438
      %v1879 = vpop.f32.mrb[0].mxu0
      %v1880 = vadd.f32 0.0, %v1879
      %v1881 = vpop.f32.mrb[0].mxu0
      %v1882 = vpop.f32.mrb[0].mxu0
      %v1883 = vadd.f32 0.0, %v1882
      %v1884 = vpop.f32.mrb[0].mxu0
      %1885 = vdwg.mxu0
      %1886 = vmatprep.subr.bf16.mxu0 0
      %1887 = vmatpush1.bf16.msra.mxu0 %v1693
      %1888 = vmatprep.subr.bf16.mxu0 0
      %1889 = vmatpush1.bf16.msra.mxu0 %v1694
      %1890 = vmatprep.subr.bf16.mxu0 0
      %1891 = vmatpush1.bf16.msra.mxu0 %v1695
      %1892 = vmatprep.subr.bf16.mxu0 0
      %1893 = vmatpush1.bf16.msra.mxu0 %v1696
      %1894 = vmatprep.subr.bf16.mxu0 0
      %1895 = vmatpush1.bf16.msra.mxu0 %v1697
      %1896 = vmatprep.subr.bf16.mxu0 0
      %1897 = vmatpush1.bf16.msra.mxu0 %v1698
      %1898 = vmatprep.subr.bf16.mxu0 0
      %1899 = vmatpush1.bf16.msra.mxu0 %v1699
      %1900 = vmatprep.subr.bf16.mxu0 0
      %1901 = vmatpush1.bf16.msra.mxu0 %v1700
      %1902 = vmatprep.subr.bf16.mxu0 0
      %1903 = vmatpush1.bf16.msra.mxu0 0
      %1904 = vmatprep.subr.bf16.mxu0 0
      %1905 = vmatpush1.bf16.msra.mxu0 0
      %1906 = vmatprep.subr.bf16.mxu0 0
      %1907 = vmatpush1.bf16.msra.mxu0 0
      %1908 = vmatprep.subr.bf16.mxu0 0
      %1909 = vmatpush1.bf16.msra.mxu0 0
      %1910 = vmatprep.subr.bf16.mxu0 0
      %1911 = vmatpush1.bf16.msra.mxu0 0
      %1912 = vmatprep.subr.bf16.mxu0 0
      %1913 = vmatpush1.bf16.msra.mxu0 0
      %1914 = vmatprep.subr.bf16.mxu0 0
      %1915 = vmatpush1.bf16.msra.mxu0 0
      %1916 = vmatprep.subr.bf16.mxu0 0
      %1917 = vmatpush1.bf16.msra.mxu0 0
      %1918 = vmatprep.mubr.bf16.mxu0 0
      %1919 = vmatmul.mubr.bf16.gmra.mrb[0].mxu0 %v446
      %v1920 = vpop.f32.mrb[0].mxu0
      %v1921 = vadd.f32 %v1760, %v1920
      %v1922 = vpop.f32.mrb[0].mxu0
      %v1923 = vpop.f32.mrb[0].mxu0
      %v1924 = vadd.f32 %v1763, %v1923
      %v1925 = vpop.f32.mrb[0].mxu0
      %1926 = vmatprep.mubr.bf16.mxu0 0
      %1927 = vmatmul.mubr.bf16.gmra.mrb[0].mxu0 %v449
      %v1928 = vpop.f32.mrb[0].mxu0
      %v1929 = vadd.f32 %v1768, %v1928
      %v1930 = vpop.f32.mrb[0].mxu0
      %v1931 = vpop.f32.mrb[0].mxu0
      %v1932 = vadd.f32 %v1771, %v1931
      %v1933 = vpop.f32.mrb[0].mxu0
      %1934 = vmatprep.mubr.bf16.mxu0 0
      %1935 = vmatmul.mubr.bf16.gmra.mrb[0].mxu0 %v452
      %v1936 = vpop.f32.mrb[0].mxu0
      %v1937 = vadd.f32 %v1776, %v1936
      %v1938 = vpop.f32.mrb[0].mxu0
      %v1939 = vpop.f32.mrb[0].mxu0
      %v1940 = vadd.f32 %v1779, %v1939
      %v1941 = vpop.f32.mrb[0].mxu0
      %1942 = vmatprep.mubr.bf16.mxu0 0
      %1943 = vmatmul.mubr.bf16.gmra.mrb[0].mxu0 %v455
      %v1944 = vpop.f32.mrb[0].mxu0
      %v1945 = vadd.f32 %v1784, %v1944
      %v1946 = vpop.f32.mrb[0].mxu0
      %v1947 = vpop.f32.mrb[0].mxu0
      %v1948 = vadd.f32 %v1787, %v1947
      %v1949 = vpop.f32.mrb[0].mxu0
      %1950 = vmatprep.mubr.bf16.mxu0 0
      %1951 = vmatmul.mubr.bf16.gmra.mrb[0].mxu0 %v458
      %v1952 = vpop.f32.mrb[0].mxu0
      %v1953 = vadd.f32 %v1792, %v1952
      %v1954 = vpop.f32.mrb[0].mxu0
      %v1955 = vpop.f32.mrb[0].mxu0
      %v1956 = vadd.f32 %v1795, %v1955
      %v1957 = vpop.f32.mrb[0].mxu0
      %1958 = vmatprep.mubr.bf16.mxu0 0
      %1959 = vmatmul.mubr.bf16.gmra.mrb[0].mxu0 %v461
      %v1960 = vpop.f32.mrb[0].mxu0
      %v1961 = vadd.f32 %v1800, %v1960
      %v1962 = vpop.f32.mrb[0].mxu0
      %v1963 = vpop.f32.mrb[0].mxu0
      %v1964 = vadd.f32 %v1803, %v1963
      %v1965 = vpop.f32.mrb[0].mxu0
      %1966 = vmatprep.mubr.bf16.mxu0 0
      %1967 = vmatmul.mubr.bf16.gmra.mrb[0].mxu0 %v464
      %v1968 = vpop.f32.mrb[0].mxu0
      %v1969 = vadd.f32 %v1808, %v1968
      %v1970 = vpop.f32.mrb[0].mxu0
      %v1971 = vpop.f32.mrb[0].mxu0
      %v1972 = vadd.f32 %v1811, %v1971
      %v1973 = vpop.f32.mrb[0].mxu0
      %1974 = vmatprep.mubr.bf16.mxu0 0
      %1975 = vmatmul.mubr.bf16.gmra.mrb[0].mxu0 %v467
      %v1976 = vpop.f32.mrb[0].mxu0
      %v1977 = vadd.f32 %v1816, %v1976
      %v1978 = vpop.f32.mrb[0].mxu0
      %v1979 = vpop.f32.mrb[0].mxu0
      %v1980 = vadd.f32 %v1819, %v1979
      %v1981 = vpop.f32.mrb[0].mxu0
      %1982 = vmatprep.mubr.bf16.mxu0 0
      %1983 = vmatmul.mubr.bf16.gmra.mrb[0].mxu0 %v470
      %v1984 = vpop.f32.mrb[0].mxu0
      %v1985 = vadd.f32 %v1824, %v1984
      %v1986 = vpop.f32.mrb[0].mxu0
      %v1987 = vpop.f32.mrb[0].mxu0
      %v1988 = vadd.f32 %v1827, %v1987
      %v1989 = vpop.f32.mrb[0].mxu0
      %1990 = vmatprep.mubr.bf16.mxu0 0
      %1991 = vmatmul.mubr.bf16.gmra.mrb[0].mxu0 %v473
      %v1992 = vpop.f32.mrb[0].mxu0
      %v1993 = vadd.f32 %v1832, %v1992
      %v1994 = vpop.f32.mrb[0].mxu0
      %v1995 = vpop.f32.mrb[0].mxu0
      %v1996 = vadd.f32 %v1835, %v1995
      %v1997 = vpop.f32.mrb[0].mxu0
      %1998 = vmatprep.mubr.bf16.mxu0 0
      %1999 = vmatmul.mubr.bf16.gmra.mrb[0].mxu0 %v476
      %v2000 = vpop.f32.mrb[0].mxu0
      %v2001 = vadd.f32 %v1840, %v2000
      %v2002 = vpop.f32.mrb[0].mxu0
      %v2003 = vpop.f32.mrb[0].mxu0
      %v2004 = vadd.f32 %v1843, %v2003
      %v2005 = vpop.f32.mrb[0].mxu0
      %2006 = vmatprep.mubr.bf16.mxu0 0
      %2007 = vmatmul.mubr.bf16.gmra.mrb[0].mxu0 %v479
      %v2008 = vpop.f32.mrb[0].mxu0
      %v2009 = vadd.f32 %v1848, %v2008
      %v2010 = vpop.f32.mrb[0].mxu0
      %v2011 = vpop.f32.mrb[0].mxu0
      %v2012 = vadd.f32 %v1851, %v2011
      %v2013 = vpop.f32.mrb[0].mxu0
      %2014 = vmatprep.mubr.bf16.mxu0 0
      %2015 = vmatmul.mubr.bf16.gmra.mrb[0].mxu0 %v482
      %v2016 = vpop.f32.mrb[0].mxu0
      %v2017 = vadd.f32 %v1856, %v2016
      %v2018 = vpop.f32.mrb[0].mxu0
      %v2019 = vpop.f32.mrb[0].mxu0
      %v2020 = vadd.f32 %v1859, %v2019
      %v2021 = vpop.f32.mrb[0].mxu0
      %2022 = vmatprep.mubr.bf16.mxu0 0
      %2023 = vmatmul.mubr.bf16.gmra.mrb[0].mxu0 %v485
      %v2024 = vpop.f32.mrb[0].mxu0
      %v2025 = vadd.f32 %v1864, %v2024
      %v2026 = vpop.f32.mrb[0].mxu0
      %v2027 = vpop.f32.mrb[0].mxu0
      %v2028 = vadd.f32 %v1867, %v2027
      %v2029 = vpop.f32.mrb[0].mxu0
      %2030 = vmatprep.mubr.bf16.mxu0 0
      %2031 = vmatmul.mubr.bf16.gmra.mrb[0].mxu0 %v550
      %v2032 = vpop.f32.mrb[0].mxu0
      %v2033 = vadd.f32 %v1872, %v2032
      %v2034 = vpop.f32.mrb[0].mxu0
      %v2035 = vpop.f32.mrb[0].mxu0
      %v2036 = vadd.f32 %v1875, %v2035
      %v2037 = vpop.f32.mrb[0].mxu0
      %2038 = vmatprep.mubr.bf16.mxu0 0
      %2039 = vmatmul.mubr.bf16.gmra.mrb[0].mxu0 %v440
      %v2040 = vpop.f32.mrb[0].mxu0
      %v2041 = vadd.f32 %v1880, %v2040
      %v2042 = vpop.f32.mrb[0].mxu0
      %v2043 = vpop.f32.mrb[0].mxu0
      %v2044 = vadd.f32 %v1883, %v2043
      %v2045 = vpop.f32.mrb[0].mxu0
      %2046 = vdwg.mxu0
      %v2047 = vadd.f32 %v1406, %v1921
      %v2048 = vadd.f32 %v1409, %v1924
      %v2049 = vadd.f32 %v1414, %v1929
      %v2050 = vadd.f32 %v1417, %v1932
      %v2051 = vadd.f32 %v1422, %v1937
      %v2052 = vadd.f32 %v1425, %v1940
      %v2053 = vadd.f32 %v1430, %v1945
      %v2054 = vadd.f32 %v1433, %v1948
      %v2055 = vadd.f32 %v1438, %v1953
      %v2056 = vadd.f32 %v1441, %v1956
      %v2057 = vadd.f32 %v1446, %v1961
      %v2058 = vadd.f32 %v1449, %v1964
      %v2059 = vadd.f32 %v1454, %v1969
      %v2060 = vadd.f32 %v1457, %v1972
      %v2061 = vadd.f32 %v1462, %v1977
      %v2062 = vadd.f32 %v1465, %v1980
      %v2063 = vadd.f32 %v1470, %v1985
      %v2064 = vadd.f32 %v1473, %v1988
      %v2065 = vadd.f32 %v1478, %v1993
      %v2066 = vadd.f32 %v1481, %v1996
      %v2067 = vadd.f32 %v1486, %v2001
      %v2068 = vadd.f32 %v1489, %v2004
      %v2069 = vadd.f32 %v1494, %v2009
      %v2070 = vadd.f32 %v1497, %v2012
      %v2071 = vadd.f32 %v1502, %v2017
      %v2072 = vadd.f32 %v1505, %v2020
      %v2073 = vadd.f32 %v1510, %v2025
      %v2074 = vadd.f32 %v1513, %v2028
      %v2075 = vadd.f32 %v1518, %v2033
      %v2076 = vadd.f32 %v1521, %v2036
      %v2077 = vadd.f32 %v1526, %v2041
      %v2078 = vadd.f32 %v1529, %v2044
      %2079 = vst [vmem:[%s177] sm:$0xff] %v2047
      %2080 = vst [vmem:[%s177 + $0x8] sm:$0xff] %v2048
      %2081 = vst [vmem:[%s177 + $0x10] sm:$0xff] %v2049
      %2082 = vst [vmem:[%s177 + $0x18] sm:$0xff] %v2050
      %2083 = vst [vmem:[%s177 + $0x20] sm:$0xff] %v2051
      %2084 = vst [vmem:[%s177 + $0x28] sm:$0xff] %v2052
      %2085 = vst [vmem:[%s177 + $0x30] sm:$0xff] %v2053
      %2086 = vst [vmem:[%s177 + $0x38] sm:$0xff] %v2054
      %2087 = vst [vmem:[%s177 + $0x40] sm:$0xff] %v2055
      %2088 = vst [vmem:[%s177 + $0x48] sm:$0xff] %v2056
      %2089 = vst [vmem:[%s177 + $0x50] sm:$0xff] %v2057
      %2090 = vst [vmem:[%s177 + $0x58] sm:$0xff] %v2058
      %2091 = vst [vmem:[%s177 + $0x60] sm:$0xff] %v2059
      %2092 = vst [vmem:[%s177 + $0x68] sm:$0xff] %v2060
      %2093 = vst [vmem:[%s177 + $0x70] sm:$0xff] %v2061
      %2094 = vst [vmem:[%s177 + $0x78] sm:$0xff] %v2062
      %2095 = vst [vmem:[%s177 + $0x80] sm:$0xff] %v2063
      %2096 = vst [vmem:[%s177 + $0x88] sm:$0xff] %v2064
      %2097 = vst [vmem:[%s177 + $0x90] sm:$0xff] %v2065
      %2098 = vst [vmem:[%s177 + $0x98] sm:$0xff] %v2066
      %2099 = vst [vmem:[%s177 + $0xa0] sm:$0xff] %v2067
      %2100 = vst [vmem:[%s177 + $0xa8] sm:$0xff] %v2068
      %2101 = vst [vmem:[%s177 + $0xb0] sm:$0xff] %v2069
      %2102 = vst [vmem:[%s177 + $0xb8] sm:$0xff] %v2070
      %2103 = vst [vmem:[%s177 + $0xc0] sm:$0xff] %v2071
      %2104 = vst [vmem:[%s177 + $0xc8] sm:$0xff] %v2072
      %2105 = vst [vmem:[%s177 + $0xd0] sm:$0xff] %v2073
      %2106 = vst [vmem:[%s177 + $0xd8] sm:$0xff] %v2074
      %2107 = vst [vmem:[%s177 + $0xe0] sm:$0xff] %v2075
      %2108 = vst [vmem:[%s177 + $0xe8] sm:$0xff] %v2076
      %2109 = vst [vmem:[%s177 + $0xf0] sm:$0xff] %v2077
      %2110 = vst [vmem:[%s177 + $0xf8] sm:$0xff] %v2078
      %v2111 = vadd.f32 %v2047, %v2048
      %v2112 = vadd.f32 %v2111, %v2049
      %v2113 = vadd.f32 %v2112, %v2050
      %v2114 = vadd.f32 %v2113, %v2051
      %v2115 = vadd.f32 %v2114, %v2052
      %v2116 = vadd.f32 %v2115, %v2053
      %v2117 = vadd.f32 %v2116, %v2054
      %v2118 = vadd.f32 %v2117, %v2055
      %v2119 = vadd.f32 %v2118, %v2056
      %v2120 = vadd.f32 %v2119, %v2057
      %v2121 = vadd.f32 %v2120, %v2058
      %v2122 = vadd.f32 %v2121, %v2059
      %v2123 = vadd.f32 %v2122, %v2060
      %v2124 = vadd.f32 %v2123, %v2061
      %v2125 = vadd.f32 %v2124, %v2062
      %v2126 = vadd.f32 %v2125, %v2063
      %v2127 = vadd.f32 %v2126, %v2064
      %v2128 = vadd.f32 %v2127, %v2065
      %v2129 = vadd.f32 %v2128, %v2066
      %v2130 = vadd.f32 %v2129, %v2067
      %v2131 = vadd.f32 %v2130, %v2068
      %v2132 = vadd.f32 %v2131, %v2069
      %v2133 = vadd.f32 %v2132, %v2070
      %v2134 = vadd.f32 %v2133, %v2071
      %v2135 = vadd.f32 %v2134, %v2072
      %v2136 = vadd.f32 %v2135, %v2073
      %v2137 = vadd.f32 %v2136, %v2074
      %v2138 = vadd.f32 %v2137, %v2075
      %v2139 = vadd.f32 %v2138, %v2076
      %v2140 = vadd.f32 %v2139, %v2077
      %v2141 = vadd.f32 %v2140, %v2078
      %v2142 = vrot.slane %v2141, 4
      %v2143 = vadd.f32 %v2141, %v2142
      %v2144 = vrot.slane %v2143, 2
      %v2145 = vadd.f32 %v2143, %v2144
      %v2146 = vrot.slane %v2145, 1
      %v2147 = vadd.f32 %v2145, %v2146
      %v2148 = vmul.f32 %v2047, %v2047
      %v2149 = vmul.f32 %v2048, %v2048
      %v2150 = vmul.f32 %v2049, %v2049
      %v2151 = vmul.f32 %v2050, %v2050
      %v2152 = vmul.f32 %v2051, %v2051
      %v2153 = vmul.f32 %v2052, %v2052
      %v2154 = vmul.f32 %v2053, %v2053
      %v2155 = vmul.f32 %v2054, %v2054
      %v2156 = vmul.f32 %v2055, %v2055
      %v2157 = vmul.f32 %v2056, %v2056
      %v2158 = vmul.f32 %v2057, %v2057
      %v2159 = vmul.f32 %v2058, %v2058
      %v2160 = vmul.f32 %v2059, %v2059
      %v2161 = vmul.f32 %v2060, %v2060
      %v2162 = vmul.f32 %v2061, %v2061
      %v2163 = vmul.f32 %v2062, %v2062
      %v2164 = vmul.f32 %v2063, %v2063
      %v2165 = vmul.f32 %v2064, %v2064
      %v2166 = vmul.f32 %v2065, %v2065
      %v2167 = vmul.f32 %v2066, %v2066
      %v2168 = vmul.f32 %v2067, %v2067
      %v2169 = vmul.f32 %v2068, %v2068
      %v2170 = vmul.f32 %v2069, %v2069
      %v2171 = vmul.f32 %v2070, %v2070
      %v2172 = vmul.f32 %v2071, %v2071
      %v2173 = vmul.f32 %v2072, %v2072
      %v2174 = vmul.f32 %v2073, %v2073
      %v2175 = vmul.f32 %v2074, %v2074
      %v2176 = vmul.f32 %v2075, %v2075
      %v2177 = vmul.f32 %v2076, %v2076
      %v2178 = vmul.f32 %v2077, %v2077
      %v2179 = vmul.f32 %v2078, %v2078
      %v2180 = vadd.f32 %v2148, %v2149
      %v2181 = vadd.f32 %v2180, %v2150
      %v2182 = vadd.f32 %v2181, %v2151
      %v2183 = vadd.f32 %v2182, %v2152
      %v2184 = vadd.f32 %v2183, %v2153
      %v2185 = vadd.f32 %v2184, %v2154
      %v2186 = vadd.f32 %v2185, %v2155
      %v2187 = vadd.f32 %v2186, %v2156
      %v2188 = vadd.f32 %v2187, %v2157
      %v2189 = vadd.f32 %v2188, %v2158
      %v2190 = vadd.f32 %v2189, %v2159
      %v2191 = vadd.f32 %v2190, %v2160
      %v2192 = vadd.f32 %v2191, %v2161
      %v2193 = vadd.f32 %v2192, %v2162
      %v2194 = vadd.f32 %v2193, %v2163
      %v2195 = vadd.f32 %v2194, %v2164
      %v2196 = vadd.f32 %v2195, %v2165
      %v2197 = vadd.f32 %v2196, %v2166
      %v2198 = vadd.f32 %v2197, %v2167
      %v2199 = vadd.f32 %v2198, %v2168
      %v2200 = vadd.f32 %v2199, %v2169
      %v2201 = vadd.f32 %v2200, %v2170
      %v2202 = vadd.f32 %v2201, %v2171
      %v2203 = vadd.f32 %v2202, %v2172
      %v2204 = vadd.f32 %v2203, %v2173
      %v2205 = vadd.f32 %v2204, %v2174
      %v2206 = vadd.f32 %v2205, %v2175
      %v2207 = vadd.f32 %v2206, %v2176
      %v2208 = vadd.f32 %v2207, %v2177
      %v2209 = vadd.f32 %v2208, %v2178
      %v2210 = vadd.f32 %v2209, %v2179
      %v2211 = vrot.slane %v2210, 4
      %v2212 = vadd.f32 %v2210, %v2211
      %v2213 = vrot.slane %v2212, 2
      %v2214 = vadd.f32 %v2212, %v2213
      %v2215 = vrot.slane %v2214, 1
      %v2216 = vadd.f32 %v2214, %v2215
      %v2217 = vsel %vm246, %v2147, %v2216
      %2218 = vst [vmem:[%s181] sm:$0x3] %v2217
      %p2219 = scmp.lt.s32.totalorder %s15, 1
      %s2220 = scalar_select %p2219, %s15, 1
      %s2221 = smul.addr %s2220, 32
      %s2222 = smul.addr %s2221, 8
      %s2223 = scalar_lea.vmem %s2, %s2222
      %p2224 = scmp.lt.s32.totalorder %s15, 1
      %s2225 = scalar_select %p2224, %s15, 1
      %s2226 = smul.addr %s2225, 2
      %s2227 = scalar_lea.vmem %s3, %s2226
      // Predicated region
      $region29: #{basic_block.3} parent=27 // pred_check
        %p2228 = pneg %p80
      $region30: #{basic_block.3} parent=27 // pred_check_branch
        %2230 = sbr.rel (%p2228) target = $region32
      $region31: #{basic_block.3} parent=27 // pred_region
        _
      $region32: #{basic_block.3} parent=27 // pred_fallthru
        _
      // Predicated region
      $region33: #{basic_block.3} parent=27 // pred_check
        %p2231 = pneg %p106
      $region34: #{basic_block.3} parent=27 // pred_check_branch
        %2233 = sbr.rel (%p2231) target = $region36
      $region35: #{basic_block.3} parent=27 // pred_region
        _
      $region36: #{basic_block.3} parent=27 // pred_fallthru
        _
    $region28: #{basic_block.3} parent=5 // pred_fallthru
      _
    %p2234 = scmp.le.s32.totalorder 2, %s10
    // Predicated region
    $region37: #{basic_block.3} parent=5 // pred_check
      %p2235 = pneg %p2234
    $region38: #{basic_block.3} parent=5 // pred_check_branch
      %2237 = sbr.rel (%p2235) target = $region40
    $region39: #{basic_block.3} parent=5 // pred_region
      %s2238 = ssub.s32 %s10, 2
      // Predicated region
      $region41: #{basic_block.3} parent=39 // pred_check
        %p2239 = pneg %p86
      $region42: #{basic_block.3} parent=39 // pred_check_branch
        %2241 = sbr.rel (%p2239) target = $region44
      $region43: #{basic_block.3} parent=39 // pred_region
        %p2242 = scmp.lt.s32.totalorder %s16, 1
        %s2243 = scalar_select %p2242, %s16, 1
        %s2244 = smul.addr %s2243, 32
        %s2245 = smul.addr %s2244, 8
        %s2246 = scalar_lea.vmem %s2, %s2245
      $region44: #{basic_block.3} parent=39 // pred_fallthru
        _
      // Predicated region
      $region45: #{basic_block.3} parent=39 // pred_check
        %p2247 = pneg %p112
      $region46: #{basic_block.3} parent=39 // pred_check_branch
        %2249 = sbr.rel (%p2247) target = $region48
      $region47: #{basic_block.3} parent=39 // pred_region
        %p2250 = scmp.lt.s32.totalorder %s16, 1
        %s2251 = scalar_select %p2250, %s16, 1
        %s2252 = smul.addr %s2251, 2
        %s2253 = scalar_lea.vmem %s3, %s2252
      $region48: #{basic_block.3} parent=39 // pred_fallthru
        _
    $region40: #{basic_block.3} parent=5 // pred_fallthru
      _
  $region6: #{basic_block.3} parent=0 // loop_footer
    %s14 = sadd.s32 1, %s10
  $region7: #{basic_block.3} parent=0 // loop_footer_branch
    %9 = sbr.rel target = $region3
  $region8: #{basic_block.3} parent=0 // loop_exit
    _

// kernel: basic_block.4
$region0: #{basic_block.4}
  #allocation0 [shape = 'u32[]', space=smem, size = 0x4, offset = 0x4, fixed_abs, tag = 'smem constant byte address 0x4 - core index']
  #allocation1 [shape = 'u32[144,128]{1,0:T(1,128)}', space=vmem, size = 0x12000, scoped, tag = 'internal scratch']
  %s0 = inlined_call_operand.vmem [shape: f32[2,16,16,128], index: 0, kind: input, shape index: {}]
  %s1 = inlined_call_operand.vmem [shape: f32[1,128], index: 1, kind: input, shape index: {}]
  %s2 = inlined_call_operand.vmem [shape: f32[1,128], index: 2, kind: input, shape index: {}]
  %s3 = inlined_call_operand.vmem [shape: bf16[3,384,128], index: 3, kind: input, shape index: {}]
  %s4 = inlined_call_operand.vmem [shape: f32[2,16,16,128], index: 4, kind: output, shape index: {0}]
  %s5 = inlined_call_operand.vmem [shape: f32[2,2,128], index: 5, kind: output, shape index: {1}]
  %6 = xla_tuple %s4, %s5
  %s7 = sld [smem:[#allocation0]]
  $region57: #{basic_block.4} parent=0
    _
  %s9 = ssub.s32 1, %s7
  %s10 = scalar_select 0, %s9, %s7
  loop: start=0, step=1, limit=4
  $region2: #{basic_block.4} parent=0 // loop_pre_header
    _
  $region3: #{basic_block.4} parent=0 // loop_header
    %s12 = sphi 0, %s16
    %p13 = scmp.ge.s32.totalorder %s12, 4
    %s22 = sphi 0, %s24
    %s25 = sphi 0, %s22
    %s26 = sphi 0, %s25
    %s42 = sphi 0, %s26
    %s46 = sphi 0, %s46
    %s48 = sphi 0, %s46
    %s49 = sphi 0, %s48
    %s63 = sphi 0, %s49
    %s67 = sphi 0, %s67
    %s69 = sphi 0, %s67
    %s70 = sphi 0, %s69
    %s84 = sphi 0, %s70
    %s88 = sphi 0, %s88
    %s90 = sphi 0, %s88
    %s91 = sphi 0, %s90
    %s105 = sphi 0, %s91
    %s111 = sphi 0, %s113
    %s114 = sphi 0, %s111
    %s115 = sphi 0, %s114
    %s131 = sphi 0, %s115
    %s137 = sphi 0, %s139
    %s140 = sphi 0, %s137
    %s141 = sphi 0, %s140
    %s157 = sphi 0, %s141
  $region4: #{basic_block.4} parent=0 // loop_header_branch
    %15 = sbr.rel (%p13) target = $region8
  $region5: #{basic_block.4} parent=0 // loop_body
    %s17 = ssub.s32 %s12, 1
    %s18 = ssub.s32 %s12, 2
    %s19 = sadd.s32 %s12, 1
    %s20 = ssub.s32 %s12, %s19
    %p21 = scmp.eq.s32.totalorder %s20, 0
    %s23 = sadd.s32 %s22, 1
    %s24 = scalar_select %p21, %s22, %s23
    %p27 = pneg %p21
    %p28 = scmp.eq.s32.totalorder %s12, 1
    %p29 = por %p27, %p28
    %p30 = scmp.ne.s32.totalorder %s22, %s25
    %p31 = scmp.eq.s32.totalorder %s12, 0
    %p32 = por %p30, %p31
    %p33 = scmp.ne.s32.totalorder %s22, %s25
    %p34 = scmp.eq.s32.totalorder %s17, 1
    %p35 = por %p33, %p34
    %p36 = scmp.ne.s32.totalorder %s25, %s26
    %p37 = scmp.eq.s32.totalorder %s17, 0
    %p38 = por %p36, %p37
    %p39 = scmp.ne.s32.totalorder %s25, %s26
    %p40 = scmp.eq.s32.totalorder %s18, 1
    %p41 = por %p39, %p40
    %p43 = scmp.ne.s32.totalorder %s26, %s42
    %p44 = scmp.eq.s32.totalorder %s18, 0
    %p45 = por %p43, %p44
    %s47 = sadd.s32 %s46, 1
    %p50 = scmp.eq.s32.totalorder %s12, 1
    %p51 = scmp.ne.s32.totalorder %s46, %s48
    %p52 = scmp.eq.s32.totalorder %s12, 0
    %p53 = por %p51, %p52
    %p54 = scmp.ne.s32.totalorder %s46, %s48
    %p55 = scmp.eq.s32.totalorder %s17, 1
    %p56 = por %p54, %p55
    %p57 = scmp.ne.s32.totalorder %s48, %s49
    %p58 = scmp.eq.s32.totalorder %s17, 0
    %p59 = por %p57, %p58
    %p60 = scmp.ne.s32.totalorder %s48, %s49
    %p61 = scmp.eq.s32.totalorder %s18, 1
    %p62 = por %p60, %p61
    %p64 = scmp.ne.s32.totalorder %s49, %s63
    %p65 = scmp.eq.s32.totalorder %s18, 0
    %p66 = por %p64, %p65
    %s68 = sadd.s32 %s67, 1
    %p71 = scmp.eq.s32.totalorder %s12, 1
    %p72 = scmp.ne.s32.totalorder %s67, %s69
    %p73 = scmp.eq.s32.totalorder %s12, 0
    %p74 = por %p72, %p73
    %p75 = scmp.ne.s32.totalorder %s67, %s69
    %p76 = scmp.eq.s32.totalorder %s17, 1
    %p77 = por %p75, %p76
    %p78 = scmp.ne.s32.totalorder %s69, %s70
    %p79 = scmp.eq.s32.totalorder %s17, 0
    %p80 = por %p78, %p79
    %p81 = scmp.ne.s32.totalorder %s69, %s70
    %p82 = scmp.eq.s32.totalorder %s18, 1
    %p83 = por %p81, %p82
    %p85 = scmp.ne.s32.totalorder %s70, %s84
    %p86 = scmp.eq.s32.totalorder %s18, 0
    %p87 = por %p85, %p86
    %s89 = sadd.s32 %s88, 1
    %p92 = scmp.eq.s32.totalorder %s12, 1
    %p93 = scmp.ne.s32.totalorder %s88, %s90
    %p94 = scmp.eq.s32.totalorder %s12, 0
    %p95 = por %p93, %p94
    %p96 = scmp.ne.s32.totalorder %s88, %s90
    %p97 = scmp.eq.s32.totalorder %s17, 1
    %p98 = por %p96, %p97
    %p99 = scmp.ne.s32.totalorder %s90, %s91
    %p100 = scmp.eq.s32.totalorder %s17, 0
    %p101 = por %p99, %p100
    %p102 = scmp.ne.s32.totalorder %s90, %s91
    %p103 = scmp.eq.s32.totalorder %s18, 1
    %p104 = por %p102, %p103
    %p106 = scmp.ne.s32.totalorder %s91, %s105
    %p107 = scmp.eq.s32.totalorder %s18, 0
    %p108 = por %p106, %p107
    %s109 = ssub.s32 %s12, %s19
    %p110 = scmp.eq.s32.totalorder %s109, 0
    %s112 = sadd.s32 %s111, 1
    %s113 = scalar_select %p110, %s111, %s112
    %p116 = pneg %p110
    %p117 = scmp.eq.s32.totalorder %s12, 1
    %p118 = por %p116, %p117
    %p119 = scmp.ne.s32.totalorder %s111, %s114
    %p120 = scmp.eq.s32.totalorder %s12, 0
    %p121 = por %p119, %p120
    %p122 = scmp.ne.s32.totalorder %s111, %s114
    %p123 = scmp.eq.s32.totalorder %s17, 1
    %p124 = por %p122, %p123
    %p125 = scmp.ne.s32.totalorder %s114, %s115
    %p126 = scmp.eq.s32.totalorder %s17, 0
    %p127 = por %p125, %p126
    %p128 = scmp.ne.s32.totalorder %s114, %s115
    %p129 = scmp.eq.s32.totalorder %s18, 1
    %p130 = por %p128, %p129
    %p132 = scmp.ne.s32.totalorder %s115, %s131
    %p133 = scmp.eq.s32.totalorder %s18, 0
    %p134 = por %p132, %p133
    %s135 = ssub.s32 %s12, %s19
    %p136 = scmp.eq.s32.totalorder %s135, 0
    %s138 = sadd.s32 %s137, 1
    %s139 = scalar_select %p136, %s137, %s138
    %p142 = pneg %p136
    %p143 = scmp.eq.s32.totalorder %s12, 1
    %p144 = por %p142, %p143
    %p145 = scmp.ne.s32.totalorder %s137, %s140
    %p146 = scmp.eq.s32.totalorder %s12, 0
    %p147 = por %p145, %p146
    %p148 = scmp.ne.s32.totalorder %s137, %s140
    %p149 = scmp.eq.s32.totalorder %s17, 1
    %p150 = por %p148, %p149
    %p151 = scmp.ne.s32.totalorder %s140, %s141
    %p152 = scmp.eq.s32.totalorder %s17, 0
    %p153 = por %p151, %p152
    %p154 = scmp.ne.s32.totalorder %s140, %s141
    %p155 = scmp.eq.s32.totalorder %s18, 1
    %p156 = por %p154, %p155
    %p158 = scmp.ne.s32.totalorder %s141, %s157
    %p159 = scmp.eq.s32.totalorder %s18, 0
    %p160 = por %p158, %p159
    %p161 = scmp.le.s32.totalorder 1, %s12
    %p162 = scmp.lt.s32.totalorder %s12, 3
    %p163 = pnand %p161, %p162
    %p164 = pneg %p163
    // Predicated region
    $region9: #{basic_block.4} parent=5 // pred_check
      _
    $region10: #{basic_block.4} parent=5 // pred_check_branch
      %166 = sbr.rel (%p163) target = $region12
    $region11: #{basic_block.4} parent=5 // pred_region
      %s167 = ssub.s32 %s12, 1
      // Predicated region
      $region13: #{basic_block.4} parent=11 // pred_check
        %p168 = pneg %p59
      $region14: #{basic_block.4} parent=11 // pred_check_branch
        %170 = sbr.rel (%p168) target = $region16
      $region15: #{basic_block.4} parent=11 // pred_region
        _
      $region16: #{basic_block.4} parent=11 // pred_fallthru
        _
      // Predicated region
      $region17: #{basic_block.4} parent=11 // pred_check
        %p171 = pneg %p80
      $region18: #{basic_block.4} parent=11 // pred_check_branch
        %173 = sbr.rel (%p171) target = $region20
      $region19: #{basic_block.4} parent=11 // pred_region
        _
      $region20: #{basic_block.4} parent=11 // pred_fallthru
        _
      // Predicated region
      $region21: #{basic_block.4} parent=11 // pred_check
        %p174 = pneg %p101
      $region22: #{basic_block.4} parent=11 // pred_check_branch
        %176 = sbr.rel (%p174) target = $region24
      $region23: #{basic_block.4} parent=11 // pred_region
        _
      $region24: #{basic_block.4} parent=11 // pred_fallthru
        _
    $region12: #{basic_block.4} parent=5 // pred_fallthru
      _
    %p177 = scmp.lt.s32.totalorder %s12, 2
    // Predicated region
    $region25: #{basic_block.4} parent=5 // pred_check
      %p178 = pneg %p177
    $region26: #{basic_block.4} parent=5 // pred_check_branch
      %180 = sbr.rel (%p178) target = $region28
    $region27: #{basic_block.4} parent=5 // pred_region
      // Predicated region
      $region29: #{basic_block.4} parent=27 // pred_check
        %p181 = pneg %p32
      $region30: #{basic_block.4} parent=27 // pred_check_branch
        %183 = sbr.rel (%p181) target = $region32
      $region31: #{basic_block.4} parent=27 // pred_region
        %p184 = scmp.lt.s32.totalorder %s12, 1
        %s185 = scalar_select %p184, %s12, 1
        %s186 = smul.addr %s185, 32
        %s187 = smul.addr %s186, 8
        %s188 = scalar_lea.vmem %s0, %s187
      $region32: #{basic_block.4} parent=27 // pred_fallthru
        _
    $region28: #{basic_block.4} parent=5 // pred_fallthru
      _
    %p189 = scmp.le.s32.totalorder 1, %s12
    %p190 = scmp.lt.s32.totalorder %s12, 3
    %p191 = pnand %p189, %p190
    %p192 = pneg %p191
    // Predicated region
    $region33: #{basic_block.4} parent=5 // pred_check
      _
    $region34: #{basic_block.4} parent=5 // pred_check_branch
      %194 = sbr.rel (%p191) target = $region36
    $region35: #{basic_block.4} parent=5 // pred_region
      %s195 = ssub.s32 %s12, 1
      %p196 = scmp.lt.s32.totalorder %s17, 1
      %s197 = scalar_select %p196, %s17, 1
      %s198 = smul.addr %s197, 32
      %s199 = smul.addr %s198, 8
      %s200 = scalar_lea.vmem %s0, %s199
      %p201 = pneg %p38
      %p202 = pneg %p35
      %p203 = pneg %p59
      %p204 = pneg %p56
      %p205 = pneg %p80
      %p206 = pneg %p77
      %p207 = pneg %p101
      %p208 = pneg %p98
      %p209 = pneg %p127
      %p210 = pneg %p124
      %p211 = scmp.lt.s32.totalorder %s17, 1
      %s212 = scalar_select %p211, %s17, 1
      %s213 = smul.addr %s212, 32
      %s214 = smul.addr %s213, 8
      %s215 = scalar_lea.vmem %s4, %s214
      %p216 = pneg %p153
      %p217 = pneg %p150
      %p218 = scmp.lt.s32.totalorder %s17, 1
      %s219 = scalar_select %p218, %s17, 1
      %s220 = smul.addr %s219, 2
      %s221 = scalar_lea.vmem %s5, %s220
      %p222 = scmp.lt.s32.totalorder %s17, 1
      %s223 = scalar_select %p222, %s17, 1
      %s224 = smul.addr %s223, 32
      %s225 = smul.addr %s224, 8
      %s226 = scalar_lea.vmem %s0, %s225
      %p227 = scmp.lt.s32.totalorder %s17, 1
      %s228 = scalar_select %p227, %s17, 1
      %s229 = smul.addr %s228, 32
      %s230 = smul.addr %s229, 8
      %s231 = scalar_lea.vmem %s4, %s230
      %p232 = scmp.lt.s32.totalorder %s17, 1
      %s233 = scalar_select %p232, %s17, 1
      %s234 = smul.addr %s233, 2
      %s235 = scalar_lea.vmem %s5, %s234
      %v237 = vld [vmem:[%s1] sm:$0x1]
      %v238 = vld [vmem:[%s2] sm:$0x1]
      %v239 = vld [vmem:[%s226] sm:$0xff]
      %v240 = vld [vmem:[%s226 + $0x8] sm:$0xff]
      %v241 = vld [vmem:[%s226 + $0x10] sm:$0xff]
      %v242 = vld [vmem:[%s226 + $0x18] sm:$0xff]
      %v243 = vld [vmem:[%s226 + $0x20] sm:$0xff]
      %v244 = vld [vmem:[%s226 + $0x28] sm:$0xff]
      %v245 = vld [vmem:[%s226 + $0x30] sm:$0xff]
      %v246 = vld [vmem:[%s226 + $0x38] sm:$0xff]
      %v247 = vld [vmem:[%s226 + $0x40] sm:$0xff]
      %v248 = vld [vmem:[%s226 + $0x48] sm:$0xff]
      %v249 = vld [vmem:[%s226 + $0x50] sm:$0xff]
      %v250 = vld [vmem:[%s226 + $0x58] sm:$0xff]
      %v251 = vld [vmem:[%s226 + $0x60] sm:$0xff]
      %v252 = vld [vmem:[%s226 + $0x68] sm:$0xff]
      %v253 = vld [vmem:[%s226 + $0x70] sm:$0xff]
      %v254 = vld [vmem:[%s226 + $0x78] sm:$0xff]
      %v255 = vld [vmem:[%s226 + $0x80] sm:$0xff]
      %v256 = vld [vmem:[%s226 + $0x88] sm:$0xff]
      %v257 = vld [vmem:[%s226 + $0x90] sm:$0xff]
      %v258 = vld [vmem:[%s226 + $0x98] sm:$0xff]
      %v259 = vld [vmem:[%s226 + $0xa0] sm:$0xff]
      %v260 = vld [vmem:[%s226 + $0xa8] sm:$0xff]
      %v261 = vld [vmem:[%s226 + $0xb0] sm:$0xff]
      %v262 = vld [vmem:[%s226 + $0xb8] sm:$0xff]
      %v263 = vld [vmem:[%s226 + $0xc0] sm:$0xff]
      %v264 = vld [vmem:[%s226 + $0xc8] sm:$0xff]
      %v265 = vld [vmem:[%s226 + $0xd0] sm:$0xff]
      %v266 = vld [vmem:[%s226 + $0xd8] sm:$0xff]
      %v267 = vld [vmem:[%s226 + $0xe0] sm:$0xff]
      %v268 = vld [vmem:[%s226 + $0xe8] sm:$0xff]
      %v269 = vld [vmem:[%s226 + $0xf0] sm:$0xff]
      %v270 = vld [vmem:[%s226 + $0xf8] sm:$0xff]
      %v272 = vlaneseq
      %v273 = vshrl.u32 %v272, 7
      %v274 = vsub.s32 0, %v273
      %v275 = vrot.slane %v237, %v274
      %v277 = vmul.f32 %v239, %v275
      %v278 = vmul.f32 %v240, %v275
      %v279 = vmul.f32 %v241, %v275
      %v280 = vmul.f32 %v242, %v275
      %v281 = vmul.f32 %v243, %v275
      %v282 = vmul.f32 %v244, %v275
      %v283 = vmul.f32 %v245, %v275
      %v284 = vmul.f32 %v246, %v275
      %v285 = vmul.f32 %v247, %v275
      %v286 = vmul.f32 %v248, %v275
      %v287 = vmul.f32 %v249, %v275
      %v288 = vmul.f32 %v250, %v275
      %v289 = vmul.f32 %v251, %v275
      %v290 = vmul.f32 %v252, %v275
      %v291 = vmul.f32 %v253, %v275
      %v292 = vmul.f32 %v254, %v275
      %v293 = vmul.f32 %v255, %v275
      %v294 = vmul.f32 %v256, %v275
      %v295 = vmul.f32 %v257, %v275
      %v296 = vmul.f32 %v258, %v275
      %v297 = vmul.f32 %v259, %v275
      %v298 = vmul.f32 %v260, %v275
      %v299 = vmul.f32 %v261, %v275
      %v300 = vmul.f32 %v262, %v275
      %v301 = vmul.f32 %v263, %v275
      %v302 = vmul.f32 %v264, %v275
      %v303 = vmul.f32 %v265, %v275
      %v304 = vmul.f32 %v266, %v275
      %v305 = vmul.f32 %v267, %v275
      %v306 = vmul.f32 %v268, %v275
      %v307 = vmul.f32 %v269, %v275
      %v308 = vmul.f32 %v270, %v275
      %v310 = vlaneseq
      %v311 = vshrl.u32 %v310, 7
      %v312 = vsub.s32 0, %v311
      %v313 = vrot.slane %v238, %v312
      %v315 = vadd.f32 %v277, %v313
      %v316 = vadd.f32 %v278, %v313
      %v317 = vadd.f32 %v279, %v313
      %v318 = vadd.f32 %v280, %v313
      %v319 = vadd.f32 %v281, %v313
      %v320 = vadd.f32 %v282, %v313
      %v321 = vadd.f32 %v283, %v313
      %v322 = vadd.f32 %v284, %v313
      %v323 = vadd.f32 %v285, %v313
      %v324 = vadd.f32 %v286, %v313
      %v325 = vadd.f32 %v287, %v313
      %v326 = vadd.f32 %v288, %v313
      %v327 = vadd.f32 %v289, %v313
      %v328 = vadd.f32 %v290, %v313
      %v329 = vadd.f32 %v291, %v313
      %v330 = vadd.f32 %v292, %v313
      %v331 = vadd.f32 %v293, %v313
      %v332 = vadd.f32 %v294, %v313
      %v333 = vadd.f32 %v295, %v313
      %v334 = vadd.f32 %v296, %v313
      %v335 = vadd.f32 %v297, %v313
      %v336 = vadd.f32 %v298, %v313
      %v337 = vadd.f32 %v299, %v313
      %v338 = vadd.f32 %v300, %v313
      %v339 = vadd.f32 %v301, %v313
      %v340 = vadd.f32 %v302, %v313
      %v341 = vadd.f32 %v303, %v313
      %v342 = vadd.f32 %v304, %v313
      %v343 = vadd.f32 %v305, %v313
      %v344 = vadd.f32 %v306, %v313
      %v345 = vadd.f32 %v307, %v313
      %v346 = vadd.f32 %v308, %v313
      %v347 = vmax.f32 %v315, 0.0
      %v348 = vmax.f32 %v316, 0.0
      %v349 = vmax.f32 %v317, 0.0
      %v350 = vmax.f32 %v318, 0.0
      %v351 = vmax.f32 %v319, 0.0
      %v352 = vmax.f32 %v320, 0.0
      %v353 = vmax.f32 %v321, 0.0
      %v354 = vmax.f32 %v322, 0.0
      %v355 = vmax.f32 %v323, 0.0
      %v356 = vmax.f32 %v324, 0.0
      %v357 = vmax.f32 %v325, 0.0
      %v358 = vmax.f32 %v326, 0.0
      %v359 = vmax.f32 %v327, 0.0
      %v360 = vmax.f32 %v328, 0.0
      %v361 = vmax.f32 %v329, 0.0
      %v362 = vmax.f32 %v330, 0.0
      %v363 = vmax.f32 %v331, 0.0
      %v364 = vmax.f32 %v332, 0.0
      %v365 = vmax.f32 %v333, 0.0
      %v366 = vmax.f32 %v334, 0.0
      %v367 = vmax.f32 %v335, 0.0
      %v368 = vmax.f32 %v336, 0.0
      %v369 = vmax.f32 %v337, 0.0
      %v370 = vmax.f32 %v338, 0.0
      %v371 = vmax.f32 %v339, 0.0
      %v372 = vmax.f32 %v340, 0.0
      %v373 = vmax.f32 %v341, 0.0
      %v374 = vmax.f32 %v342, 0.0
      %v375 = vmax.f32 %v343, 0.0
      %v376 = vmax.f32 %v344, 0.0
      %v377 = vmax.f32 %v345, 0.0
      %v378 = vmax.f32 %v346, 0.0
      %vm410 = vcmask 1040384
      %v411 = vrot.slane 0.0, 7
      %v412 = vsel %vm410, %v411, %v411
      %v413 = vrot.slane %v347, 7
      %v414 = vrot.slane %v348, 7
      %v415 = vsel %vm410, %v413, %v414
      %v416 = vrot.slane %v349, 7
      %v417 = vrot.slane %v350, 7
      %v418 = vsel %vm410, %v416, %v417
      %v419 = vrot.slane %v351, 7
      %v420 = vrot.slane %v352, 7
      %v421 = vsel %vm410, %v419, %v420
      %v422 = vrot.slane %v353, 7
      %v423 = vrot.slane %v354, 7
      %v424 = vsel %vm410, %v422, %v423
      %v425 = vrot.slane %v355, 7
      %v426 = vrot.slane %v356, 7
      %v427 = vsel %vm410, %v425, %v426
      %v428 = vrot.slane %v357, 7
      %v429 = vrot.slane %v358, 7
      %v430 = vsel %vm410, %v428, %v429
      %v431 = vrot.slane %v359, 7
      %v432 = vrot.slane %v360, 7
      %v433 = vsel %vm410, %v431, %v432
      %v434 = vrot.slane %v361, 7
      %v435 = vrot.slane %v362, 7
      %v436 = vsel %vm410, %v434, %v435
      %v437 = vrot.slane %v363, 7
      %v438 = vrot.slane %v364, 7
      %v439 = vsel %vm410, %v437, %v438
      %v440 = vrot.slane %v365, 7
      %v441 = vrot.slane %v366, 7
      %v442 = vsel %vm410, %v440, %v441
      %v443 = vrot.slane %v367, 7
      %v444 = vrot.slane %v368, 7
      %v445 = vsel %vm410, %v443, %v444
      %v446 = vrot.slane %v369, 7
      %v447 = vrot.slane %v370, 7
      %v448 = vsel %vm410, %v446, %v447
      %v449 = vrot.slane %v371, 7
      %v450 = vrot.slane %v372, 7
      %v451 = vsel %vm410, %v449, %v450
      %v452 = vrot.slane %v373, 7
      %v453 = vrot.slane %v374, 7
      %v454 = vsel %vm410, %v452, %v453
      %v455 = vrot.slane %v375, 7
      %v456 = vrot.slane %v376, 7
      %v457 = vsel %vm410, %v455, %v456
      %v490 = vsel %vm410, 0.0, %v411
      %v491 = vsel %vm410, 0.0, %v413
      %v492 = vsel %vm410, 0.0, %v416
      %v493 = vsel %vm410, 0.0, %v419
      %v494 = vsel %vm410, 0.0, %v422
      %v495 = vsel %vm410, 0.0, %v425
      %v496 = vsel %vm410, 0.0, %v428
      %v497 = vsel %vm410, 0.0, %v431
      %v498 = vsel %vm410, 0.0, %v434
      %v499 = vsel %vm410, 0.0, %v437
      %v500 = vsel %vm410, 0.0, %v440
      %v501 = vsel %vm410, 0.0, %v443
      %v502 = vsel %vm410, 0.0, %v446
      %v503 = vsel %vm410, 0.0, %v449
      %v504 = vsel %vm410, 0.0, %v452
      %v505 = vsel %vm410, 0.0, %v455
      %vm506 = vcmask 1046528
      %v507 = vrot.slane 0.0, 1
      %v508 = vsel %vm506, %v507, %v507
      %v509 = vrot.slane %v347, 1
      %v510 = vrot.slane %v348, 1
      %v511 = vsel %vm506, %v509, %v510
      %v512 = vrot.slane %v349, 1
      %v513 = vrot.slane %v350, 1
      %v514 = vsel %vm506, %v512, %v513
      %v515 = vrot.slane %v351, 1
      %v516 = vrot.slane %v352, 1
      %v517 = vsel %vm506, %v515, %v516
      %v518 = vrot.slane %v353, 1
      %v519 = vrot.slane %v354, 1
      %v520 = vsel %vm506, %v518, %v519
      %v521 = vrot.slane %v355, 1
      %v522 = vrot.slane %v356, 1
      %v523 = vsel %vm506, %v521, %v522
      %v524 = vrot.slane %v357, 1
      %v525 = vrot.slane %v358, 1
      %v526 = vsel %vm506, %v524, %v525
      %v527 = vrot.slane %v359, 1
      %v528 = vrot.slane %v360, 1
      %v529 = vsel %vm506, %v527, %v528
      %v530 = vrot.slane %v361, 1
      %v531 = vrot.slane %v362, 1
      %v532 = vsel %vm506, %v530, %v531
      %v533 = vrot.slane %v363, 1
      %v534 = vrot.slane %v364, 1
      %v535 = vsel %vm506, %v533, %v534
      %v536 = vrot.slane %v365, 1
      %v537 = vrot.slane %v366, 1
      %v538 = vsel %vm506, %v536, %v537
      %v539 = vrot.slane %v367, 1
      %v540 = vrot.slane %v368, 1
      %v541 = vsel %vm506, %v539, %v540
      %v542 = vrot.slane %v369, 1
      %v543 = vrot.slane %v370, 1
      %v544 = vsel %vm506, %v542, %v543
      %v545 = vrot.slane %v371, 1
      %v546 = vrot.slane %v372, 1
      %v547 = vsel %vm506, %v545, %v546
      %v548 = vrot.slane %v373, 1
      %v549 = vrot.slane %v374, 1
      %v550 = vsel %vm506, %v548, %v549
      %v551 = vrot.slane %v375, 1
      %v552 = vrot.slane %v376, 1
      %v553 = vsel %vm506, %v551, %v552
      %v586 = vsel %vm506, %v507, 0.0
      %v587 = vsel %vm506, %v510, 0.0
      %v588 = vsel %vm506, %v513, 0.0
      %v589 = vsel %vm506, %v516, 0.0
      %v590 = vsel %vm506, %v519, 0.0
      %v591 = vsel %vm506, %v522, 0.0
      %v592 = vsel %vm506, %v525, 0.0
      %v593 = vsel %vm506, %v528, 0.0
      %v594 = vsel %vm506, %v531, 0.0
      %v595 = vsel %vm506, %v534, 0.0
      %v596 = vsel %vm506, %v537, 0.0
      %v597 = vsel %vm506, %v540, 0.0
      %v598 = vsel %vm506, %v543, 0.0
      %v599 = vsel %vm506, %v546, 0.0
      %v600 = vsel %vm506, %v549, 0.0
      %v601 = vsel %vm506, %v552, 0.0
      %v602 = vpack.c.bf16 %v412, %v490
      %v603 = vpack.c.bf16 0.0, 0.0
      %v604 = vpack.c.bf16 %v586, %v508
      %v605 = vpack.c.bf16 %v415, %v491
      %v606 = vpack.c.bf16 %v348, %v347
      %v607 = vpack.c.bf16 %v587, %v511
      %v608 = vpack.c.bf16 %v418, %v492
      %v609 = vpack.c.bf16 %v350, %v349
      %v610 = vpack.c.bf16 %v588, %v514
      %v611 = vpack.c.bf16 %v421, %v493
      %v612 = vpack.c.bf16 %v352, %v351
      %v613 = vpack.c.bf16 %v589, %v517
      %v614 = vpack.c.bf16 %v424, %v494
      %v615 = vpack.c.bf16 %v354, %v353
      %v616 = vpack.c.bf16 %v590, %v520
      %v617 = vpack.c.bf16 %v427, %v495
      %v618 = vpack.c.bf16 %v356, %v355
      %v619 = vpack.c.bf16 %v591, %v523
      %v620 = vpack.c.bf16 %v430, %v496
      %v621 = vpack.c.bf16 %v358, %v357
      %v622 = vpack.c.bf16 %v592, %v526
      %v623 = vpack.c.bf16 %v433, %v497
      %v624 = vpack.c.bf16 %v360, %v359
      %v625 = vpack.c.bf16 %v593, %v529
      %v626 = vpack.c.bf16 %v436, %v498
      %v627 = vpack.c.bf16 %v362, %v361
      %v628 = vpack.c.bf16 %v594, %v532
      %v629 = vpack.c.bf16 %v439, %v499
      %v630 = vpack.c.bf16 %v364, %v363
      %v631 = vpack.c.bf16 %v595, %v535
      %v632 = vpack.c.bf16 %v442, %v500
      %v633 = vpack.c.bf16 %v366, %v365
      %v634 = vpack.c.bf16 %v596, %v538
      %v635 = vpack.c.bf16 %v445, %v501
      %v636 = vpack.c.bf16 %v368, %v367
      %v637 = vpack.c.bf16 %v597, %v541
      %v638 = vpack.c.bf16 %v448, %v502
      %v639 = vpack.c.bf16 %v370, %v369
      %v640 = vpack.c.bf16 %v598, %v544
      %v641 = vpack.c.bf16 %v451, %v503
      %v642 = vpack.c.bf16 %v372, %v371
      %v643 = vpack.c.bf16 %v599, %v547
      %v644 = vpack.c.bf16 %v454, %v504
      %v645 = vpack.c.bf16 %v374, %v373
      %v646 = vpack.c.bf16 %v600, %v550
      %v647 = vpack.c.bf16 %v457, %v505
      %v648 = vpack.c.bf16 %v376, %v375
      %v649 = vpack.c.bf16 %v601, %v553
      %v650 = vld [vmem:[%s3] sm:$0xf]
      %v651 = vld [vmem:[%s3 + $0x4] sm:$0xf]
      %v652 = vld [vmem:[%s3 + $0x8] sm:$0xf]
      %v653 = vld [vmem:[%s3 + $0xc] sm:$0xf]
      %v654 = vld [vmem:[%s3 + $0x10] sm:$0xf]
      %v655 = vld [vmem:[%s3 + $0x14] sm:$0xf]
      %v656 = vld [vmem:[%s3 + $0x18] sm:$0xf]
      %v657 = vld [vmem:[%s3 + $0x1c] sm:$0xf]
      %v658 = vld [vmem:[%s3 + $0x20] sm:$0xf]
      %v659 = vld [vmem:[%s3 + $0x24] sm:$0xf]
      %v660 = vld [vmem:[%s3 + $0x28] sm:$0xf]
      %v661 = vld [vmem:[%s3 + $0x2c] sm:$0xf]
      %v662 = vld [vmem:[%s3 + $0x30] sm:$0xf]
      %v663 = vld [vmem:[%s3 + $0x34] sm:$0xf]
      %v664 = vld [vmem:[%s3 + $0x38] sm:$0xf]
      %v665 = vld [vmem:[%s3 + $0x3c] sm:$0xf]
      %v666 = vld [vmem:[%s3 + $0x40] sm:$0xf]
      %v667 = vld [vmem:[%s3 + $0x44] sm:$0xf]
      %v668 = vld [vmem:[%s3 + $0x48] sm:$0xf]
      %v669 = vld [vmem:[%s3 + $0x4c] sm:$0xf]
      %v670 = vld [vmem:[%s3 + $0x50] sm:$0xf]
      %v671 = vld [vmem:[%s3 + $0x54] sm:$0xf]
      %v672 = vld [vmem:[%s3 + $0x58] sm:$0xf]
      %v673 = vld [vmem:[%s3 + $0x5c] sm:$0xf]
      %v674 = vld [vmem:[%s3 + $0x60] sm:$0xf]
      %v675 = vld [vmem:[%s3 + $0x64] sm:$0xf]
      %v676 = vld [vmem:[%s3 + $0x68] sm:$0xf]
      %v677 = vld [vmem:[%s3 + $0x6c] sm:$0xf]
      %v678 = vld [vmem:[%s3 + $0x70] sm:$0xf]
      %v679 = vld [vmem:[%s3 + $0x74] sm:$0xf]
      %v680 = vld [vmem:[%s3 + $0x78] sm:$0xf]
      %v681 = vld [vmem:[%s3 + $0x7c] sm:$0xf]
      %v682 = vld [vmem:[%s3 + $0x80] sm:$0xf]
      %v683 = vld [vmem:[%s3 + $0x84] sm:$0xf]
      %v684 = vld [vmem:[%s3 + $0x88] sm:$0xf]
      %v685 = vld [vmem:[%s3 + $0x8c] sm:$0xf]
      %v686 = vld [vmem:[%s3 + $0x90] sm:$0xf]
      %v687 = vld [vmem:[%s3 + $0x94] sm:$0xf]
      %v688 = vld [vmem:[%s3 + $0x98] sm:$0xf]
      %v689 = vld [vmem:[%s3 + $0x9c] sm:$0xf]
      %v690 = vld [vmem:[%s3 + $0xa0] sm:$0xf]
      %v691 = vld [vmem:[%s3 + $0xa4] sm:$0xf]
      %v692 = vld [vmem:[%s3 + $0xa8] sm:$0xf]
      %v693 = vld [vmem:[%s3 + $0xac] sm:$0xf]
      %v694 = vld [vmem:[%s3 + $0xb0] sm:$0xf]
      %v695 = vld [vmem:[%s3 + $0xb4] sm:$0xf]
      %v696 = vld [vmem:[%s3 + $0xb8] sm:$0xf]
      %v697 = vld [vmem:[%s3 + $0xbc] sm:$0xf]
      %v700 = vrot.slane %v377, 7
      %v701 = vrot.slane %v378, 7
      %v702 = vsel %vm410, %v700, %v701
      %v705 = vsel %vm410, 0.0, %v700
      %v706 = vrot.slane %v377, 1
      %v707 = vrot.slane %v378, 1
      %v708 = vsel %vm506, %v706, %v707
      %v711 = vsel %vm506, %v707, 0.0
      %v712 = vpack.c.bf16 %v702, %v705
      %v713 = vpack.c.bf16 %v378, %v377
      %v714 = vpack.c.bf16 %v711, %v708
      %s715 = scalar_lea.vmem %s3, 192
      %v716 = vld [vmem:[%s715] sm:$0xf]
      %v717 = vld [vmem:[%s715 + $0x4] sm:$0xf]
      %v718 = vld [vmem:[%s715 + $0x8] sm:$0xf]
      %v719 = vld [vmem:[%s715 + $0xc] sm:$0xf]
      %v720 = vld [vmem:[%s715 + $0x10] sm:$0xf]
      %v721 = vld [vmem:[%s715 + $0x14] sm:$0xf]
      %v722 = vld [vmem:[%s715 + $0x18] sm:$0xf]
      %v723 = vld [vmem:[%s715 + $0x1c] sm:$0xf]
      %v724 = vld [vmem:[%s715 + $0x20] sm:$0xf]
      %v725 = vld [vmem:[%s715 + $0x24] sm:$0xf]
      %v726 = vld [vmem:[%s715 + $0x28] sm:$0xf]
      %v727 = vld [vmem:[%s715 + $0x2c] sm:$0xf]
      %v728 = vld [vmem:[%s715 + $0x30] sm:$0xf]
      %v729 = vld [vmem:[%s715 + $0x34] sm:$0xf]
      %v730 = vld [vmem:[%s715 + $0x38] sm:$0xf]
      %v731 = vld [vmem:[%s715 + $0x3c] sm:$0xf]
      %v732 = vld [vmem:[%s715 + $0x40] sm:$0xf]
      %v733 = vld [vmem:[%s715 + $0x44] sm:$0xf]
      %v734 = vld [vmem:[%s715 + $0x48] sm:$0xf]
      %v735 = vld [vmem:[%s715 + $0x4c] sm:$0xf]
      %v736 = vld [vmem:[%s715 + $0x50] sm:$0xf]
      %v737 = vld [vmem:[%s715 + $0x54] sm:$0xf]
      %v738 = vld [vmem:[%s715 + $0x58] sm:$0xf]
      %v739 = vld [vmem:[%s715 + $0x5c] sm:$0xf]
      %v740 = vld [vmem:[%s715 + $0x60] sm:$0xf]
      %v741 = vld [vmem:[%s715 + $0x64] sm:$0xf]
      %v742 = vld [vmem:[%s715 + $0x68] sm:$0xf]
      %v743 = vld [vmem:[%s715 + $0x6c] sm:$0xf]
      %v744 = vld [vmem:[%s715 + $0x70] sm:$0xf]
      %v745 = vld [vmem:[%s715 + $0x74] sm:$0xf]
      %v746 = vld [vmem:[%s715 + $0x78] sm:$0xf]
      %v747 = vld [vmem:[%s715 + $0x7c] sm:$0xf]
      %v748 = vld [vmem:[%s715 + $0x80] sm:$0xf]
      %v749 = vld [vmem:[%s715 + $0x84] sm:$0xf]
      %v750 = vld [vmem:[%s715 + $0x88] sm:$0xf]
      %v751 = vld [vmem:[%s715 + $0x8c] sm:$0xf]
      %v752 = vld [vmem:[%s715 + $0x90] sm:$0xf]
      %v753 = vld [vmem:[%s715 + $0x94] sm:$0xf]
      %v754 = vld [vmem:[%s715 + $0x98] sm:$0xf]
      %v755 = vld [vmem:[%s715 + $0x9c] sm:$0xf]
      %v756 = vld [vmem:[%s715 + $0xa0] sm:$0xf]
      %v757 = vld [vmem:[%s715 + $0xa4] sm:$0xf]
      %v758 = vld [vmem:[%s715 + $0xa8] sm:$0xf]
      %v759 = vld [vmem:[%s715 + $0xac] sm:$0xf]
      %v760 = vld [vmem:[%s715 + $0xb0] sm:$0xf]
      %v761 = vld [vmem:[%s715 + $0xb4] sm:$0xf]
      %v762 = vld [vmem:[%s715 + $0xb8] sm:$0xf]
      %v763 = vld [vmem:[%s715 + $0xbc] sm:$0xf]
      %v812 = vunpack.c.l.b16 %v716
      %v813 = vunpack.c.l.b16 %v717
      %v814 = vunpack.c.l.b16 %v718
      %v815 = vunpack.c.l.b16 %v719
      %v816 = vunpack.c.l.b16 %v720
      %v817 = vunpack.c.l.b16 %v721
      %v818 = vunpack.c.l.b16 %v722
      %v819 = vunpack.c.l.b16 %v723
      %v820 = vunpack.c.l.b16 %v724
      %v821 = vunpack.c.l.b16 %v725
      %v822 = vunpack.c.l.b16 %v726
      %v823 = vunpack.c.l.b16 %v727
      %v824 = vunpack.c.l.b16 %v728
      %v825 = vunpack.c.l.b16 %v729
      %v826 = vunpack.c.l.b16 %v730
      %v827 = vunpack.c.l.b16 %v731
      %v828 = vunpack.c.l.b16 %v732
      %v829 = vunpack.c.l.b16 %v733
      %v830 = vunpack.c.l.b16 %v734
      %v831 = vunpack.c.l.b16 %v735
      %v832 = vunpack.c.l.b16 %v736
      %v833 = vunpack.c.l.b16 %v737
      %v834 = vunpack.c.l.b16 %v738
      %v835 = vunpack.c.l.b16 %v739
      %v836 = vunpack.c.l.b16 %v740
      %v837 = vunpack.c.l.b16 %v741
      %v838 = vunpack.c.l.b16 %v742
      %v839 = vunpack.c.l.b16 %v743
      %v840 = vunpack.c.l.b16 %v744
      %v841 = vunpack.c.l.b16 %v745
      %v842 = vunpack.c.l.b16 %v746
      %v843 = vunpack.c.l.b16 %v747
      %v844 = vunpack.c.l.b16 %v748
      %v845 = vunpack.c.l.b16 %v749
      %v846 = vunpack.c.l.b16 %v750
      %v847 = vunpack.c.l.b16 %v751
      %v848 = vunpack.c.l.b16 %v752
      %v849 = vunpack.c.l.b16 %v753
      %v850 = vunpack.c.l.b16 %v754
      %v851 = vunpack.c.l.b16 %v755
      %v852 = vunpack.c.l.b16 %v756
      %v853 = vunpack.c.l.b16 %v757
      %v854 = vunpack.c.l.b16 %v758
      %v855 = vunpack.c.l.b16 %v759
      %v856 = vunpack.c.l.b16 %v760
      %v857 = vunpack.c.l.b16 %v761
      %v858 = vunpack.c.l.b16 %v762
      %v859 = vunpack.c.l.b16 %v763
      %v860 = vpack.c.b16 %v813, %v812
      %v861 = vpack.c.b16 %v815, %v814
      %v862 = vpack.c.b16 %v817, %v816
      %v863 = vpack.c.b16 %v819, %v818
      %v864 = vpack.c.b16 %v821, %v820
      %v865 = vpack.c.b16 %v823, %v822
      %v866 = vpack.c.b16 %v825, %v824
      %v867 = vpack.c.b16 %v827, %v826
      %v868 = vpack.c.b16 %v829, %v828
      %v869 = vpack.c.b16 %v831, %v830
      %v870 = vpack.c.b16 %v833, %v832
      %v871 = vpack.c.b16 %v835, %v834
      %v872 = vpack.c.b16 %v837, %v836
      %v873 = vpack.c.b16 %v839, %v838
      %v874 = vpack.c.b16 %v841, %v840
      %v875 = vpack.c.b16 %v843, %v842
      %v876 = vpack.c.b16 %v845, %v844
      %v877 = vpack.c.b16 %v847, %v846
      %v878 = vpack.c.b16 %v849, %v848
      %v879 = vpack.c.b16 %v851, %v850
      %v880 = vpack.c.b16 %v853, %v852
      %v881 = vpack.c.b16 %v855, %v854
      %v882 = vpack.c.b16 %v857, %v856
      %v883 = vpack.c.b16 %v859, %v858
      %908 = vmatprep.subr.bf16.mxu0 0
      %909 = vmatpush1.bf16.msra.mxu0 %v860
      %910 = vmatprep.subr.bf16.mxu0 0
      %911 = vmatpush1.bf16.msra.mxu0 %v861
      %912 = vmatprep.subr.bf16.mxu0 0
      %913 = vmatpush1.bf16.msra.mxu0 %v862
      %914 = vmatprep.subr.bf16.mxu0 0
      %915 = vmatpush1.bf16.msra.mxu0 %v863
      %916 = vmatprep.subr.bf16.mxu0 0
      %917 = vmatpush1.bf16.msra.mxu0 %v864
      %918 = vmatprep.subr.bf16.mxu0 0
      %919 = vmatpush1.bf16.msra.mxu0 %v865
      %920 = vmatprep.subr.bf16.mxu0 0
      %921 = vmatpush1.bf16.msra.mxu0 %v866
      %922 = vmatprep.subr.bf16.mxu0 0
      %923 = vmatpush1.bf16.msra.mxu0 %v867
      %924 = vmatprep.subr.bf16.mxu0 0
      %925 = vmatpush1.bf16.msra.mxu0 %v868
      %926 = vmatprep.subr.bf16.mxu0 0
      %927 = vmatpush1.bf16.msra.mxu0 %v869
      %928 = vmatprep.subr.bf16.mxu0 0
      %929 = vmatpush1.bf16.msra.mxu0 %v870
      %930 = vmatprep.subr.bf16.mxu0 0
      %931 = vmatpush1.bf16.msra.mxu0 %v871
      %932 = vmatprep.subr.bf16.mxu0 0
      %933 = vmatpush1.bf16.msra.mxu0 %v872
      %934 = vmatprep.subr.bf16.mxu0 0
      %935 = vmatpush1.bf16.msra.mxu0 %v873
      %936 = vmatprep.subr.bf16.mxu0 0
      %937 = vmatpush1.bf16.msra.mxu0 %v874
      %938 = vmatprep.subr.bf16.mxu0 0
      %939 = vmatpush1.bf16.msra.mxu0 %v875
      %940 = vmatprep.mubr.bf16.mxu0 %v606
      %941 = vmatmul.mubr.bf16.gmra.mrb[0].mxu0 %v605
      %v942 = vpop.f32.mrb[0].mxu0
      %v943 = vadd.f32 0.0, %v942
      %v944 = vpop.f32.mrb[0].mxu0
      %v945 = vpop.f32.mrb[0].mxu0
      %v946 = vadd.f32 0.0, %v945
      %v947 = vpop.f32.mrb[0].mxu0
      %948 = vmatprep.mubr.bf16.mxu0 %v609
      %949 = vmatmul.mubr.bf16.gmra.mrb[0].mxu0 %v608
      %v950 = vpop.f32.mrb[0].mxu0
      %v951 = vadd.f32 0.0, %v950
      %v952 = vpop.f32.mrb[0].mxu0
      %v953 = vpop.f32.mrb[0].mxu0
      %v954 = vadd.f32 0.0, %v953
      %v955 = vpop.f32.mrb[0].mxu0
      %956 = vmatprep.mubr.bf16.mxu0 %v612
      %957 = vmatmul.mubr.bf16.gmra.mrb[0].mxu0 %v611
      %v958 = vpop.f32.mrb[0].mxu0
      %v959 = vadd.f32 0.0, %v958
      %v960 = vpop.f32.mrb[0].mxu0
      %v961 = vpop.f32.mrb[0].mxu0
      %v962 = vadd.f32 0.0, %v961
      %v963 = vpop.f32.mrb[0].mxu0
      %964 = vmatprep.mubr.bf16.mxu0 %v615
      %965 = vmatmul.mubr.bf16.gmra.mrb[0].mxu0 %v614
      %v966 = vpop.f32.mrb[0].mxu0
      %v967 = vadd.f32 0.0, %v966
      %v968 = vpop.f32.mrb[0].mxu0
      %v969 = vpop.f32.mrb[0].mxu0
      %v970 = vadd.f32 0.0, %v969
      %v971 = vpop.f32.mrb[0].mxu0
      %972 = vmatprep.mubr.bf16.mxu0 %v618
      %973 = vmatmul.mubr.bf16.gmra.mrb[0].mxu0 %v617
      %v974 = vpop.f32.mrb[0].mxu0
      %v975 = vadd.f32 0.0, %v974
      %v976 = vpop.f32.mrb[0].mxu0
      %v977 = vpop.f32.mrb[0].mxu0
      %v978 = vadd.f32 0.0, %v977
      %v979 = vpop.f32.mrb[0].mxu0
      %980 = vmatprep.mubr.bf16.mxu0 %v621
      %981 = vmatmul.mubr.bf16.gmra.mrb[0].mxu0 %v620
      %v982 = vpop.f32.mrb[0].mxu0
      %v983 = vadd.f32 0.0, %v982
      %v984 = vpop.f32.mrb[0].mxu0
      %v985 = vpop.f32.mrb[0].mxu0
      %v986 = vadd.f32 0.0, %v985
      %v987 = vpop.f32.mrb[0].mxu0
      %988 = vmatprep.mubr.bf16.mxu0 %v624
      %989 = vmatmul.mubr.bf16.gmra.mrb[0].mxu0 %v623
      %v990 = vpop.f32.mrb[0].mxu0
      %v991 = vadd.f32 0.0, %v990
      %v992 = vpop.f32.mrb[0].mxu0
      %v993 = vpop.f32.mrb[0].mxu0
      %v994 = vadd.f32 0.0, %v993
      %v995 = vpop.f32.mrb[0].mxu0
      %996 = vmatprep.mubr.bf16.mxu0 %v627
      %997 = vmatmul.mubr.bf16.gmra.mrb[0].mxu0 %v626
      %v998 = vpop.f32.mrb[0].mxu0
      %v999 = vadd.f32 0.0, %v998
      %v1000 = vpop.f32.mrb[0].mxu0
      %v1001 = vpop.f32.mrb[0].mxu0
      %v1002 = vadd.f32 0.0, %v1001
      %v1003 = vpop.f32.mrb[0].mxu0
      %1004 = vmatprep.mubr.bf16.mxu0 %v630
      %1005 = vmatmul.mubr.bf16.gmra.mrb[0].mxu0 %v629
      %v1006 = vpop.f32.mrb[0].mxu0
      %v1007 = vadd.f32 0.0, %v1006
      %v1008 = vpop.f32.mrb[0].mxu0
      %v1009 = vpop.f32.mrb[0].mxu0
      %v1010 = vadd.f32 0.0, %v1009
      %v1011 = vpop.f32.mrb[0].mxu0
      %1012 = vmatprep.mubr.bf16.mxu0 %v633
      %1013 = vmatmul.mubr.bf16.gmra.mrb[0].mxu0 %v632
      %v1014 = vpop.f32.mrb[0].mxu0
      %v1015 = vadd.f32 0.0, %v1014
      %v1016 = vpop.f32.mrb[0].mxu0
      %v1017 = vpop.f32.mrb[0].mxu0
      %v1018 = vadd.f32 0.0, %v1017
      %v1019 = vpop.f32.mrb[0].mxu0
      %1020 = vmatprep.mubr.bf16.mxu0 %v636
      %1021 = vmatmul.mubr.bf16.gmra.mrb[0].mxu0 %v635
      %v1022 = vpop.f32.mrb[0].mxu0
      %v1023 = vadd.f32 0.0, %v1022
      %v1024 = vpop.f32.mrb[0].mxu0
      %v1025 = vpop.f32.mrb[0].mxu0
      %v1026 = vadd.f32 0.0, %v1025
      %v1027 = vpop.f32.mrb[0].mxu0
      %1028 = vmatprep.mubr.bf16.mxu0 %v639
      %1029 = vmatmul.mubr.bf16.gmra.mrb[0].mxu0 %v638
      %v1030 = vpop.f32.mrb[0].mxu0
      %v1031 = vadd.f32 0.0, %v1030
      %v1032 = vpop.f32.mrb[0].mxu0
      %v1033 = vpop.f32.mrb[0].mxu0
      %v1034 = vadd.f32 0.0, %v1033
      %v1035 = vpop.f32.mrb[0].mxu0
      %1036 = vmatprep.mubr.bf16.mxu0 %v642
      %1037 = vmatmul.mubr.bf16.gmra.mrb[0].mxu0 %v641
      %v1038 = vpop.f32.mrb[0].mxu0
      %v1039 = vadd.f32 0.0, %v1038
      %v1040 = vpop.f32.mrb[0].mxu0
      %v1041 = vpop.f32.mrb[0].mxu0
      %v1042 = vadd.f32 0.0, %v1041
      %v1043 = vpop.f32.mrb[0].mxu0
      %1044 = vmatprep.mubr.bf16.mxu0 %v645
      %1045 = vmatmul.mubr.bf16.gmra.mrb[0].mxu0 %v644
      %v1046 = vpop.f32.mrb[0].mxu0
      %v1047 = vadd.f32 0.0, %v1046
      %v1048 = vpop.f32.mrb[0].mxu0
      %v1049 = vpop.f32.mrb[0].mxu0
      %v1050 = vadd.f32 0.0, %v1049
      %v1051 = vpop.f32.mrb[0].mxu0
      %1052 = vmatprep.mubr.bf16.mxu0 %v648
      %1053 = vmatmul.mubr.bf16.gmra.mrb[0].mxu0 %v647
      %v1054 = vpop.f32.mrb[0].mxu0
      %v1055 = vadd.f32 0.0, %v1054
      %v1056 = vpop.f32.mrb[0].mxu0
      %v1057 = vpop.f32.mrb[0].mxu0
      %v1058 = vadd.f32 0.0, %v1057
      %v1059 = vpop.f32.mrb[0].mxu0
      %1060 = vmatprep.mubr.bf16.mxu0 %v713
      %1061 = vmatmul.mubr.bf16.gmra.mrb[0].mxu0 %v712
      %v1062 = vpop.f32.mrb[0].mxu0
      %v1063 = vadd.f32 0.0, %v1062
      %v1064 = vpop.f32.mrb[0].mxu0
      %v1065 = vpop.f32.mrb[0].mxu0
      %v1066 = vadd.f32 0.0, %v1065
      %v1067 = vpop.f32.mrb[0].mxu0
      %1068 = vdwg.mxu0
      %1069 = vmatprep.subr.bf16.mxu0 0
      %1070 = vmatpush1.bf16.msra.mxu0 %v876
      %1071 = vmatprep.subr.bf16.mxu0 0
      %1072 = vmatpush1.bf16.msra.mxu0 %v877
      %1073 = vmatprep.subr.bf16.mxu0 0
      %1074 = vmatpush1.bf16.msra.mxu0 %v878
      %1075 = vmatprep.subr.bf16.mxu0 0
      %1076 = vmatpush1.bf16.msra.mxu0 %v879
      %1077 = vmatprep.subr.bf16.mxu0 0
      %1078 = vmatpush1.bf16.msra.mxu0 %v880
      %1079 = vmatprep.subr.bf16.mxu0 0
      %1080 = vmatpush1.bf16.msra.mxu0 %v881
      %1081 = vmatprep.subr.bf16.mxu0 0
      %1082 = vmatpush1.bf16.msra.mxu0 %v882
      %1083 = vmatprep.subr.bf16.mxu0 0
      %1084 = vmatpush1.bf16.msra.mxu0 %v883
      %1085 = vmatprep.subr.bf16.mxu0 0
      %1086 = vmatpush1.bf16.msra.mxu0 0
      %1087 = vmatprep.subr.bf16.mxu0 0
      %1088 = vmatpush1.bf16.msra.mxu0 0
      %1089 = vmatprep.subr.bf16.mxu0 0
      %1090 = vmatpush1.bf16.msra.mxu0 0
      %1091 = vmatprep.subr.bf16.mxu0 0
      %1092 = vmatpush1.bf16.msra.mxu0 0
      %1093 = vmatprep.subr.bf16.mxu0 0
      %1094 = vmatpush1.bf16.msra.mxu0 0
      %1095 = vmatprep.subr.bf16.mxu0 0
      %1096 = vmatpush1.bf16.msra.mxu0 0
      %1097 = vmatprep.subr.bf16.mxu0 0
      %1098 = vmatpush1.bf16.msra.mxu0 0
      %1099 = vmatprep.subr.bf16.mxu0 0
      %1100 = vmatpush1.bf16.msra.mxu0 0
      %1101 = vmatprep.mubr.bf16.mxu0 0
      %1102 = vmatmul.mubr.bf16.gmra.mrb[0].mxu0 %v607
      %v1103 = vpop.f32.mrb[0].mxu0
      %v1104 = vadd.f32 %v943, %v1103
      %v1105 = vpop.f32.mrb[0].mxu0
      %v1106 = vpop.f32.mrb[0].mxu0
      %v1107 = vadd.f32 %v946, %v1106
      %v1108 = vpop.f32.mrb[0].mxu0
      %1109 = vmatprep.mubr.bf16.mxu0 0
      %1110 = vmatmul.mubr.bf16.gmra.mrb[0].mxu0 %v610
      %v1111 = vpop.f32.mrb[0].mxu0
      %v1112 = vadd.f32 %v951, %v1111
      %v1113 = vpop.f32.mrb[0].mxu0
      %v1114 = vpop.f32.mrb[0].mxu0
      %v1115 = vadd.f32 %v954, %v1114
      %v1116 = vpop.f32.mrb[0].mxu0
      %1117 = vmatprep.mubr.bf16.mxu0 0
      %1118 = vmatmul.mubr.bf16.gmra.mrb[0].mxu0 %v613
      %v1119 = vpop.f32.mrb[0].mxu0
      %v1120 = vadd.f32 %v959, %v1119
      %v1121 = vpop.f32.mrb[0].mxu0
      %v1122 = vpop.f32.mrb[0].mxu0
      %v1123 = vadd.f32 %v962, %v1122
      %v1124 = vpop.f32.mrb[0].mxu0
      %1125 = vmatprep.mubr.bf16.mxu0 0
      %1126 = vmatmul.mubr.bf16.gmra.mrb[0].mxu0 %v616
      %v1127 = vpop.f32.mrb[0].mxu0
      %v1128 = vadd.f32 %v967, %v1127
      %v1129 = vpop.f32.mrb[0].mxu0
      %v1130 = vpop.f32.mrb[0].mxu0
      %v1131 = vadd.f32 %v970, %v1130
      %v1132 = vpop.f32.mrb[0].mxu0
      %1133 = vmatprep.mubr.bf16.mxu0 0
      %1134 = vmatmul.mubr.bf16.gmra.mrb[0].mxu0 %v619
      %v1135 = vpop.f32.mrb[0].mxu0
      %v1136 = vadd.f32 %v975, %v1135
      %v1137 = vpop.f32.mrb[0].mxu0
      %v1138 = vpop.f32.mrb[0].mxu0
      %v1139 = vadd.f32 %v978, %v1138
      %v1140 = vpop.f32.mrb[0].mxu0
      %1141 = vmatprep.mubr.bf16.mxu0 0
      %1142 = vmatmul.mubr.bf16.gmra.mrb[0].mxu0 %v622
      %v1143 = vpop.f32.mrb[0].mxu0
      %v1144 = vadd.f32 %v983, %v1143
      %v1145 = vpop.f32.mrb[0].mxu0
      %v1146 = vpop.f32.mrb[0].mxu0
      %v1147 = vadd.f32 %v986, %v1146
      %v1148 = vpop.f32.mrb[0].mxu0
      %1149 = vmatprep.mubr.bf16.mxu0 0
      %1150 = vmatmul.mubr.bf16.gmra.mrb[0].mxu0 %v625
      %v1151 = vpop.f32.mrb[0].mxu0
      %v1152 = vadd.f32 %v991, %v1151
      %v1153 = vpop.f32.mrb[0].mxu0
      %v1154 = vpop.f32.mrb[0].mxu0
      %v1155 = vadd.f32 %v994, %v1154
      %v1156 = vpop.f32.mrb[0].mxu0
      %1157 = vmatprep.mubr.bf16.mxu0 0
      %1158 = vmatmul.mubr.bf16.gmra.mrb[0].mxu0 %v628
      %v1159 = vpop.f32.mrb[0].mxu0
      %v1160 = vadd.f32 %v999, %v1159
      %v1161 = vpop.f32.mrb[0].mxu0
      %v1162 = vpop.f32.mrb[0].mxu0
      %v1163 = vadd.f32 %v1002, %v1162
      %v1164 = vpop.f32.mrb[0].mxu0
      %1165 = vmatprep.mubr.bf16.mxu0 0
      %1166 = vmatmul.mubr.bf16.gmra.mrb[0].mxu0 %v631
      %v1167 = vpop.f32.mrb[0].mxu0
      %v1168 = vadd.f32 %v1007, %v1167
      %v1169 = vpop.f32.mrb[0].mxu0
      %v1170 = vpop.f32.mrb[0].mxu0
      %v1171 = vadd.f32 %v1010, %v1170
      %v1172 = vpop.f32.mrb[0].mxu0
      %1173 = vmatprep.mubr.bf16.mxu0 0
      %1174 = vmatmul.mubr.bf16.gmra.mrb[0].mxu0 %v634
      %v1175 = vpop.f32.mrb[0].mxu0
      %v1176 = vadd.f32 %v1015, %v1175
      %v1177 = vpop.f32.mrb[0].mxu0
      %v1178 = vpop.f32.mrb[0].mxu0
      %v1179 = vadd.f32 %v1018, %v1178
      %v1180 = vpop.f32.mrb[0].mxu0
      %1181 = vmatprep.mubr.bf16.mxu0 0
      %1182 = vmatmul.mubr.bf16.gmra.mrb[0].mxu0 %v637
      %v1183 = vpop.f32.mrb[0].mxu0
      %v1184 = vadd.f32 %v1023, %v1183
      %v1185 = vpop.f32.mrb[0].mxu0
      %v1186 = vpop.f32.mrb[0].mxu0
      %v1187 = vadd.f32 %v1026, %v1186
      %v1188 = vpop.f32.mrb[0].mxu0
      %1189 = vmatprep.mubr.bf16.mxu0 0
      %1190 = vmatmul.mubr.bf16.gmra.mrb[0].mxu0 %v640
      %v1191 = vpop.f32.mrb[0].mxu0
      %v1192 = vadd.f32 %v1031, %v1191
      %v1193 = vpop.f32.mrb[0].mxu0
      %v1194 = vpop.f32.mrb[0].mxu0
      %v1195 = vadd.f32 %v1034, %v1194
      %v1196 = vpop.f32.mrb[0].mxu0
      %1197 = vmatprep.mubr.bf16.mxu0 0
      %1198 = vmatmul.mubr.bf16.gmra.mrb[0].mxu0 %v643
      %v1199 = vpop.f32.mrb[0].mxu0
      %v1200 = vadd.f32 %v1039, %v1199
      %v1201 = vpop.f32.mrb[0].mxu0
      %v1202 = vpop.f32.mrb[0].mxu0
      %v1203 = vadd.f32 %v1042, %v1202
      %v1204 = vpop.f32.mrb[0].mxu0
      %1205 = vmatprep.mubr.bf16.mxu0 0
      %1206 = vmatmul.mubr.bf16.gmra.mrb[0].mxu0 %v646
      %v1207 = vpop.f32.mrb[0].mxu0
      %v1208 = vadd.f32 %v1047, %v1207
      %v1209 = vpop.f32.mrb[0].mxu0
      %v1210 = vpop.f32.mrb[0].mxu0
      %v1211 = vadd.f32 %v1050, %v1210
      %v1212 = vpop.f32.mrb[0].mxu0
      %1213 = vmatprep.mubr.bf16.mxu0 0
      %1214 = vmatmul.mubr.bf16.gmra.mrb[0].mxu0 %v649
      %v1215 = vpop.f32.mrb[0].mxu0
      %v1216 = vadd.f32 %v1055, %v1215
      %v1217 = vpop.f32.mrb[0].mxu0
      %v1218 = vpop.f32.mrb[0].mxu0
      %v1219 = vadd.f32 %v1058, %v1218
      %v1220 = vpop.f32.mrb[0].mxu0
      %1221 = vmatprep.mubr.bf16.mxu0 0
      %1222 = vmatmul.mubr.bf16.gmra.mrb[0].mxu0 %v714
      %v1223 = vpop.f32.mrb[0].mxu0
      %v1224 = vadd.f32 %v1063, %v1223
      %v1225 = vpop.f32.mrb[0].mxu0
      %v1226 = vpop.f32.mrb[0].mxu0
      %v1227 = vadd.f32 %v1066, %v1226
      %v1228 = vpop.f32.mrb[0].mxu0
      %1229 = vdwg.mxu0
      %v1278 = vunpack.c.l.b16 %v650
      %v1279 = vunpack.c.l.b16 %v651
      %v1280 = vunpack.c.l.b16 %v652
      %v1281 = vunpack.c.l.b16 %v653
      %v1282 = vunpack.c.l.b16 %v654
      %v1283 = vunpack.c.l.b16 %v655
      %v1284 = vunpack.c.l.b16 %v656
      %v1285 = vunpack.c.l.b16 %v657
      %v1286 = vunpack.c.l.b16 %v658
      %v1287 = vunpack.c.l.b16 %v659
      %v1288 = vunpack.c.l.b16 %v660
      %v1289 = vunpack.c.l.b16 %v661
      %v1290 = vunpack.c.l.b16 %v662
      %v1291 = vunpack.c.l.b16 %v663
      %v1292 = vunpack.c.l.b16 %v664
      %v1293 = vunpack.c.l.b16 %v665
      %v1294 = vunpack.c.l.b16 %v666
      %v1295 = vunpack.c.l.b16 %v667
      %v1296 = vunpack.c.l.b16 %v668
      %v1297 = vunpack.c.l.b16 %v669
      %v1298 = vunpack.c.l.b16 %v670
      %v1299 = vunpack.c.l.b16 %v671
      %v1300 = vunpack.c.l.b16 %v672
      %v1301 = vunpack.c.l.b16 %v673
      %v1302 = vunpack.c.l.b16 %v674
      %v1303 = vunpack.c.l.b16 %v675
      %v1304 = vunpack.c.l.b16 %v676
      %v1305 = vunpack.c.l.b16 %v677
      %v1306 = vunpack.c.l.b16 %v678
      %v1307 = vunpack.c.l.b16 %v679
      %v1308 = vunpack.c.l.b16 %v680
      %v1309 = vunpack.c.l.b16 %v681
      %v1310 = vunpack.c.l.b16 %v682
      %v1311 = vunpack.c.l.b16 %v683
      %v1312 = vunpack.c.l.b16 %v684
      %v1313 = vunpack.c.l.b16 %v685
      %v1314 = vunpack.c.l.b16 %v686
      %v1315 = vunpack.c.l.b16 %v687
      %v1316 = vunpack.c.l.b16 %v688
      %v1317 = vunpack.c.l.b16 %v689
      %v1318 = vunpack.c.l.b16 %v690
      %v1319 = vunpack.c.l.b16 %v691
      %v1320 = vunpack.c.l.b16 %v692
      %v1321 = vunpack.c.l.b16 %v693
      %v1322 = vunpack.c.l.b16 %v694
      %v1323 = vunpack.c.l.b16 %v695
      %v1324 = vunpack.c.l.b16 %v696
      %v1325 = vunpack.c.l.b16 %v697
      %v1326 = vpack.c.b16 %v1279, %v1278
      %v1327 = vpack.c.b16 %v1281, %v1280
      %v1328 = vpack.c.b16 %v1283, %v1282
      %v1329 = vpack.c.b16 %v1285, %v1284
      %v1330 = vpack.c.b16 %v1287, %v1286
      %v1331 = vpack.c.b16 %v1289, %v1288
      %v1332 = vpack.c.b16 %v1291, %v1290
      %v1333 = vpack.c.b16 %v1293, %v1292
      %v1334 = vpack.c.b16 %v1295, %v1294
      %v1335 = vpack.c.b16 %v1297, %v1296
      %v1336 = vpack.c.b16 %v1299, %v1298
      %v1337 = vpack.c.b16 %v1301, %v1300
      %v1338 = vpack.c.b16 %v1303, %v1302
      %v1339 = vpack.c.b16 %v1305, %v1304
      %v1340 = vpack.c.b16 %v1307, %v1306
      %v1341 = vpack.c.b16 %v1309, %v1308
      %v1342 = vpack.c.b16 %v1311, %v1310
      %v1343 = vpack.c.b16 %v1313, %v1312
      %v1344 = vpack.c.b16 %v1315, %v1314
      %v1345 = vpack.c.b16 %v1317, %v1316
      %v1346 = vpack.c.b16 %v1319, %v1318
      %v1347 = vpack.c.b16 %v1321, %v1320
      %v1348 = vpack.c.b16 %v1323, %v1322
      %v1349 = vpack.c.b16 %v1325, %v1324
      %1374 = vmatprep.subr.bf16.mxu0 0
      %1375 = vmatpush1.bf16.msra.mxu0 %v1326
      %1376 = vmatprep.subr.bf16.mxu0 0
      %1377 = vmatpush1.bf16.msra.mxu0 %v1327
      %1378 = vmatprep.subr.bf16.mxu0 0
      %1379 = vmatpush1.bf16.msra.mxu0 %v1328
      %1380 = vmatprep.subr.bf16.mxu0 0
      %1381 = vmatpush1.bf16.msra.mxu0 %v1329
      %1382 = vmatprep.subr.bf16.mxu0 0
      %1383 = vmatpush1.bf16.msra.mxu0 %v1330
      %1384 = vmatprep.subr.bf16.mxu0 0
      %1385 = vmatpush1.bf16.msra.mxu0 %v1331
      %1386 = vmatprep.subr.bf16.mxu0 0
      %1387 = vmatpush1.bf16.msra.mxu0 %v1332
      %1388 = vmatprep.subr.bf16.mxu0 0
      %1389 = vmatpush1.bf16.msra.mxu0 %v1333
      %1390 = vmatprep.subr.bf16.mxu0 0
      %1391 = vmatpush1.bf16.msra.mxu0 %v1334
      %1392 = vmatprep.subr.bf16.mxu0 0
      %1393 = vmatpush1.bf16.msra.mxu0 %v1335
      %1394 = vmatprep.subr.bf16.mxu0 0
      %1395 = vmatpush1.bf16.msra.mxu0 %v1336
      %1396 = vmatprep.subr.bf16.mxu0 0
      %1397 = vmatpush1.bf16.msra.mxu0 %v1337
      %1398 = vmatprep.subr.bf16.mxu0 0
      %1399 = vmatpush1.bf16.msra.mxu0 %v1338
      %1400 = vmatprep.subr.bf16.mxu0 0
      %1401 = vmatpush1.bf16.msra.mxu0 %v1339
      %1402 = vmatprep.subr.bf16.mxu0 0
      %1403 = vmatpush1.bf16.msra.mxu0 %v1340
      %1404 = vmatprep.subr.bf16.mxu0 0
      %1405 = vmatpush1.bf16.msra.mxu0 %v1341
      %1406 = vmatprep.mubr.bf16.mxu0 %v603
      %1407 = vmatmul.mubr.bf16.gmra.mrb[0].mxu0 %v602
      %v1408 = vpop.f32.mrb[0].mxu0
      %v1409 = vadd.f32 %v1104, %v1408
      %v1410 = vpop.f32.mrb[0].mxu0
      %v1411 = vpop.f32.mrb[0].mxu0
      %v1412 = vadd.f32 %v1107, %v1411
      %v1413 = vpop.f32.mrb[0].mxu0
      %1414 = vmatprep.mubr.bf16.mxu0 %v606
      %1415 = vmatmul.mubr.bf16.gmra.mrb[0].mxu0 %v605
      %v1416 = vpop.f32.mrb[0].mxu0
      %v1417 = vadd.f32 %v1112, %v1416
      %v1418 = vpop.f32.mrb[0].mxu0
      %v1419 = vpop.f32.mrb[0].mxu0
      %v1420 = vadd.f32 %v1115, %v1419
      %v1421 = vpop.f32.mrb[0].mxu0
      %1422 = vmatprep.mubr.bf16.mxu0 %v609
      %1423 = vmatmul.mubr.bf16.gmra.mrb[0].mxu0 %v608
      %v1424 = vpop.f32.mrb[0].mxu0
      %v1425 = vadd.f32 %v1120, %v1424
      %v1426 = vpop.f32.mrb[0].mxu0
      %v1427 = vpop.f32.mrb[0].mxu0
      %v1428 = vadd.f32 %v1123, %v1427
      %v1429 = vpop.f32.mrb[0].mxu0
      %1430 = vmatprep.mubr.bf16.mxu0 %v612
      %1431 = vmatmul.mubr.bf16.gmra.mrb[0].mxu0 %v611
      %v1432 = vpop.f32.mrb[0].mxu0
      %v1433 = vadd.f32 %v1128, %v1432
      %v1434 = vpop.f32.mrb[0].mxu0
      %v1435 = vpop.f32.mrb[0].mxu0
      %v1436 = vadd.f32 %v1131, %v1435
      %v1437 = vpop.f32.mrb[0].mxu0
      %1438 = vmatprep.mubr.bf16.mxu0 %v615
      %1439 = vmatmul.mubr.bf16.gmra.mrb[0].mxu0 %v614
      %v1440 = vpop.f32.mrb[0].mxu0
      %v1441 = vadd.f32 %v1136, %v1440
      %v1442 = vpop.f32.mrb[0].mxu0
      %v1443 = vpop.f32.mrb[0].mxu0
      %v1444 = vadd.f32 %v1139, %v1443
      %v1445 = vpop.f32.mrb[0].mxu0
      %1446 = vmatprep.mubr.bf16.mxu0 %v618
      %1447 = vmatmul.mubr.bf16.gmra.mrb[0].mxu0 %v617
      %v1448 = vpop.f32.mrb[0].mxu0
      %v1449 = vadd.f32 %v1144, %v1448
      %v1450 = vpop.f32.mrb[0].mxu0
      %v1451 = vpop.f32.mrb[0].mxu0
      %v1452 = vadd.f32 %v1147, %v1451
      %v1453 = vpop.f32.mrb[0].mxu0
      %1454 = vmatprep.mubr.bf16.mxu0 %v621
      %1455 = vmatmul.mubr.bf16.gmra.mrb[0].mxu0 %v620
      %v1456 = vpop.f32.mrb[0].mxu0
      %v1457 = vadd.f32 %v1152, %v1456
      %v1458 = vpop.f32.mrb[0].mxu0
      %v1459 = vpop.f32.mrb[0].mxu0
      %v1460 = vadd.f32 %v1155, %v1459
      %v1461 = vpop.f32.mrb[0].mxu0
      %1462 = vmatprep.mubr.bf16.mxu0 %v624
      %1463 = vmatmul.mubr.bf16.gmra.mrb[0].mxu0 %v623
      %v1464 = vpop.f32.mrb[0].mxu0
      %v1465 = vadd.f32 %v1160, %v1464
      %v1466 = vpop.f32.mrb[0].mxu0
      %v1467 = vpop.f32.mrb[0].mxu0
      %v1468 = vadd.f32 %v1163, %v1467
      %v1469 = vpop.f32.mrb[0].mxu0
      %1470 = vmatprep.mubr.bf16.mxu0 %v627
      %1471 = vmatmul.mubr.bf16.gmra.mrb[0].mxu0 %v626
      %v1472 = vpop.f32.mrb[0].mxu0
      %v1473 = vadd.f32 %v1168, %v1472
      %v1474 = vpop.f32.mrb[0].mxu0
      %v1475 = vpop.f32.mrb[0].mxu0
      %v1476 = vadd.f32 %v1171, %v1475
      %v1477 = vpop.f32.mrb[0].mxu0
      %1478 = vmatprep.mubr.bf16.mxu0 %v630
      %1479 = vmatmul.mubr.bf16.gmra.mrb[0].mxu0 %v629
      %v1480 = vpop.f32.mrb[0].mxu0
      %v1481 = vadd.f32 %v1176, %v1480
      %v1482 = vpop.f32.mrb[0].mxu0
      %v1483 = vpop.f32.mrb[0].mxu0
      %v1484 = vadd.f32 %v1179, %v1483
      %v1485 = vpop.f32.mrb[0].mxu0
      %1486 = vmatprep.mubr.bf16.mxu0 %v633
      %1487 = vmatmul.mubr.bf16.gmra.mrb[0].mxu0 %v632
      %v1488 = vpop.f32.mrb[0].mxu0
      %v1489 = vadd.f32 %v1184, %v1488
      %v1490 = vpop.f32.mrb[0].mxu0
      %v1491 = vpop.f32.mrb[0].mxu0
      %v1492 = vadd.f32 %v1187, %v1491
      %v1493 = vpop.f32.mrb[0].mxu0
      %1494 = vmatprep.mubr.bf16.mxu0 %v636
      %1495 = vmatmul.mubr.bf16.gmra.mrb[0].mxu0 %v635
      %v1496 = vpop.f32.mrb[0].mxu0
      %v1497 = vadd.f32 %v1192, %v1496
      %v1498 = vpop.f32.mrb[0].mxu0
      %v1499 = vpop.f32.mrb[0].mxu0
      %v1500 = vadd.f32 %v1195, %v1499
      %v1501 = vpop.f32.mrb[0].mxu0
      %1502 = vmatprep.mubr.bf16.mxu0 %v639
      %1503 = vmatmul.mubr.bf16.gmra.mrb[0].mxu0 %v638
      %v1504 = vpop.f32.mrb[0].mxu0
      %v1505 = vadd.f32 %v1200, %v1504
      %v1506 = vpop.f32.mrb[0].mxu0
      %v1507 = vpop.f32.mrb[0].mxu0
      %v1508 = vadd.f32 %v1203, %v1507
      %v1509 = vpop.f32.mrb[0].mxu0
      %1510 = vmatprep.mubr.bf16.mxu0 %v642
      %1511 = vmatmul.mubr.bf16.gmra.mrb[0].mxu0 %v641
      %v1512 = vpop.f32.mrb[0].mxu0
      %v1513 = vadd.f32 %v1208, %v1512
      %v1514 = vpop.f32.mrb[0].mxu0
      %v1515 = vpop.f32.mrb[0].mxu0
      %v1516 = vadd.f32 %v1211, %v1515
      %v1517 = vpop.f32.mrb[0].mxu0
      %1518 = vmatprep.mubr.bf16.mxu0 %v645
      %1519 = vmatmul.mubr.bf16.gmra.mrb[0].mxu0 %v644
      %v1520 = vpop.f32.mrb[0].mxu0
      %v1521 = vadd.f32 %v1216, %v1520
      %v1522 = vpop.f32.mrb[0].mxu0
      %v1523 = vpop.f32.mrb[0].mxu0
      %v1524 = vadd.f32 %v1219, %v1523
      %v1525 = vpop.f32.mrb[0].mxu0
      %1526 = vmatprep.mubr.bf16.mxu0 %v648
      %1527 = vmatmul.mubr.bf16.gmra.mrb[0].mxu0 %v647
      %v1528 = vpop.f32.mrb[0].mxu0
      %v1529 = vadd.f32 %v1224, %v1528
      %v1530 = vpop.f32.mrb[0].mxu0
      %v1531 = vpop.f32.mrb[0].mxu0
      %v1532 = vadd.f32 %v1227, %v1531
      %v1533 = vpop.f32.mrb[0].mxu0
      %1534 = vdwg.mxu0
      %1535 = vmatprep.subr.bf16.mxu0 0
      %1536 = vmatpush1.bf16.msra.mxu0 %v1342
      %1537 = vmatprep.subr.bf16.mxu0 0
      %1538 = vmatpush1.bf16.msra.mxu0 %v1343
      %1539 = vmatprep.subr.bf16.mxu0 0
      %1540 = vmatpush1.bf16.msra.mxu0 %v1344
      %1541 = vmatprep.subr.bf16.mxu0 0
      %1542 = vmatpush1.bf16.msra.mxu0 %v1345
      %1543 = vmatprep.subr.bf16.mxu0 0
      %1544 = vmatpush1.bf16.msra.mxu0 %v1346
      %1545 = vmatprep.subr.bf16.mxu0 0
      %1546 = vmatpush1.bf16.msra.mxu0 %v1347
      %1547 = vmatprep.subr.bf16.mxu0 0
      %1548 = vmatpush1.bf16.msra.mxu0 %v1348
      %1549 = vmatprep.subr.bf16.mxu0 0
      %1550 = vmatpush1.bf16.msra.mxu0 %v1349
      %1551 = vmatprep.subr.bf16.mxu0 0
      %1552 = vmatpush1.bf16.msra.mxu0 0
      %1553 = vmatprep.subr.bf16.mxu0 0
      %1554 = vmatpush1.bf16.msra.mxu0 0
      %1555 = vmatprep.subr.bf16.mxu0 0
      %1556 = vmatpush1.bf16.msra.mxu0 0
      %1557 = vmatprep.subr.bf16.mxu0 0
      %1558 = vmatpush1.bf16.msra.mxu0 0
      %1559 = vmatprep.subr.bf16.mxu0 0
      %1560 = vmatpush1.bf16.msra.mxu0 0
      %1561 = vmatprep.subr.bf16.mxu0 0
      %1562 = vmatpush1.bf16.msra.mxu0 0
      %1563 = vmatprep.subr.bf16.mxu0 0
      %1564 = vmatpush1.bf16.msra.mxu0 0
      %1565 = vmatprep.subr.bf16.mxu0 0
      %1566 = vmatpush1.bf16.msra.mxu0 0
      %1567 = vmatprep.mubr.bf16.mxu0 0
      %1568 = vmatmul.mubr.bf16.gmra.mrb[0].mxu0 %v604
      %v1569 = vpop.f32.mrb[0].mxu0
      %v1570 = vadd.f32 %v1409, %v1569
      %v1571 = vpop.f32.mrb[0].mxu0
      %v1572 = vpop.f32.mrb[0].mxu0
      %v1573 = vadd.f32 %v1412, %v1572
      %v1574 = vpop.f32.mrb[0].mxu0
      %1575 = vmatprep.mubr.bf16.mxu0 0
      %1576 = vmatmul.mubr.bf16.gmra.mrb[0].mxu0 %v607
      %v1577 = vpop.f32.mrb[0].mxu0
      %v1578 = vadd.f32 %v1417, %v1577
      %v1579 = vpop.f32.mrb[0].mxu0
      %v1580 = vpop.f32.mrb[0].mxu0
      %v1581 = vadd.f32 %v1420, %v1580
      %v1582 = vpop.f32.mrb[0].mxu0
      %1583 = vmatprep.mubr.bf16.mxu0 0
      %1584 = vmatmul.mubr.bf16.gmra.mrb[0].mxu0 %v610
      %v1585 = vpop.f32.mrb[0].mxu0
      %v1586 = vadd.f32 %v1425, %v1585
      %v1587 = vpop.f32.mrb[0].mxu0
      %v1588 = vpop.f32.mrb[0].mxu0
      %v1589 = vadd.f32 %v1428, %v1588
      %v1590 = vpop.f32.mrb[0].mxu0
      %1591 = vmatprep.mubr.bf16.mxu0 0
      %1592 = vmatmul.mubr.bf16.gmra.mrb[0].mxu0 %v613
      %v1593 = vpop.f32.mrb[0].mxu0
      %v1594 = vadd.f32 %v1433, %v1593
      %v1595 = vpop.f32.mrb[0].mxu0
      %v1596 = vpop.f32.mrb[0].mxu0
      %v1597 = vadd.f32 %v1436, %v1596
      %v1598 = vpop.f32.mrb[0].mxu0
      %1599 = vmatprep.mubr.bf16.mxu0 0
      %1600 = vmatmul.mubr.bf16.gmra.mrb[0].mxu0 %v616
      %v1601 = vpop.f32.mrb[0].mxu0
      %v1602 = vadd.f32 %v1441, %v1601
      %v1603 = vpop.f32.mrb[0].mxu0
      %v1604 = vpop.f32.mrb[0].mxu0
      %v1605 = vadd.f32 %v1444, %v1604
      %v1606 = vpop.f32.mrb[0].mxu0
      %1607 = vmatprep.mubr.bf16.mxu0 0
      %1608 = vmatmul.mubr.bf16.gmra.mrb[0].mxu0 %v619
      %v1609 = vpop.f32.mrb[0].mxu0
      %v1610 = vadd.f32 %v1449, %v1609
      %v1611 = vpop.f32.mrb[0].mxu0
      %v1612 = vpop.f32.mrb[0].mxu0
      %v1613 = vadd.f32 %v1452, %v1612
      %v1614 = vpop.f32.mrb[0].mxu0
      %1615 = vmatprep.mubr.bf16.mxu0 0
      %1616 = vmatmul.mubr.bf16.gmra.mrb[0].mxu0 %v622
      %v1617 = vpop.f32.mrb[0].mxu0
      %v1618 = vadd.f32 %v1457, %v1617
      %v1619 = vpop.f32.mrb[0].mxu0
      %v1620 = vpop.f32.mrb[0].mxu0
      %v1621 = vadd.f32 %v1460, %v1620
      %v1622 = vpop.f32.mrb[0].mxu0
      %1623 = vmatprep.mubr.bf16.mxu0 0
      %1624 = vmatmul.mubr.bf16.gmra.mrb[0].mxu0 %v625
      %v1625 = vpop.f32.mrb[0].mxu0
      %v1626 = vadd.f32 %v1465, %v1625
      %v1627 = vpop.f32.mrb[0].mxu0
      %v1628 = vpop.f32.mrb[0].mxu0
      %v1629 = vadd.f32 %v1468, %v1628
      %v1630 = vpop.f32.mrb[0].mxu0
      %1631 = vmatprep.mubr.bf16.mxu0 0
      %1632 = vmatmul.mubr.bf16.gmra.mrb[0].mxu0 %v628
      %v1633 = vpop.f32.mrb[0].mxu0
      %v1634 = vadd.f32 %v1473, %v1633
      %v1635 = vpop.f32.mrb[0].mxu0
      %v1636 = vpop.f32.mrb[0].mxu0
      %v1637 = vadd.f32 %v1476, %v1636
      %v1638 = vpop.f32.mrb[0].mxu0
      %1639 = vmatprep.mubr.bf16.mxu0 0
      %1640 = vmatmul.mubr.bf16.gmra.mrb[0].mxu0 %v631
      %v1641 = vpop.f32.mrb[0].mxu0
      %v1642 = vadd.f32 %v1481, %v1641
      %v1643 = vpop.f32.mrb[0].mxu0
      %v1644 = vpop.f32.mrb[0].mxu0
      %v1645 = vadd.f32 %v1484, %v1644
      %v1646 = vpop.f32.mrb[0].mxu0
      %1647 = vmatprep.mubr.bf16.mxu0 0
      %1648 = vmatmul.mubr.bf16.gmra.mrb[0].mxu0 %v634
      %v1649 = vpop.f32.mrb[0].mxu0
      %v1650 = vadd.f32 %v1489, %v1649
      %v1651 = vpop.f32.mrb[0].mxu0
      %v1652 = vpop.f32.mrb[0].mxu0
      %v1653 = vadd.f32 %v1492, %v1652
      %v1654 = vpop.f32.mrb[0].mxu0
      %1655 = vmatprep.mubr.bf16.mxu0 0
      %1656 = vmatmul.mubr.bf16.gmra.mrb[0].mxu0 %v637
      %v1657 = vpop.f32.mrb[0].mxu0
      %v1658 = vadd.f32 %v1497, %v1657
      %v1659 = vpop.f32.mrb[0].mxu0
      %v1660 = vpop.f32.mrb[0].mxu0
      %v1661 = vadd.f32 %v1500, %v1660
      %v1662 = vpop.f32.mrb[0].mxu0
      %1663 = vmatprep.mubr.bf16.mxu0 0
      %1664 = vmatmul.mubr.bf16.gmra.mrb[0].mxu0 %v640
      %v1665 = vpop.f32.mrb[0].mxu0
      %v1666 = vadd.f32 %v1505, %v1665
      %v1667 = vpop.f32.mrb[0].mxu0
      %v1668 = vpop.f32.mrb[0].mxu0
      %v1669 = vadd.f32 %v1508, %v1668
      %v1670 = vpop.f32.mrb[0].mxu0
      %1671 = vmatprep.mubr.bf16.mxu0 0
      %1672 = vmatmul.mubr.bf16.gmra.mrb[0].mxu0 %v643
      %v1673 = vpop.f32.mrb[0].mxu0
      %v1674 = vadd.f32 %v1513, %v1673
      %v1675 = vpop.f32.mrb[0].mxu0
      %v1676 = vpop.f32.mrb[0].mxu0
      %v1677 = vadd.f32 %v1516, %v1676
      %v1678 = vpop.f32.mrb[0].mxu0
      %1679 = vmatprep.mubr.bf16.mxu0 0
      %1680 = vmatmul.mubr.bf16.gmra.mrb[0].mxu0 %v646
      %v1681 = vpop.f32.mrb[0].mxu0
      %v1682 = vadd.f32 %v1521, %v1681
      %v1683 = vpop.f32.mrb[0].mxu0
      %v1684 = vpop.f32.mrb[0].mxu0
      %v1685 = vadd.f32 %v1524, %v1684
      %v1686 = vpop.f32.mrb[0].mxu0
      %1687 = vmatprep.mubr.bf16.mxu0 0
      %1688 = vmatmul.mubr.bf16.gmra.mrb[0].mxu0 %v649
      %v1689 = vpop.f32.mrb[0].mxu0
      %v1690 = vadd.f32 %v1529, %v1689
      %v1691 = vpop.f32.mrb[0].mxu0
      %v1692 = vpop.f32.mrb[0].mxu0
      %v1693 = vadd.f32 %v1532, %v1692
      %v1694 = vpop.f32.mrb[0].mxu0
      %1695 = vdwg.mxu0
      %s1696 = scalar_lea.vmem %s3, 384
      %v1697 = vld [vmem:[%s1696] sm:$0xf]
      %v1698 = vld [vmem:[%s1696 + $0x4] sm:$0xf]
      %v1699 = vld [vmem:[%s1696 + $0x8] sm:$0xf]
      %v1700 = vld [vmem:[%s1696 + $0xc] sm:$0xf]
      %v1701 = vld [vmem:[%s1696 + $0x10] sm:$0xf]
      %v1702 = vld [vmem:[%s1696 + $0x14] sm:$0xf]
      %v1703 = vld [vmem:[%s1696 + $0x18] sm:$0xf]
      %v1704 = vld [vmem:[%s1696 + $0x1c] sm:$0xf]
      %v1705 = vld [vmem:[%s1696 + $0x20] sm:$0xf]
      %v1706 = vld [vmem:[%s1696 + $0x24] sm:$0xf]
      %v1707 = vld [vmem:[%s1696 + $0x28] sm:$0xf]
      %v1708 = vld [vmem:[%s1696 + $0x2c] sm:$0xf]
      %v1709 = vld [vmem:[%s1696 + $0x30] sm:$0xf]
      %v1710 = vld [vmem:[%s1696 + $0x34] sm:$0xf]
      %v1711 = vld [vmem:[%s1696 + $0x38] sm:$0xf]
      %v1712 = vld [vmem:[%s1696 + $0x3c] sm:$0xf]
      %v1713 = vld [vmem:[%s1696 + $0x40] sm:$0xf]
      %v1714 = vld [vmem:[%s1696 + $0x44] sm:$0xf]
      %v1715 = vld [vmem:[%s1696 + $0x48] sm:$0xf]
      %v1716 = vld [vmem:[%s1696 + $0x4c] sm:$0xf]
      %v1717 = vld [vmem:[%s1696 + $0x50] sm:$0xf]
      %v1718 = vld [vmem:[%s1696 + $0x54] sm:$0xf]
      %v1719 = vld [vmem:[%s1696 + $0x58] sm:$0xf]
      %v1720 = vld [vmem:[%s1696 + $0x5c] sm:$0xf]
      %v1721 = vld [vmem:[%s1696 + $0x60] sm:$0xf]
      %v1722 = vld [vmem:[%s1696 + $0x64] sm:$0xf]
      %v1723 = vld [vmem:[%s1696 + $0x68] sm:$0xf]
      %v1724 = vld [vmem:[%s1696 + $0x6c] sm:$0xf]
      %v1725 = vld [vmem:[%s1696 + $0x70] sm:$0xf]
      %v1726 = vld [vmem:[%s1696 + $0x74] sm:$0xf]
      %v1727 = vld [vmem:[%s1696 + $0x78] sm:$0xf]
      %v1728 = vld [vmem:[%s1696 + $0x7c] sm:$0xf]
      %v1729 = vld [vmem:[%s1696 + $0x80] sm:$0xf]
      %v1730 = vld [vmem:[%s1696 + $0x84] sm:$0xf]
      %v1731 = vld [vmem:[%s1696 + $0x88] sm:$0xf]
      %v1732 = vld [vmem:[%s1696 + $0x8c] sm:$0xf]
      %v1733 = vld [vmem:[%s1696 + $0x90] sm:$0xf]
      %v1734 = vld [vmem:[%s1696 + $0x94] sm:$0xf]
      %v1735 = vld [vmem:[%s1696 + $0x98] sm:$0xf]
      %v1736 = vld [vmem:[%s1696 + $0x9c] sm:$0xf]
      %v1737 = vld [vmem:[%s1696 + $0xa0] sm:$0xf]
      %v1738 = vld [vmem:[%s1696 + $0xa4] sm:$0xf]
      %v1739 = vld [vmem:[%s1696 + $0xa8] sm:$0xf]
      %v1740 = vld [vmem:[%s1696 + $0xac] sm:$0xf]
      %v1741 = vld [vmem:[%s1696 + $0xb0] sm:$0xf]
      %v1742 = vld [vmem:[%s1696 + $0xb4] sm:$0xf]
      %v1743 = vld [vmem:[%s1696 + $0xb8] sm:$0xf]
      %v1744 = vld [vmem:[%s1696 + $0xbc] sm:$0xf]
      %v1793 = vunpack.c.l.b16 %v1697
      %v1794 = vunpack.c.l.b16 %v1698
      %v1795 = vunpack.c.l.b16 %v1699
      %v1796 = vunpack.c.l.b16 %v1700
      %v1797 = vunpack.c.l.b16 %v1701
      %v1798 = vunpack.c.l.b16 %v1702
      %v1799 = vunpack.c.l.b16 %v1703
      %v1800 = vunpack.c.l.b16 %v1704
      %v1801 = vunpack.c.l.b16 %v1705
      %v1802 = vunpack.c.l.b16 %v1706
      %v1803 = vunpack.c.l.b16 %v1707
      %v1804 = vunpack.c.l.b16 %v1708
      %v1805 = vunpack.c.l.b16 %v1709
      %v1806 = vunpack.c.l.b16 %v1710
      %v1807 = vunpack.c.l.b16 %v1711
      %v1808 = vunpack.c.l.b16 %v1712
      %v1809 = vunpack.c.l.b16 %v1713
      %v1810 = vunpack.c.l.b16 %v1714
      %v1811 = vunpack.c.l.b16 %v1715
      %v1812 = vunpack.c.l.b16 %v1716
      %v1813 = vunpack.c.l.b16 %v1717
      %v1814 = vunpack.c.l.b16 %v1718
      %v1815 = vunpack.c.l.b16 %v1719
      %v1816 = vunpack.c.l.b16 %v1720
      %v1817 = vunpack.c.l.b16 %v1721
      %v1818 = vunpack.c.l.b16 %v1722
      %v1819 = vunpack.c.l.b16 %v1723
      %v1820 = vunpack.c.l.b16 %v1724
      %v1821 = vunpack.c.l.b16 %v1725
      %v1822 = vunpack.c.l.b16 %v1726
      %v1823 = vunpack.c.l.b16 %v1727
      %v1824 = vunpack.c.l.b16 %v1728
      %v1825 = vunpack.c.l.b16 %v1729
      %v1826 = vunpack.c.l.b16 %v1730
      %v1827 = vunpack.c.l.b16 %v1731
      %v1828 = vunpack.c.l.b16 %v1732
      %v1829 = vunpack.c.l.b16 %v1733
      %v1830 = vunpack.c.l.b16 %v1734
      %v1831 = vunpack.c.l.b16 %v1735
      %v1832 = vunpack.c.l.b16 %v1736
      %v1833 = vunpack.c.l.b16 %v1737
      %v1834 = vunpack.c.l.b16 %v1738
      %v1835 = vunpack.c.l.b16 %v1739
      %v1836 = vunpack.c.l.b16 %v1740
      %v1837 = vunpack.c.l.b16 %v1741
      %v1838 = vunpack.c.l.b16 %v1742
      %v1839 = vunpack.c.l.b16 %v1743
      %v1840 = vunpack.c.l.b16 %v1744
      %v1841 = vpack.c.b16 %v1794, %v1793
      %v1842 = vpack.c.b16 %v1796, %v1795
      %v1843 = vpack.c.b16 %v1798, %v1797
      %v1844 = vpack.c.b16 %v1800, %v1799
      %v1845 = vpack.c.b16 %v1802, %v1801
      %v1846 = vpack.c.b16 %v1804, %v1803
      %v1847 = vpack.c.b16 %v1806, %v1805
      %v1848 = vpack.c.b16 %v1808, %v1807
      %v1849 = vpack.c.b16 %v1810, %v1809
      %v1850 = vpack.c.b16 %v1812, %v1811
      %v1851 = vpack.c.b16 %v1814, %v1813
      %v1852 = vpack.c.b16 %v1816, %v1815
      %v1853 = vpack.c.b16 %v1818, %v1817
      %v1854 = vpack.c.b16 %v1820, %v1819
      %v1855 = vpack.c.b16 %v1822, %v1821
      %v1856 = vpack.c.b16 %v1824, %v1823
      %v1857 = vpack.c.b16 %v1826, %v1825
      %v1858 = vpack.c.b16 %v1828, %v1827
      %v1859 = vpack.c.b16 %v1830, %v1829
      %v1860 = vpack.c.b16 %v1832, %v1831
      %v1861 = vpack.c.b16 %v1834, %v1833
      %v1862 = vpack.c.b16 %v1836, %v1835
      %v1863 = vpack.c.b16 %v1838, %v1837
      %v1864 = vpack.c.b16 %v1840, %v1839
      %1889 = vmatprep.subr.bf16.mxu0 0
      %1890 = vmatpush1.bf16.msra.mxu0 %v1841
      %1891 = vmatprep.subr.bf16.mxu0 0
      %1892 = vmatpush1.bf16.msra.mxu0 %v1842
      %1893 = vmatprep.subr.bf16.mxu0 0
      %1894 = vmatpush1.bf16.msra.mxu0 %v1843
      %1895 = vmatprep.subr.bf16.mxu0 0
      %1896 = vmatpush1.bf16.msra.mxu0 %v1844
      %1897 = vmatprep.subr.bf16.mxu0 0
      %1898 = vmatpush1.bf16.msra.mxu0 %v1845
      %1899 = vmatprep.subr.bf16.mxu0 0
      %1900 = vmatpush1.bf16.msra.mxu0 %v1846
      %1901 = vmatprep.subr.bf16.mxu0 0
      %1902 = vmatpush1.bf16.msra.mxu0 %v1847
      %1903 = vmatprep.subr.bf16.mxu0 0
      %1904 = vmatpush1.bf16.msra.mxu0 %v1848
      %1905 = vmatprep.subr.bf16.mxu0 0
      %1906 = vmatpush1.bf16.msra.mxu0 %v1849
      %1907 = vmatprep.subr.bf16.mxu0 0
      %1908 = vmatpush1.bf16.msra.mxu0 %v1850
      %1909 = vmatprep.subr.bf16.mxu0 0
      %1910 = vmatpush1.bf16.msra.mxu0 %v1851
      %1911 = vmatprep.subr.bf16.mxu0 0
      %1912 = vmatpush1.bf16.msra.mxu0 %v1852
      %1913 = vmatprep.subr.bf16.mxu0 0
      %1914 = vmatpush1.bf16.msra.mxu0 %v1853
      %1915 = vmatprep.subr.bf16.mxu0 0
      %1916 = vmatpush1.bf16.msra.mxu0 %v1854
      %1917 = vmatprep.subr.bf16.mxu0 0
      %1918 = vmatpush1.bf16.msra.mxu0 %v1855
      %1919 = vmatprep.subr.bf16.mxu0 0
      %1920 = vmatpush1.bf16.msra.mxu0 %v1856
      %1921 = vmatprep.mubr.bf16.mxu0 %v609
      %1922 = vmatmul.mubr.bf16.gmra.mrb[0].mxu0 %v608
      %v1923 = vpop.f32.mrb[0].mxu0
      %v1924 = vadd.f32 0.0, %v1923
      %v1925 = vpop.f32.mrb[0].mxu0
      %v1926 = vpop.f32.mrb[0].mxu0
      %v1927 = vadd.f32 0.0, %v1926
      %v1928 = vpop.f32.mrb[0].mxu0
      %1929 = vmatprep.mubr.bf16.mxu0 %v612
      %1930 = vmatmul.mubr.bf16.gmra.mrb[0].mxu0 %v611
      %v1931 = vpop.f32.mrb[0].mxu0
      %v1932 = vadd.f32 0.0, %v1931
      %v1933 = vpop.f32.mrb[0].mxu0
      %v1934 = vpop.f32.mrb[0].mxu0
      %v1935 = vadd.f32 0.0, %v1934
      %v1936 = vpop.f32.mrb[0].mxu0
      %1937 = vmatprep.mubr.bf16.mxu0 %v615
      %1938 = vmatmul.mubr.bf16.gmra.mrb[0].mxu0 %v614
      %v1939 = vpop.f32.mrb[0].mxu0
      %v1940 = vadd.f32 0.0, %v1939
      %v1941 = vpop.f32.mrb[0].mxu0
      %v1942 = vpop.f32.mrb[0].mxu0
      %v1943 = vadd.f32 0.0, %v1942
      %v1944 = vpop.f32.mrb[0].mxu0
      %1945 = vmatprep.mubr.bf16.mxu0 %v618
      %1946 = vmatmul.mubr.bf16.gmra.mrb[0].mxu0 %v617
      %v1947 = vpop.f32.mrb[0].mxu0
      %v1948 = vadd.f32 0.0, %v1947
      %v1949 = vpop.f32.mrb[0].mxu0
      %v1950 = vpop.f32.mrb[0].mxu0
      %v1951 = vadd.f32 0.0, %v1950
      %v1952 = vpop.f32.mrb[0].mxu0
      %1953 = vmatprep.mubr.bf16.mxu0 %v621
      %1954 = vmatmul.mubr.bf16.gmra.mrb[0].mxu0 %v620
      %v1955 = vpop.f32.mrb[0].mxu0
      %v1956 = vadd.f32 0.0, %v1955
      %v1957 = vpop.f32.mrb[0].mxu0
      %v1958 = vpop.f32.mrb[0].mxu0
      %v1959 = vadd.f32 0.0, %v1958
      %v1960 = vpop.f32.mrb[0].mxu0
      %1961 = vmatprep.mubr.bf16.mxu0 %v624
      %1962 = vmatmul.mubr.bf16.gmra.mrb[0].mxu0 %v623
      %v1963 = vpop.f32.mrb[0].mxu0
      %v1964 = vadd.f32 0.0, %v1963
      %v1965 = vpop.f32.mrb[0].mxu0
      %v1966 = vpop.f32.mrb[0].mxu0
      %v1967 = vadd.f32 0.0, %v1966
      %v1968 = vpop.f32.mrb[0].mxu0
      %1969 = vmatprep.mubr.bf16.mxu0 %v627
      %1970 = vmatmul.mubr.bf16.gmra.mrb[0].mxu0 %v626
      %v1971 = vpop.f32.mrb[0].mxu0
      %v1972 = vadd.f32 0.0, %v1971
      %v1973 = vpop.f32.mrb[0].mxu0
      %v1974 = vpop.f32.mrb[0].mxu0
      %v1975 = vadd.f32 0.0, %v1974
      %v1976 = vpop.f32.mrb[0].mxu0
      %1977 = vmatprep.mubr.bf16.mxu0 %v630
      %1978 = vmatmul.mubr.bf16.gmra.mrb[0].mxu0 %v629
      %v1979 = vpop.f32.mrb[0].mxu0
      %v1980 = vadd.f32 0.0, %v1979
      %v1981 = vpop.f32.mrb[0].mxu0
      %v1982 = vpop.f32.mrb[0].mxu0
      %v1983 = vadd.f32 0.0, %v1982
      %v1984 = vpop.f32.mrb[0].mxu0
      %1985 = vmatprep.mubr.bf16.mxu0 %v633
      %1986 = vmatmul.mubr.bf16.gmra.mrb[0].mxu0 %v632
      %v1987 = vpop.f32.mrb[0].mxu0
      %v1988 = vadd.f32 0.0, %v1987
      %v1989 = vpop.f32.mrb[0].mxu0
      %v1990 = vpop.f32.mrb[0].mxu0
      %v1991 = vadd.f32 0.0, %v1990
      %v1992 = vpop.f32.mrb[0].mxu0
      %1993 = vmatprep.mubr.bf16.mxu0 %v636
      %1994 = vmatmul.mubr.bf16.gmra.mrb[0].mxu0 %v635
      %v1995 = vpop.f32.mrb[0].mxu0
      %v1996 = vadd.f32 0.0, %v1995
      %v1997 = vpop.f32.mrb[0].mxu0
      %v1998 = vpop.f32.mrb[0].mxu0
      %v1999 = vadd.f32 0.0, %v1998
      %v2000 = vpop.f32.mrb[0].mxu0
      %2001 = vmatprep.mubr.bf16.mxu0 %v639
      %2002 = vmatmul.mubr.bf16.gmra.mrb[0].mxu0 %v638
      %v2003 = vpop.f32.mrb[0].mxu0
      %v2004 = vadd.f32 0.0, %v2003
      %v2005 = vpop.f32.mrb[0].mxu0
      %v2006 = vpop.f32.mrb[0].mxu0
      %v2007 = vadd.f32 0.0, %v2006
      %v2008 = vpop.f32.mrb[0].mxu0
      %2009 = vmatprep.mubr.bf16.mxu0 %v642
      %2010 = vmatmul.mubr.bf16.gmra.mrb[0].mxu0 %v641
      %v2011 = vpop.f32.mrb[0].mxu0
      %v2012 = vadd.f32 0.0, %v2011
      %v2013 = vpop.f32.mrb[0].mxu0
      %v2014 = vpop.f32.mrb[0].mxu0
      %v2015 = vadd.f32 0.0, %v2014
      %v2016 = vpop.f32.mrb[0].mxu0
      %2017 = vmatprep.mubr.bf16.mxu0 %v645
      %2018 = vmatmul.mubr.bf16.gmra.mrb[0].mxu0 %v644
      %v2019 = vpop.f32.mrb[0].mxu0
      %v2020 = vadd.f32 0.0, %v2019
      %v2021 = vpop.f32.mrb[0].mxu0
      %v2022 = vpop.f32.mrb[0].mxu0
      %v2023 = vadd.f32 0.0, %v2022
      %v2024 = vpop.f32.mrb[0].mxu0
      %2025 = vmatprep.mubr.bf16.mxu0 %v648
      %2026 = vmatmul.mubr.bf16.gmra.mrb[0].mxu0 %v647
      %v2027 = vpop.f32.mrb[0].mxu0
      %v2028 = vadd.f32 0.0, %v2027
      %v2029 = vpop.f32.mrb[0].mxu0
      %v2030 = vpop.f32.mrb[0].mxu0
      %v2031 = vadd.f32 0.0, %v2030
      %v2032 = vpop.f32.mrb[0].mxu0
      %2033 = vmatprep.mubr.bf16.mxu0 %v713
      %2034 = vmatmul.mubr.bf16.gmra.mrb[0].mxu0 %v712
      %v2035 = vpop.f32.mrb[0].mxu0
      %v2036 = vadd.f32 0.0, %v2035
      %v2037 = vpop.f32.mrb[0].mxu0
      %v2038 = vpop.f32.mrb[0].mxu0
      %v2039 = vadd.f32 0.0, %v2038
      %v2040 = vpop.f32.mrb[0].mxu0
      %2041 = vmatprep.mubr.bf16.mxu0 %v603
      %2042 = vmatmul.mubr.bf16.gmra.mrb[0].mxu0 %v602
      %v2043 = vpop.f32.mrb[0].mxu0
      %v2044 = vadd.f32 0.0, %v2043
      %v2045 = vpop.f32.mrb[0].mxu0
      %v2046 = vpop.f32.mrb[0].mxu0
      %v2047 = vadd.f32 0.0, %v2046
      %v2048 = vpop.f32.mrb[0].mxu0
      %2049 = vdwg.mxu0
      %2050 = vmatprep.subr.bf16.mxu0 0
      %2051 = vmatpush1.bf16.msra.mxu0 %v1857
      %2052 = vmatprep.subr.bf16.mxu0 0
      %2053 = vmatpush1.bf16.msra.mxu0 %v1858
      %2054 = vmatprep.subr.bf16.mxu0 0
      %2055 = vmatpush1.bf16.msra.mxu0 %v1859
      %2056 = vmatprep.subr.bf16.mxu0 0
      %2057 = vmatpush1.bf16.msra.mxu0 %v1860
      %2058 = vmatprep.subr.bf16.mxu0 0
      %2059 = vmatpush1.bf16.msra.mxu0 %v1861
      %2060 = vmatprep.subr.bf16.mxu0 0
      %2061 = vmatpush1.bf16.msra.mxu0 %v1862
      %2062 = vmatprep.subr.bf16.mxu0 0
      %2063 = vmatpush1.bf16.msra.mxu0 %v1863
      %2064 = vmatprep.subr.bf16.mxu0 0
      %2065 = vmatpush1.bf16.msra.mxu0 %v1864
      %2066 = vmatprep.subr.bf16.mxu0 0
      %2067 = vmatpush1.bf16.msra.mxu0 0
      %2068 = vmatprep.subr.bf16.mxu0 0
      %2069 = vmatpush1.bf16.msra.mxu0 0
      %2070 = vmatprep.subr.bf16.mxu0 0
      %2071 = vmatpush1.bf16.msra.mxu0 0
      %2072 = vmatprep.subr.bf16.mxu0 0
      %2073 = vmatpush1.bf16.msra.mxu0 0
      %2074 = vmatprep.subr.bf16.mxu0 0
      %2075 = vmatpush1.bf16.msra.mxu0 0
      %2076 = vmatprep.subr.bf16.mxu0 0
      %2077 = vmatpush1.bf16.msra.mxu0 0
      %2078 = vmatprep.subr.bf16.mxu0 0
      %2079 = vmatpush1.bf16.msra.mxu0 0
      %2080 = vmatprep.subr.bf16.mxu0 0
      %2081 = vmatpush1.bf16.msra.mxu0 0
      %2082 = vmatprep.mubr.bf16.mxu0 0
      %2083 = vmatmul.mubr.bf16.gmra.mrb[0].mxu0 %v610
      %v2084 = vpop.f32.mrb[0].mxu0
      %v2085 = vadd.f32 %v1924, %v2084
      %v2086 = vpop.f32.mrb[0].mxu0
      %v2087 = vpop.f32.mrb[0].mxu0
      %v2088 = vadd.f32 %v1927, %v2087
      %v2089 = vpop.f32.mrb[0].mxu0
      %2090 = vmatprep.mubr.bf16.mxu0 0
      %2091 = vmatmul.mubr.bf16.gmra.mrb[0].mxu0 %v613
      %v2092 = vpop.f32.mrb[0].mxu0
      %v2093 = vadd.f32 %v1932, %v2092
      %v2094 = vpop.f32.mrb[0].mxu0
      %v2095 = vpop.f32.mrb[0].mxu0
      %v2096 = vadd.f32 %v1935, %v2095
      %v2097 = vpop.f32.mrb[0].mxu0
      %2098 = vmatprep.mubr.bf16.mxu0 0
      %2099 = vmatmul.mubr.bf16.gmra.mrb[0].mxu0 %v616
      %v2100 = vpop.f32.mrb[0].mxu0
      %v2101 = vadd.f32 %v1940, %v2100
      %v2102 = vpop.f32.mrb[0].mxu0
      %v2103 = vpop.f32.mrb[0].mxu0
      %v2104 = vadd.f32 %v1943, %v2103
      %v2105 = vpop.f32.mrb[0].mxu0
      %2106 = vmatprep.mubr.bf16.mxu0 0
      %2107 = vmatmul.mubr.bf16.gmra.mrb[0].mxu0 %v619
      %v2108 = vpop.f32.mrb[0].mxu0
      %v2109 = vadd.f32 %v1948, %v2108
      %v2110 = vpop.f32.mrb[0].mxu0
      %v2111 = vpop.f32.mrb[0].mxu0
      %v2112 = vadd.f32 %v1951, %v2111
      %v2113 = vpop.f32.mrb[0].mxu0
      %2114 = vmatprep.mubr.bf16.mxu0 0
      %2115 = vmatmul.mubr.bf16.gmra.mrb[0].mxu0 %v622
      %v2116 = vpop.f32.mrb[0].mxu0
      %v2117 = vadd.f32 %v1956, %v2116
      %v2118 = vpop.f32.mrb[0].mxu0
      %v2119 = vpop.f32.mrb[0].mxu0
      %v2120 = vadd.f32 %v1959, %v2119
      %v2121 = vpop.f32.mrb[0].mxu0
      %2122 = vmatprep.mubr.bf16.mxu0 0
      %2123 = vmatmul.mubr.bf16.gmra.mrb[0].mxu0 %v625
      %v2124 = vpop.f32.mrb[0].mxu0
      %v2125 = vadd.f32 %v1964, %v2124
      %v2126 = vpop.f32.mrb[0].mxu0
      %v2127 = vpop.f32.mrb[0].mxu0
      %v2128 = vadd.f32 %v1967, %v2127
      %v2129 = vpop.f32.mrb[0].mxu0
      %2130 = vmatprep.mubr.bf16.mxu0 0
      %2131 = vmatmul.mubr.bf16.gmra.mrb[0].mxu0 %v628
      %v2132 = vpop.f32.mrb[0].mxu0
      %v2133 = vadd.f32 %v1972, %v2132
      %v2134 = vpop.f32.mrb[0].mxu0
      %v2135 = vpop.f32.mrb[0].mxu0
      %v2136 = vadd.f32 %v1975, %v2135
      %v2137 = vpop.f32.mrb[0].mxu0
      %2138 = vmatprep.mubr.bf16.mxu0 0
      %2139 = vmatmul.mubr.bf16.gmra.mrb[0].mxu0 %v631
      %v2140 = vpop.f32.mrb[0].mxu0
      %v2141 = vadd.f32 %v1980, %v2140
      %v2142 = vpop.f32.mrb[0].mxu0
      %v2143 = vpop.f32.mrb[0].mxu0
      %v2144 = vadd.f32 %v1983, %v2143
      %v2145 = vpop.f32.mrb[0].mxu0
      %2146 = vmatprep.mubr.bf16.mxu0 0
      %2147 = vmatmul.mubr.bf16.gmra.mrb[0].mxu0 %v634
      %v2148 = vpop.f32.mrb[0].mxu0
      %v2149 = vadd.f32 %v1988, %v2148
      %v2150 = vpop.f32.mrb[0].mxu0
      %v2151 = vpop.f32.mrb[0].mxu0
      %v2152 = vadd.f32 %v1991, %v2151
      %v2153 = vpop.f32.mrb[0].mxu0
      %2154 = vmatprep.mubr.bf16.mxu0 0
      %2155 = vmatmul.mubr.bf16.gmra.mrb[0].mxu0 %v637
      %v2156 = vpop.f32.mrb[0].mxu0
      %v2157 = vadd.f32 %v1996, %v2156
      %v2158 = vpop.f32.mrb[0].mxu0
      %v2159 = vpop.f32.mrb[0].mxu0
      %v2160 = vadd.f32 %v1999, %v2159
      %v2161 = vpop.f32.mrb[0].mxu0
      %2162 = vmatprep.mubr.bf16.mxu0 0
      %2163 = vmatmul.mubr.bf16.gmra.mrb[0].mxu0 %v640
      %v2164 = vpop.f32.mrb[0].mxu0
      %v2165 = vadd.f32 %v2004, %v2164
      %v2166 = vpop.f32.mrb[0].mxu0
      %v2167 = vpop.f32.mrb[0].mxu0
      %v2168 = vadd.f32 %v2007, %v2167
      %v2169 = vpop.f32.mrb[0].mxu0
      %2170 = vmatprep.mubr.bf16.mxu0 0
      %2171 = vmatmul.mubr.bf16.gmra.mrb[0].mxu0 %v643
      %v2172 = vpop.f32.mrb[0].mxu0
      %v2173 = vadd.f32 %v2012, %v2172
      %v2174 = vpop.f32.mrb[0].mxu0
      %v2175 = vpop.f32.mrb[0].mxu0
      %v2176 = vadd.f32 %v2015, %v2175
      %v2177 = vpop.f32.mrb[0].mxu0
      %2178 = vmatprep.mubr.bf16.mxu0 0
      %2179 = vmatmul.mubr.bf16.gmra.mrb[0].mxu0 %v646
      %v2180 = vpop.f32.mrb[0].mxu0
      %v2181 = vadd.f32 %v2020, %v2180
      %v2182 = vpop.f32.mrb[0].mxu0
      %v2183 = vpop.f32.mrb[0].mxu0
      %v2184 = vadd.f32 %v2023, %v2183
      %v2185 = vpop.f32.mrb[0].mxu0
      %2186 = vmatprep.mubr.bf16.mxu0 0
      %2187 = vmatmul.mubr.bf16.gmra.mrb[0].mxu0 %v649
      %v2188 = vpop.f32.mrb[0].mxu0
      %v2189 = vadd.f32 %v2028, %v2188
      %v2190 = vpop.f32.mrb[0].mxu0
      %v2191 = vpop.f32.mrb[0].mxu0
      %v2192 = vadd.f32 %v2031, %v2191
      %v2193 = vpop.f32.mrb[0].mxu0
      %2194 = vmatprep.mubr.bf16.mxu0 0
      %2195 = vmatmul.mubr.bf16.gmra.mrb[0].mxu0 %v714
      %v2196 = vpop.f32.mrb[0].mxu0
      %v2197 = vadd.f32 %v2036, %v2196
      %v2198 = vpop.f32.mrb[0].mxu0
      %v2199 = vpop.f32.mrb[0].mxu0
      %v2200 = vadd.f32 %v2039, %v2199
      %v2201 = vpop.f32.mrb[0].mxu0
      %2202 = vmatprep.mubr.bf16.mxu0 0
      %2203 = vmatmul.mubr.bf16.gmra.mrb[0].mxu0 %v604
      %v2204 = vpop.f32.mrb[0].mxu0
      %v2205 = vadd.f32 %v2044, %v2204
      %v2206 = vpop.f32.mrb[0].mxu0
      %v2207 = vpop.f32.mrb[0].mxu0
      %v2208 = vadd.f32 %v2047, %v2207
      %v2209 = vpop.f32.mrb[0].mxu0
      %2210 = vdwg.mxu0
      %v2211 = vadd.f32 %v1570, %v2085
      %v2212 = vadd.f32 %v1573, %v2088
      %v2213 = vadd.f32 %v1578, %v2093
      %v2214 = vadd.f32 %v1581, %v2096
      %v2215 = vadd.f32 %v1586, %v2101
      %v2216 = vadd.f32 %v1589, %v2104
      %v2217 = vadd.f32 %v1594, %v2109
      %v2218 = vadd.f32 %v1597, %v2112
      %v2219 = vadd.f32 %v1602, %v2117
      %v2220 = vadd.f32 %v1605, %v2120
      %v2221 = vadd.f32 %v1610, %v2125
      %v2222 = vadd.f32 %v1613, %v2128
      %v2223 = vadd.f32 %v1618, %v2133
      %v2224 = vadd.f32 %v1621, %v2136
      %v2225 = vadd.f32 %v1626, %v2141
      %v2226 = vadd.f32 %v1629, %v2144
      %v2227 = vadd.f32 %v1634, %v2149
      %v2228 = vadd.f32 %v1637, %v2152
      %v2229 = vadd.f32 %v1642, %v2157
      %v2230 = vadd.f32 %v1645, %v2160
      %v2231 = vadd.f32 %v1650, %v2165
      %v2232 = vadd.f32 %v1653, %v2168
      %v2233 = vadd.f32 %v1658, %v2173
      %v2234 = vadd.f32 %v1661, %v2176
      %v2235 = vadd.f32 %v1666, %v2181
      %v2236 = vadd.f32 %v1669, %v2184
      %v2237 = vadd.f32 %v1674, %v2189
      %v2238 = vadd.f32 %v1677, %v2192
      %v2239 = vadd.f32 %v1682, %v2197
      %v2240 = vadd.f32 %v1685, %v2200
      %v2241 = vadd.f32 %v1690, %v2205
      %v2242 = vadd.f32 %v1693, %v2208
      %2243 = vst [vmem:[%s231] sm:$0xff] %v2211
      %2244 = vst [vmem:[%s231 + $0x8] sm:$0xff] %v2212
      %2245 = vst [vmem:[%s231 + $0x10] sm:$0xff] %v2213
      %2246 = vst [vmem:[%s231 + $0x18] sm:$0xff] %v2214
      %2247 = vst [vmem:[%s231 + $0x20] sm:$0xff] %v2215
      %2248 = vst [vmem:[%s231 + $0x28] sm:$0xff] %v2216
      %2249 = vst [vmem:[%s231 + $0x30] sm:$0xff] %v2217
      %2250 = vst [vmem:[%s231 + $0x38] sm:$0xff] %v2218
      %2251 = vst [vmem:[%s231 + $0x40] sm:$0xff] %v2219
      %2252 = vst [vmem:[%s231 + $0x48] sm:$0xff] %v2220
      %2253 = vst [vmem:[%s231 + $0x50] sm:$0xff] %v2221
      %2254 = vst [vmem:[%s231 + $0x58] sm:$0xff] %v2222
      %2255 = vst [vmem:[%s231 + $0x60] sm:$0xff] %v2223
      %2256 = vst [vmem:[%s231 + $0x68] sm:$0xff] %v2224
      %2257 = vst [vmem:[%s231 + $0x70] sm:$0xff] %v2225
      %2258 = vst [vmem:[%s231 + $0x78] sm:$0xff] %v2226
      %2259 = vst [vmem:[%s231 + $0x80] sm:$0xff] %v2227
      %2260 = vst [vmem:[%s231 + $0x88] sm:$0xff] %v2228
      %2261 = vst [vmem:[%s231 + $0x90] sm:$0xff] %v2229
      %2262 = vst [vmem:[%s231 + $0x98] sm:$0xff] %v2230
      %2263 = vst [vmem:[%s231 + $0xa0] sm:$0xff] %v2231
      %2264 = vst [vmem:[%s231 + $0xa8] sm:$0xff] %v2232
      %2265 = vst [vmem:[%s231 + $0xb0] sm:$0xff] %v2233
      %2266 = vst [vmem:[%s231 + $0xb8] sm:$0xff] %v2234
      %2267 = vst [vmem:[%s231 + $0xc0] sm:$0xff] %v2235
      %2268 = vst [vmem:[%s231 + $0xc8] sm:$0xff] %v2236
      %2269 = vst [vmem:[%s231 + $0xd0] sm:$0xff] %v2237
      %2270 = vst [vmem:[%s231 + $0xd8] sm:$0xff] %v2238
      %2271 = vst [vmem:[%s231 + $0xe0] sm:$0xff] %v2239
      %2272 = vst [vmem:[%s231 + $0xe8] sm:$0xff] %v2240
      %2273 = vst [vmem:[%s231 + $0xf0] sm:$0xff] %v2241
      %2274 = vst [vmem:[%s231 + $0xf8] sm:$0xff] %v2242
      %v2275 = vadd.f32 %v2211, %v2212
      %v2276 = vadd.f32 %v2275, %v2213
      %v2277 = vadd.f32 %v2276, %v2214
      %v2278 = vadd.f32 %v2277, %v2215
      %v2279 = vadd.f32 %v2278, %v2216
      %v2280 = vadd.f32 %v2279, %v2217
      %v2281 = vadd.f32 %v2280, %v2218
      %v2282 = vadd.f32 %v2281, %v2219
      %v2283 = vadd.f32 %v2282, %v2220
      %v2284 = vadd.f32 %v2283, %v2221
      %v2285 = vadd.f32 %v2284, %v2222
      %v2286 = vadd.f32 %v2285, %v2223
      %v2287 = vadd.f32 %v2286, %v2224
      %v2288 = vadd.f32 %v2287, %v2225
      %v2289 = vadd.f32 %v2288, %v2226
      %v2290 = vadd.f32 %v2289, %v2227
      %v2291 = vadd.f32 %v2290, %v2228
      %v2292 = vadd.f32 %v2291, %v2229
      %v2293 = vadd.f32 %v2292, %v2230
      %v2294 = vadd.f32 %v2293, %v2231
      %v2295 = vadd.f32 %v2294, %v2232
      %v2296 = vadd.f32 %v2295, %v2233
      %v2297 = vadd.f32 %v2296, %v2234
      %v2298 = vadd.f32 %v2297, %v2235
      %v2299 = vadd.f32 %v2298, %v2236
      %v2300 = vadd.f32 %v2299, %v2237
      %v2301 = vadd.f32 %v2300, %v2238
      %v2302 = vadd.f32 %v2301, %v2239
      %v2303 = vadd.f32 %v2302, %v2240
      %v2304 = vadd.f32 %v2303, %v2241
      %v2305 = vadd.f32 %v2304, %v2242
      %v2306 = vrot.slane %v2305, 4
      %v2307 = vadd.f32 %v2305, %v2306
      %v2308 = vrot.slane %v2307, 2
      %v2309 = vadd.f32 %v2307, %v2308
      %v2310 = vrot.slane %v2309, 1
      %v2311 = vadd.f32 %v2309, %v2310
      %v2312 = vmul.f32 %v2211, %v2211
      %v2313 = vmul.f32 %v2212, %v2212
      %v2314 = vmul.f32 %v2213, %v2213
      %v2315 = vmul.f32 %v2214, %v2214
      %v2316 = vmul.f32 %v2215, %v2215
      %v2317 = vmul.f32 %v2216, %v2216
      %v2318 = vmul.f32 %v2217, %v2217
      %v2319 = vmul.f32 %v2218, %v2218
      %v2320 = vmul.f32 %v2219, %v2219
      %v2321 = vmul.f32 %v2220, %v2220
      %v2322 = vmul.f32 %v2221, %v2221
      %v2323 = vmul.f32 %v2222, %v2222
      %v2324 = vmul.f32 %v2223, %v2223
      %v2325 = vmul.f32 %v2224, %v2224
      %v2326 = vmul.f32 %v2225, %v2225
      %v2327 = vmul.f32 %v2226, %v2226
      %v2328 = vmul.f32 %v2227, %v2227
      %v2329 = vmul.f32 %v2228, %v2228
      %v2330 = vmul.f32 %v2229, %v2229
      %v2331 = vmul.f32 %v2230, %v2230
      %v2332 = vmul.f32 %v2231, %v2231
      %v2333 = vmul.f32 %v2232, %v2232
      %v2334 = vmul.f32 %v2233, %v2233
      %v2335 = vmul.f32 %v2234, %v2234
      %v2336 = vmul.f32 %v2235, %v2235
      %v2337 = vmul.f32 %v2236, %v2236
      %v2338 = vmul.f32 %v2237, %v2237
      %v2339 = vmul.f32 %v2238, %v2238
      %v2340 = vmul.f32 %v2239, %v2239
      %v2341 = vmul.f32 %v2240, %v2240
      %v2342 = vmul.f32 %v2241, %v2241
      %v2343 = vmul.f32 %v2242, %v2242
      %v2344 = vadd.f32 %v2312, %v2313
      %v2345 = vadd.f32 %v2344, %v2314
      %v2346 = vadd.f32 %v2345, %v2315
      %v2347 = vadd.f32 %v2346, %v2316
      %v2348 = vadd.f32 %v2347, %v2317
      %v2349 = vadd.f32 %v2348, %v2318
      %v2350 = vadd.f32 %v2349, %v2319
      %v2351 = vadd.f32 %v2350, %v2320
      %v2352 = vadd.f32 %v2351, %v2321
      %v2353 = vadd.f32 %v2352, %v2322
      %v2354 = vadd.f32 %v2353, %v2323
      %v2355 = vadd.f32 %v2354, %v2324
      %v2356 = vadd.f32 %v2355, %v2325
      %v2357 = vadd.f32 %v2356, %v2326
      %v2358 = vadd.f32 %v2357, %v2327
      %v2359 = vadd.f32 %v2358, %v2328
      %v2360 = vadd.f32 %v2359, %v2329
      %v2361 = vadd.f32 %v2360, %v2330
      %v2362 = vadd.f32 %v2361, %v2331
      %v2363 = vadd.f32 %v2362, %v2332
      %v2364 = vadd.f32 %v2363, %v2333
      %v2365 = vadd.f32 %v2364, %v2334
      %v2366 = vadd.f32 %v2365, %v2335
      %v2367 = vadd.f32 %v2366, %v2336
      %v2368 = vadd.f32 %v2367, %v2337
      %v2369 = vadd.f32 %v2368, %v2338
      %v2370 = vadd.f32 %v2369, %v2339
      %v2371 = vadd.f32 %v2370, %v2340
      %v2372 = vadd.f32 %v2371, %v2341
      %v2373 = vadd.f32 %v2372, %v2342
      %v2374 = vadd.f32 %v2373, %v2343
      %v2375 = vrot.slane %v2374, 4
      %v2376 = vadd.f32 %v2374, %v2375
      %v2377 = vrot.slane %v2376, 2
      %v2378 = vadd.f32 %v2376, %v2377
      %v2379 = vrot.slane %v2378, 1
      %v2380 = vadd.f32 %v2378, %v2379
      %v2381 = vsel %vm410, %v2311, %v2380
      %2382 = vst [vmem:[%s235] sm:$0x3] %v2381
      %p2383 = scmp.lt.s32.totalorder %s17, 1
      %s2384 = scalar_select %p2383, %s17, 1
      %s2385 = smul.addr %s2384, 32
      %s2386 = smul.addr %s2385, 8
      %s2387 = scalar_lea.vmem %s4, %s2386
      %p2388 = scmp.lt.s32.totalorder %s17, 1
      %s2389 = scalar_select %p2388, %s17, 1
      %s2390 = smul.addr %s2389, 2
      %s2391 = scalar_lea.vmem %s5, %s2390
      // Predicated region
      $region37: #{basic_block.4} parent=35 // pred_check
        %p2392 = pneg %p124
      $region38: #{basic_block.4} parent=35 // pred_check_branch
        %2394 = sbr.rel (%p2392) target = $region40
      $region39: #{basic_block.4} parent=35 // pred_region
        _
      $region40: #{basic_block.4} parent=35 // pred_fallthru
        _
      // Predicated region
      $region41: #{basic_block.4} parent=35 // pred_check
        %p2395 = pneg %p150
      $region42: #{basic_block.4} parent=35 // pred_check_branch
        %2397 = sbr.rel (%p2395) target = $region44
      $region43: #{basic_block.4} parent=35 // pred_region
        _
      $region44: #{basic_block.4} parent=35 // pred_fallthru
        _
    $region36: #{basic_block.4} parent=5 // pred_fallthru
      _
    %p2398 = scmp.le.s32.totalorder 2, %s12
    // Predicated region
    $region45: #{basic_block.4} parent=5 // pred_check
      %p2399 = pneg %p2398
    $region46: #{basic_block.4} parent=5 // pred_check_branch
      %2401 = sbr.rel (%p2399) target = $region48
    $region47: #{basic_block.4} parent=5 // pred_region
      %s2402 = ssub.s32 %s12, 2
      // Predicated region
      $region49: #{basic_block.4} parent=47 // pred_check
        %p2403 = pneg %p130
      $region50: #{basic_block.4} parent=47 // pred_check_branch
        %2405 = sbr.rel (%p2403) target = $region52
      $region51: #{basic_block.4} parent=47 // pred_region
        %p2406 = scmp.lt.s32.totalorder %s18, 1
        %s2407 = scalar_select %p2406, %s18, 1
        %s2408 = smul.addr %s2407, 32
        %s2409 = smul.addr %s2408, 8
        %s2410 = scalar_lea.vmem %s4, %s2409
      $region52: #{basic_block.4} parent=47 // pred_fallthru
        _
      // Predicated region
      $region53: #{basic_block.4} parent=47 // pred_check
        %p2411 = pneg %p156
      $region54: #{basic_block.4} parent=47 // pred_check_branch
        %2413 = sbr.rel (%p2411) target = $region56
      $region55: #{basic_block.4} parent=47 // pred_region
        %p2414 = scmp.lt.s32.totalorder %s18, 1
        %s2415 = scalar_select %p2414, %s18, 1
        %s2416 = smul.addr %s2415, 2
        %s2417 = scalar_lea.vmem %s5, %s2416
      $region56: #{basic_block.4} parent=47 // pred_fallthru
        _
    $region48: #{basic_block.4} parent=5 // pred_fallthru
      _
  $region6: #{basic_block.4} parent=0 // loop_footer
    %s16 = sadd.s32 1, %s12
  $region7: #{basic_block.4} parent=0 // loop_footer_branch
    %11 = sbr.rel target = $region3
  $region8: #{basic_block.4} parent=0 // loop_exit
    _

</llo_original>
